<compile_context>
chip_gen: v7x
topology: tpu7x:2x2x1
jax: 0.10.0
libtpu: 0.0.40
codegen_flags: <defaults>
</compile_context>

<pallas_src>
import functools

import jax
import jax.numpy as jnp
import numpy as np
from jax.experimental import pallas as pl
from jax.experimental.pallas import tpu as pltpu


# ------------------------------- fused kernel ---------------------------------

def _impala_block_kernel(
    x_ref, w0_ref, b0_ref, w11_ref, b11_ref, w12_ref, b12_ref,
    w21_ref, b21_ref, w22_ref, b22_ref,
    o_ref,
    pad_in, patch_in, pad_y, row_buf, pool_buf, pad_r, patch_r,
    *, H, W, Cin, D):
    """One image per grid step: conv -> maxpool(3,2,1) -> res1 -> res2."""
    H2, W2 = H // 2, W // 2

    def conv3x3(pad_ref, patch_ref, w_ref, b_ref, h, w, c):
        """3x3 'same' conv over an already zero-padded (h+2, w+2, c) scratch,
        computed as a single im2col matmul (h*w, 9*c) @ (9*c, D)."""
        xp = pad_ref[...]
        t = 0
        for dy in range(3):
            for dx in range(3):
                patch_ref[:, t * c:(t + 1) * c] = (
                    xp[dy:dy + h, dx:dx + w, :].reshape(h * w, c))
                t += 1
        acc = jnp.dot(patch_ref[...], w_ref[...],
                      preferred_element_type=jnp.float32)        # (h*w, D)
        return acc + b_ref[...]                                  # bias (1, D)

    # ---- conv: x (H, W, Cin) -> y (H, W, D) ----------------------------------
    pad_in[...] = jnp.zeros_like(pad_in)
    pad_in[1:H + 1, 1:W + 1, :] = x_ref[0].astype(jnp.float32)
    y = conv3x3(pad_in, patch_in, w0_ref, b0_ref, H, W, Cin).reshape(H, W, D)

    # ---- maxpool k=3 s=2 p=1: y -> z (H2, W2, D), computed at stride 2 -------
    pad_y[...] = jnp.full(pad_y.shape, -jnp.inf, dtype=pad_y.dtype)
    pad_y[1:H + 1, 1:W + 1, :] = y
    yp = pad_y[...]
    for i in range(H2):                                          # row direction
        row_buf[i:i + 1, :, :] = jnp.maximum(
            jnp.maximum(yp[2 * i:2 * i + 1], yp[2 * i + 1:2 * i + 2]),
            yp[2 * i + 2:2 * i + 3])
    rm = row_buf[...]                                            # (H2, W+2, D)
    for j in range(W2):                                          # col direction
        pool_buf[:, j:j + 1, :] = jnp.maximum(
            jnp.maximum(rm[:, 2 * j:2 * j + 1, :], rm[:, 2 * j + 1:2 * j + 2, :]),
            rm[:, 2 * j + 2:2 * j + 3, :])
    z = pool_buf[...]                                            # (H2, W2, D)

    # ---- residual blocks: z = z + conv(relu(conv(relu(z)))) ------------------
    def res_block(z, wa_ref, ba_ref, wb_ref, bb_ref):
        pad_r[...] = jnp.zeros_like(pad_r)                       # zero halo
        pad_r[1:H2 + 1, 1:W2 + 1, :] = jnp.maximum(z, 0.0)       # fused ReLU
        r = conv3x3(pad_r, patch_r, wa_ref, ba_ref, H2, W2, D).reshape(H2, W2, D)
        pad_r[1:H2 + 1, 1:W2 + 1, :] = jnp.maximum(r, 0.0)       # halo still zero
        r = conv3x3(pad_r, patch_r, wb_ref, bb_ref, H2, W2, D).reshape(H2, W2, D)
        return z + r

    z = res_block(z, w11_ref, b11_ref, w12_ref, b12_ref)
    z = res_block(z, w21_ref, b21_ref, w22_ref, b22_ref)

    o_ref[0] = z.astype(o_ref.dtype)


# --------------------------------- wrappers ------------------------------------

def prepare_params(params):
    """One-time relayout: PyTorch OIHW weights -> im2col-flattened (9*Cin, Cout)."""
    def wflat(w_oihw):
        o, i, kh, kw = w_oihw.shape
        return jnp.transpose(w_oihw, (2, 3, 1, 0)).reshape(kh * kw * i, o)

    def brow(b):
        return b.reshape(1, -1)

    return {
        "w0": wflat(params["conv_w"]), "b0": brow(params["conv_b"]),
        "w11": wflat(params["r1w1"]), "b11": brow(params["r1b1"]),
        "w12": wflat(params["r1w2"]), "b12": brow(params["r1b2"]),
        "w21": wflat(params["r2w1"]), "b21": brow(params["r2b1"]),
        "w22": wflat(params["r2w2"]), "b22": brow(params["r2b2"]),
    }


def impala_block_pallas(x_nchw, prep):
    """Fused ImpalaBlock forward. Input/output are NCHW (PyTorch convention)."""
    x = jnp.transpose(x_nchw, (0, 2, 3, 1))                      # NCHW -> NHWC
    N, H, W, Cin = x.shape
    D = prep["b0"].shape[-1]
    H2, W2 = H // 2, W // 2

    kernel = functools.partial(_impala_block_kernel, H=H, W=W, Cin=Cin, D=D)

    wspec = pl.BlockSpec((9 * D, D), lambda n: (0, 0))
    bspec = pl.BlockSpec((1, D), lambda n: (0, 0))

    out_nhwc = pl.pallas_call(
        kernel,
        out_shape=jax.ShapeDtypeStruct((N, H2, W2, D), x.dtype),
        grid=(N,),
        in_specs=[
            pl.BlockSpec((1, H, W, Cin), lambda n: (n, 0, 0, 0)),
            pl.BlockSpec((9 * Cin, D), lambda n: (0, 0)), bspec,
            wspec, bspec, wspec, bspec, wspec, bspec, wspec, bspec,
        ],
        out_specs=pl.BlockSpec((1, H2, W2, D), lambda n: (n, 0, 0, 0)),
        scratch_shapes=[
            pltpu.VMEM((H + 2, W + 2, Cin), jnp.float32),        # zero-padded input
            pltpu.VMEM((H * W, 9 * Cin), jnp.float32),           # im2col patch (conv)
            pltpu.VMEM((H + 2, W + 2, D), jnp.float32),          # -inf padded pool in
            pltpu.VMEM((H2, W + 2, D), jnp.float32),             # row-pooled
            pltpu.VMEM((H2, W2, D), jnp.float32),                # pooled output
            pltpu.VMEM((H2 + 2, W2 + 2, D), jnp.float32),        # padded residual in
            pltpu.VMEM((H2 * W2, 9 * D), jnp.float32),           # im2col patch (res)
        ],
        compiler_params=pltpu.CompilerParams(
            dimension_semantics=("parallel",)),
    )(x, prep["w0"], prep["b0"], prep["w11"], prep["b11"], prep["w12"],
      prep["b12"], prep["w21"], prep["b21"], prep["w22"], prep["b22"])

    return jnp.transpose(out_nhwc, (0, 3, 1, 2))                 # NHWC -> NCHW


# ----------------------------- pure-JAX reference ------------------------------

def impala_block_reference(x_nchw, p):
    def conv(x, w, b):
        y = jax.lax.conv_general_dilated(
            x, w, window_strides=(1, 1), padding=((1, 1), (1, 1)),
            dimension_numbers=("NCHW", "OIHW", "NCHW"),
            precision=jax.lax.Precision.HIGHEST)
        return y + b[None, :, None, None]

    def maxpool(x):
        return jax.lax.reduce_window(
            x, -jnp.inf, jax.lax.max,
            window_dimensions=(1, 1, 3, 3), window_strides=(1, 1, 2, 2),
            padding=((0, 0), (0, 0), (1, 1), (1, 1)))

    y = maxpool(conv(x_nchw, p["conv_w"], p["conv_b"]))
    r = conv(jax.nn.relu(y), p["r1w1"], p["r1b1"])
    r = conv(jax.nn.relu(r), p["r1w2"], p["r1b2"])
    y = y + r
    r = conv(jax.nn.relu(y), p["r2w1"], p["r2b1"])
    r = conv(jax.nn.relu(r), p["r2w2"], p["r2b2"])
    y = y + r
    return y


# ------------------------------------ main --------------------------------------

if __name__ == "__main__":
    N, Cin, H, W = 2, 4, 16, 16
    depth = 8

    key = jax.random.PRNGKey(0)
    ks = jax.random.split(key, 11)
    x = jax.random.normal(ks[0], (N, Cin, H, W), dtype=jnp.float32)

    def w_init(k, o, i):
        return 0.1 * jax.random.normal(k, (o, i, 3, 3), dtype=jnp.float32)

    def b_init(k, o):
        return 0.05 * jax.random.normal(k, (o,), dtype=jnp.float32)

    params = {
        "conv_w": w_init(ks[1], depth, Cin), "conv_b": b_init(ks[2], depth),
        "r1w1": w_init(ks[3], depth, depth), "r1b1": b_init(ks[4], depth),
        "r1w2": w_init(ks[5], depth, depth), "r1b2": b_init(ks[6], depth),
        "r2w1": w_init(ks[7], depth, depth), "r2b1": b_init(ks[8], depth),
        "r2w2": w_init(ks[9], depth, depth), "r2b2": b_init(ks[10], depth),
    }

    prep = jax.tree_util.tree_map(jnp.asarray, prepare_params(params))  # one-time
    forward = jax.jit(impala_block_pallas)

    out = jax.block_until_ready(forward(x, prep))
    ref = jax.block_until_ready(impala_block_reference(x, params))

    assert out.shape == (N, depth, H // 2, W // 2), out.shape
    np.testing.assert_allclose(np.asarray(out), np.asarray(ref),
                               rtol=5e-3, atol=5e-3)
    print("KERNEL_OK")
</pallas_src>

<mosaic_0001>
module attributes {stable_mosaic.version = 11 : i64} {
  func.func @_impala_block_kernel(%arg0: i32, %arg1: memref<1x16x16x4xf32, #tpu.memory_space<vmem>>, %arg2: memref<36x8xf32, #tpu.memory_space<vmem>>, %arg3: memref<1x8xf32, #tpu.memory_space<vmem>>, %arg4: memref<72x8xf32, #tpu.memory_space<vmem>>, %arg5: memref<1x8xf32, #tpu.memory_space<vmem>>, %arg6: memref<72x8xf32, #tpu.memory_space<vmem>>, %arg7: memref<1x8xf32, #tpu.memory_space<vmem>>, %arg8: memref<72x8xf32, #tpu.memory_space<vmem>>, %arg9: memref<1x8xf32, #tpu.memory_space<vmem>>, %arg10: memref<72x8xf32, #tpu.memory_space<vmem>>, %arg11: memref<1x8xf32, #tpu.memory_space<vmem>>, %arg12: memref<1x8x8x8xf32, #tpu.memory_space<vmem>>, %arg13: memref<18x18x4xf32, #tpu.memory_space<vmem>>, %arg14: memref<256x36xf32, #tpu.memory_space<vmem>>, %arg15: memref<18x18x8xf32, #tpu.memory_space<vmem>>, %arg16: memref<8x18x8xf32, #tpu.memory_space<vmem>>, %arg17: memref<8x8x8xf32, #tpu.memory_space<vmem>>, %arg18: memref<10x10x8xf32, #tpu.memory_space<vmem>>, %arg19: memref<64x72xf32, #tpu.memory_space<vmem>>) attributes {dimension_semantics = [#tpu.dimension_semantics<parallel>], iteration_bounds = array<i64: 2>, scalar_prefetch = 0 : i64, scratch_operands = 7 : i64, tpu.core_type = #tpu.core_type<tc>, window_params = [{transform_indices = @transform_0, window_bounds = array<i64: 1, 16, 16, 4>}, {pipeline_mode = #tpu.pipeline_mode<synchronous>, transform_indices = @transform_1, window_bounds = array<i64: 36, 8>}, {pipeline_mode = #tpu.pipeline_mode<synchronous>, transform_indices = @transform_2, window_bounds = array<i64: 1, 8>}, {pipeline_mode = #tpu.pipeline_mode<synchronous>, transform_indices = @transform_3, window_bounds = array<i64: 72, 8>}, {pipeline_mode = #tpu.pipeline_mode<synchronous>, transform_indices = @transform_4, window_bounds = array<i64: 1, 8>}, {pipeline_mode = #tpu.pipeline_mode<synchronous>, transform_indices = @transform_5, window_bounds = array<i64: 72, 8>}, {pipeline_mode = #tpu.pipeline_mode<synchronous>, transform_indices = @transform_6, window_bounds = array<i64: 1, 8>}, {pipeline_mode = #tpu.pipeline_mode<synchronous>, transform_indices = @transform_7, window_bounds = array<i64: 72, 8>}, {pipeline_mode = #tpu.pipeline_mode<synchronous>, transform_indices = @transform_8, window_bounds = array<i64: 1, 8>}, {pipeline_mode = #tpu.pipeline_mode<synchronous>, transform_indices = @transform_9, window_bounds = array<i64: 72, 8>}, {pipeline_mode = #tpu.pipeline_mode<synchronous>, transform_indices = @transform_10, window_bounds = array<i64: 1, 8>}, {transform_indices = @transform_11, window_bounds = array<i64: 1, 8, 8, 8>}]} {
    %cst = arith.constant 0.000000e+00 : f32
    %0 = vector.broadcast %cst : f32 to vector<18x18x4xf32>
    %c0 = arith.constant 0 : index
    %c0_0 = arith.constant 0 : index
    %c0_1 = arith.constant 0 : index
    %1 = vector.load %arg13[%c0, %c0_0, %c0_1] : memref<18x18x4xf32, #tpu.memory_space<vmem>>, vector<18x18x4xf32>
    tpu.vector_store %arg13[%c0, %c0_0, %c0_1], %0 {strides = array<i32>} : memref<18x18x4xf32, #tpu.memory_space<vmem>>, vector<18x18x4xf32>,
    %c0_2 = arith.constant 0 : index
    %c0_3 = arith.constant 0 : index
    %c0_4 = arith.constant 0 : index
    %c0_5 = arith.constant 0 : index
    %2 = vector.load %arg1[%c0_2, %c0_3, %c0_4, %c0_5] : memref<1x16x16x4xf32, #tpu.memory_space<vmem>>, vector<1x16x16x4xf32>
    %3 = vector.shape_cast %2 : vector<1x16x16x4xf32> to vector<16x16x4xf32>
    %c1 = arith.constant 1 : index
    %c1_6 = arith.constant 1 : index
    %c0_7 = arith.constant 0 : index
    %4 = vector.load %arg13[%c1, %c1_6, %c0_7] : memref<18x18x4xf32, #tpu.memory_space<vmem>>, vector<16x16x4xf32>
    tpu.vector_store %arg13[%c1, %c1_6, %c0_7], %3 {strides = array<i32>} : memref<18x18x4xf32, #tpu.memory_space<vmem>>, vector<16x16x4xf32>,
    %c0_8 = arith.constant 0 : index
    %c0_9 = arith.constant 0 : index
    %c0_10 = arith.constant 0 : index
    %5 = vector.load %arg13[%c0_8, %c0_9, %c0_10] : memref<18x18x4xf32, #tpu.memory_space<vmem>>, vector<18x18x4xf32>
    %6 = vector.extract_strided_slice %5 {offsets = [0, 0, 0], sizes = [16, 16, 4], strides = [1, 1, 1]} : vector<18x18x4xf32> to vector<16x16x4xf32>
    %7 = vector.shape_cast %6 : vector<16x16x4xf32> to vector<256x4xf32>
    %c0_11 = arith.constant 0 : index
    %c0_12 = arith.constant 0 : index
    %8 = vector.load %arg14[%c0_11, %c0_12] : memref<256x36xf32, #tpu.memory_space<vmem>>, vector<256x4xf32>
    tpu.vector_store %arg14[%c0_11, %c0_12], %7 {strides = array<i32>} : memref<256x36xf32, #tpu.memory_space<vmem>>, vector<256x4xf32>,
    %9 = vector.extract_strided_slice %5 {offsets = [0, 1, 0], sizes = [16, 16, 4], strides = [1, 1, 1]} : vector<18x18x4xf32> to vector<16x16x4xf32>
    %10 = vector.shape_cast %9 : vector<16x16x4xf32> to vector<256x4xf32>
    %c0_13 = arith.constant 0 : index
    %c4 = arith.constant 4 : index
    %11 = vector.load %arg14[%c0_13, %c4] : memref<256x36xf32, #tpu.memory_space<vmem>>, vector<256x4xf32>
    tpu.vector_store %arg14[%c0_13, %c4], %10 {strides = array<i32>} : memref<256x36xf32, #tpu.memory_space<vmem>>, vector<256x4xf32>,
    %12 = vector.extract_strided_slice %5 {offsets = [0, 2, 0], sizes = [16, 16, 4], strides = [1, 1, 1]} : vector<18x18x4xf32> to vector<16x16x4xf32>
    %13 = vector.shape_cast %12 : vector<16x16x4xf32> to vector<256x4xf32>
    %c0_14 = arith.constant 0 : index
    %c8 = arith.constant 8 : index
    %14 = vector.load %arg14[%c0_14, %c8] : memref<256x36xf32, #tpu.memory_space<vmem>>, vector<256x4xf32>
    tpu.vector_store %arg14[%c0_14, %c8], %13 {strides = array<i32>} : memref<256x36xf32, #tpu.memory_space<vmem>>, vector<256x4xf32>,
    %15 = vector.extract_strided_slice %5 {offsets = [1, 0, 0], sizes = [16, 16, 4], strides = [1, 1, 1]} : vector<18x18x4xf32> to vector<16x16x4xf32>
    %16 = vector.shape_cast %15 : vector<16x16x4xf32> to vector<256x4xf32>
    %c0_15 = arith.constant 0 : index
    %c12 = arith.constant 12 : index
    %17 = vector.load %arg14[%c0_15, %c12] : memref<256x36xf32, #tpu.memory_space<vmem>>, vector<256x4xf32>
    tpu.vector_store %arg14[%c0_15, %c12], %16 {strides = array<i32>} : memref<256x36xf32, #tpu.memory_space<vmem>>, vector<256x4xf32>,
    %18 = vector.extract_strided_slice %5 {offsets = [1, 1, 0], sizes = [16, 16, 4], strides = [1, 1, 1]} : vector<18x18x4xf32> to vector<16x16x4xf32>
    %19 = vector.shape_cast %18 : vector<16x16x4xf32> to vector<256x4xf32>
    %c0_16 = arith.constant 0 : index
    %c16 = arith.constant 16 : index
    %20 = vector.load %arg14[%c0_16, %c16] : memref<256x36xf32, #tpu.memory_space<vmem>>, vector<256x4xf32>
    tpu.vector_store %arg14[%c0_16, %c16], %19 {strides = array<i32>} : memref<256x36xf32, #tpu.memory_space<vmem>>, vector<256x4xf32>,
    %21 = vector.extract_strided_slice %5 {offsets = [1, 2, 0], sizes = [16, 16, 4], strides = [1, 1, 1]} : vector<18x18x4xf32> to vector<16x16x4xf32>
    %22 = vector.shape_cast %21 : vector<16x16x4xf32> to vector<256x4xf32>
    %c0_17 = arith.constant 0 : index
    %c20 = arith.constant 20 : index
    %23 = vector.load %arg14[%c0_17, %c20] : memref<256x36xf32, #tpu.memory_space<vmem>>, vector<256x4xf32>
    tpu.vector_store %arg14[%c0_17, %c20], %22 {strides = array<i32>} : memref<256x36xf32, #tpu.memory_space<vmem>>, vector<256x4xf32>,
    %24 = vector.extract_strided_slice %5 {offsets = [2, 0, 0], sizes = [16, 16, 4], strides = [1, 1, 1]} : vector<18x18x4xf32> to vector<16x16x4xf32>
    %25 = vector.shape_cast %24 : vector<16x16x4xf32> to vector<256x4xf32>
    %c0_18 = arith.constant 0 : index
    %c24 = arith.constant 24 : index
    %26 = vector.load %arg14[%c0_18, %c24] : memref<256x36xf32, #tpu.memory_space<vmem>>, vector<256x4xf32>
    tpu.vector_store %arg14[%c0_18, %c24], %25 {strides = array<i32>} : memref<256x36xf32, #tpu.memory_space<vmem>>, vector<256x4xf32>,
    %27 = vector.extract_strided_slice %5 {offsets = [2, 1, 0], sizes = [16, 16, 4], strides = [1, 1, 1]} : vector<18x18x4xf32> to vector<16x16x4xf32>
    %28 = vector.shape_cast %27 : vector<16x16x4xf32> to vector<256x4xf32>
    %c0_19 = arith.constant 0 : index
    %c28 = arith.constant 28 : index
    %29 = vector.load %arg14[%c0_19, %c28] : memref<256x36xf32, #tpu.memory_space<vmem>>, vector<256x4xf32>
    tpu.vector_store %arg14[%c0_19, %c28], %28 {strides = array<i32>} : memref<256x36xf32, #tpu.memory_space<vmem>>, vector<256x4xf32>,
    %30 = vector.extract_strided_slice %5 {offsets = [2, 2, 0], sizes = [16, 16, 4], strides = [1, 1, 1]} : vector<18x18x4xf32> to vector<16x16x4xf32>
    %31 = vector.shape_cast %30 : vector<16x16x4xf32> to vector<256x4xf32>
    %c0_20 = arith.constant 0 : index
    %c32 = arith.constant 32 : index
    %32 = vector.load %arg14[%c0_20, %c32] : memref<256x36xf32, #tpu.memory_space<vmem>>, vector<256x4xf32>
    tpu.vector_store %arg14[%c0_20, %c32], %31 {strides = array<i32>} : memref<256x36xf32, #tpu.memory_space<vmem>>, vector<256x4xf32>,
    %c0_21 = arith.constant 0 : index
    %c0_22 = arith.constant 0 : index
    %33 = vector.load %arg14[%c0_21, %c0_22] : memref<256x36xf32, #tpu.memory_space<vmem>>, vector<256x36xf32>
    %c0_23 = arith.constant 0 : index
    %c0_24 = arith.constant 0 : index
    %34 = vector.load %arg2[%c0_23, %c0_24] : memref<36x8xf32, #tpu.memory_space<vmem>>, vector<36x8xf32>
    %cst_25 = arith.constant dense<0.000000e+00> : vector<256x8xf32>
    %35 = tpu.matmul %33, %34, %cst_25 {dimension_numbers = #tpu.dot_dimension_numbers<[1], [0], [0], [1], [0, 0, 1, 1], [], []>} : vector<256x36xf32>, vector<36x8xf32>, vector<256x8xf32> -> vector<256x8xf32>
    %c0_26 = arith.constant 0 : index
    %c0_27 = arith.constant 0 : index
    %36 = vector.load %arg3[%c0_26, %c0_27] : memref<1x8xf32, #tpu.memory_space<vmem>>, vector<1x8xf32>
    %37 = vector.broadcast %36 : vector<1x8xf32> to vector<256x8xf32>
    %38 = arith.addf %35, %37 : vector<256x8xf32>
    %39 = vector.shape_cast %38 : vector<256x8xf32> to vector<16x16x8xf32>
    %cst_28 = arith.constant 0xFF800000 : f32
    %40 = vector.broadcast %cst_28 : f32 to vector<18x18x8xf32>
    %c0_29 = arith.constant 0 : index
    %c0_30 = arith.constant 0 : index
    %c0_31 = arith.constant 0 : index
    %41 = vector.load %arg15[%c0_29, %c0_30, %c0_31] : memref<18x18x8xf32, #tpu.memory_space<vmem>>, vector<18x18x8xf32>
    tpu.vector_store %arg15[%c0_29, %c0_30, %c0_31], %40 {strides = array<i32>} : memref<18x18x8xf32, #tpu.memory_space<vmem>>, vector<18x18x8xf32>,
    %c1_32 = arith.constant 1 : index
    %c1_33 = arith.constant 1 : index
    %c0_34 = arith.constant 0 : index
    %42 = vector.load %arg15[%c1_32, %c1_33, %c0_34] : memref<18x18x8xf32, #tpu.memory_space<vmem>>, vector<16x16x8xf32>
    tpu.vector_store %arg15[%c1_32, %c1_33, %c0_34], %39 {strides = array<i32>} : memref<18x18x8xf32, #tpu.memory_space<vmem>>, vector<16x16x8xf32>,
    %c0_35 = arith.constant 0 : index
    %c0_36 = arith.constant 0 : index
    %c0_37 = arith.constant 0 : index
    %43 = vector.load %arg15[%c0_35, %c0_36, %c0_37] : memref<18x18x8xf32, #tpu.memory_space<vmem>>, vector<18x18x8xf32>
    %44 = vector.extract_strided_slice %43 {offsets = [0, 0, 0], sizes = [1, 18, 8], strides = [1, 1, 1]} : vector<18x18x8xf32> to vector<1x18x8xf32>
    %45 = vector.extract_strided_slice %43 {offsets = [1, 0, 0], sizes = [1, 18, 8], strides = [1, 1, 1]} : vector<18x18x8xf32> to vector<1x18x8xf32>
    %46 = arith.maximumf %44, %45 : vector<1x18x8xf32>
    %47 = vector.extract_strided_slice %43 {offsets = [2, 0, 0], sizes = [1, 18, 8], strides = [1, 1, 1]} : vector<18x18x8xf32> to vector<1x18x8xf32>
    %48 = arith.maximumf %46, %47 : vector<1x18x8xf32>
    %c0_38 = arith.constant 0 : index
    %c0_39 = arith.constant 0 : index
    %c0_40 = arith.constant 0 : index
    %49 = vector.load %arg16[%c0_38, %c0_39, %c0_40] : memref<8x18x8xf32, #tpu.memory_space<vmem>>, vector<1x18x8xf32>
    tpu.vector_store %arg16[%c0_38, %c0_39, %c0_40], %48 {strides = array<i32>} : memref<8x18x8xf32, #tpu.memory_space<vmem>>, vector<1x18x8xf32>,
    %50 = vector.extract_strided_slice %43 {offsets = [2, 0, 0], sizes = [1, 18, 8], strides = [1, 1, 1]} : vector<18x18x8xf32> to vector<1x18x8xf32>
    %51 = vector.extract_strided_slice %43 {offsets = [3, 0, 0], sizes = [1, 18, 8], strides = [1, 1, 1]} : vector<18x18x8xf32> to vector<1x18x8xf32>
    %52 = arith.maximumf %50, %51 : vector<1x18x8xf32>
    %53 = vector.extract_strided_slice %43 {offsets = [4, 0, 0], sizes = [1, 18, 8], strides = [1, 1, 1]} : vector<18x18x8xf32> to vector<1x18x8xf32>
    %54 = arith.maximumf %52, %53 : vector<1x18x8xf32>
    %c1_41 = arith.constant 1 : index
    %c0_42 = arith.constant 0 : index
    %c0_43 = arith.constant 0 : index
    %55 = vector.load %arg16[%c1_41, %c0_42, %c0_43] : memref<8x18x8xf32, #tpu.memory_space<vmem>>, vector<1x18x8xf32>
    tpu.vector_store %arg16[%c1_41, %c0_42, %c0_43], %54 {strides = array<i32>} : memref<8x18x8xf32, #tpu.memory_space<vmem>>, vector<1x18x8xf32>,
    %56 = vector.extract_strided_slice %43 {offsets = [4, 0, 0], sizes = [1, 18, 8], strides = [1, 1, 1]} : vector<18x18x8xf32> to vector<1x18x8xf32>
    %57 = vector.extract_strided_slice %43 {offsets = [5, 0, 0], sizes = [1, 18, 8], strides = [1, 1, 1]} : vector<18x18x8xf32> to vector<1x18x8xf32>
    %58 = arith.maximumf %56, %57 : vector<1x18x8xf32>
    %59 = vector.extract_strided_slice %43 {offsets = [6, 0, 0], sizes = [1, 18, 8], strides = [1, 1, 1]} : vector<18x18x8xf32> to vector<1x18x8xf32>
    %60 = arith.maximumf %58, %59 : vector<1x18x8xf32>
    %c2 = arith.constant 2 : index
    %c0_44 = arith.constant 0 : index
    %c0_45 = arith.constant 0 : index
    %61 = vector.load %arg16[%c2, %c0_44, %c0_45] : memref<8x18x8xf32, #tpu.memory_space<vmem>>, vector<1x18x8xf32>
    tpu.vector_store %arg16[%c2, %c0_44, %c0_45], %60 {strides = array<i32>} : memref<8x18x8xf32, #tpu.memory_space<vmem>>, vector<1x18x8xf32>,
    %62 = vector.extract_strided_slice %43 {offsets = [6, 0, 0], sizes = [1, 18, 8], strides = [1, 1, 1]} : vector<18x18x8xf32> to vector<1x18x8xf32>
    %63 = vector.extract_strided_slice %43 {offsets = [7, 0, 0], sizes = [1, 18, 8], strides = [1, 1, 1]} : vector<18x18x8xf32> to vector<1x18x8xf32>
    %64 = arith.maximumf %62, %63 : vector<1x18x8xf32>
    %65 = vector.extract_strided_slice %43 {offsets = [8, 0, 0], sizes = [1, 18, 8], strides = [1, 1, 1]} : vector<18x18x8xf32> to vector<1x18x8xf32>
    %66 = arith.maximumf %64, %65 : vector<1x18x8xf32>
    %c3 = arith.constant 3 : index
    %c0_46 = arith.constant 0 : index
    %c0_47 = arith.constant 0 : index
    %67 = vector.load %arg16[%c3, %c0_46, %c0_47] : memref<8x18x8xf32, #tpu.memory_space<vmem>>, vector<1x18x8xf32>
    tpu.vector_store %arg16[%c3, %c0_46, %c0_47], %66 {strides = array<i32>} : memref<8x18x8xf32, #tpu.memory_space<vmem>>, vector<1x18x8xf32>,
    %68 = vector.extract_strided_slice %43 {offsets = [8, 0, 0], sizes = [1, 18, 8], strides = [1, 1, 1]} : vector<18x18x8xf32> to vector<1x18x8xf32>
    %69 = vector.extract_strided_slice %43 {offsets = [9, 0, 0], sizes = [1, 18, 8], strides = [1, 1, 1]} : vector<18x18x8xf32> to vector<1x18x8xf32>
    %70 = arith.maximumf %68, %69 : vector<1x18x8xf32>
    %71 = vector.extract_strided_slice %43 {offsets = [10, 0, 0], sizes = [1, 18, 8], strides = [1, 1, 1]} : vector<18x18x8xf32> to vector<1x18x8xf32>
    %72 = arith.maximumf %70, %71 : vector<1x18x8xf32>
    %c4_48 = arith.constant 4 : index
    %c0_49 = arith.constant 0 : index
    %c0_50 = arith.constant 0 : index
    %73 = vector.load %arg16[%c4_48, %c0_49, %c0_50] : memref<8x18x8xf32, #tpu.memory_space<vmem>>, vector<1x18x8xf32>
    tpu.vector_store %arg16[%c4_48, %c0_49, %c0_50], %72 {strides = array<i32>} : memref<8x18x8xf32, #tpu.memory_space<vmem>>, vector<1x18x8xf32>,
    %74 = vector.extract_strided_slice %43 {offsets = [10, 0, 0], sizes = [1, 18, 8], strides = [1, 1, 1]} : vector<18x18x8xf32> to vector<1x18x8xf32>
    %75 = vector.extract_strided_slice %43 {offsets = [11, 0, 0], sizes = [1, 18, 8], strides = [1, 1, 1]} : vector<18x18x8xf32> to vector<1x18x8xf32>
    %76 = arith.maximumf %74, %75 : vector<1x18x8xf32>
    %77 = vector.extract_strided_slice %43 {offsets = [12, 0, 0], sizes = [1, 18, 8], strides = [1, 1, 1]} : vector<18x18x8xf32> to vector<1x18x8xf32>
    %78 = arith.maximumf %76, %77 : vector<1x18x8xf32>
    %c5 = arith.constant 5 : index
    %c0_51 = arith.constant 0 : index
    %c0_52 = arith.constant 0 : index
    %79 = vector.load %arg16[%c5, %c0_51, %c0_52] : memref<8x18x8xf32, #tpu.memory_space<vmem>>, vector<1x18x8xf32>
    tpu.vector_store %arg16[%c5, %c0_51, %c0_52], %78 {strides = array<i32>} : memref<8x18x8xf32, #tpu.memory_space<vmem>>, vector<1x18x8xf32>,
    %80 = vector.extract_strided_slice %43 {offsets = [12, 0, 0], sizes = [1, 18, 8], strides = [1, 1, 1]} : vector<18x18x8xf32> to vector<1x18x8xf32>
    %81 = vector.extract_strided_slice %43 {offsets = [13, 0, 0], sizes = [1, 18, 8], strides = [1, 1, 1]} : vector<18x18x8xf32> to vector<1x18x8xf32>
    %82 = arith.maximumf %80, %81 : vector<1x18x8xf32>
    %83 = vector.extract_strided_slice %43 {offsets = [14, 0, 0], sizes = [1, 18, 8], strides = [1, 1, 1]} : vector<18x18x8xf32> to vector<1x18x8xf32>
    %84 = arith.maximumf %82, %83 : vector<1x18x8xf32>
    %c6 = arith.constant 6 : index
    %c0_53 = arith.constant 0 : index
    %c0_54 = arith.constant 0 : index
    %85 = vector.load %arg16[%c6, %c0_53, %c0_54] : memref<8x18x8xf32, #tpu.memory_space<vmem>>, vector<1x18x8xf32>
    tpu.vector_store %arg16[%c6, %c0_53, %c0_54], %84 {strides = array<i32>} : memref<8x18x8xf32, #tpu.memory_space<vmem>>, vector<1x18x8xf32>,
    %86 = vector.extract_strided_slice %43 {offsets = [14, 0, 0], sizes = [1, 18, 8], strides = [1, 1, 1]} : vector<18x18x8xf32> to vector<1x18x8xf32>
    %87 = vector.extract_strided_slice %43 {offsets = [15, 0, 0], sizes = [1, 18, 8], strides = [1, 1, 1]} : vector<18x18x8xf32> to vector<1x18x8xf32>
    %88 = arith.maximumf %86, %87 : vector<1x18x8xf32>
    %89 = vector.extract_strided_slice %43 {offsets = [16, 0, 0], sizes = [1, 18, 8], strides = [1, 1, 1]} : vector<18x18x8xf32> to vector<1x18x8xf32>
    %90 = arith.maximumf %88, %89 : vector<1x18x8xf32>
    %c7 = arith.constant 7 : index
    %c0_55 = arith.constant 0 : index
    %c0_56 = arith.constant 0 : index
    %91 = vector.load %arg16[%c7, %c0_55, %c0_56] : memref<8x18x8xf32, #tpu.memory_space<vmem>>, vector<1x18x8xf32>
    tpu.vector_store %arg16[%c7, %c0_55, %c0_56], %90 {strides = array<i32>} : memref<8x18x8xf32, #tpu.memory_space<vmem>>, vector<1x18x8xf32>,
    %c0_57 = arith.constant 0 : index
    %c0_58 = arith.constant 0 : index
    %c0_59 = arith.constant 0 : index
    %92 = vector.load %arg16[%c0_57, %c0_58, %c0_59] : memref<8x18x8xf32, #tpu.memory_space<vmem>>, vector<8x18x8xf32>
    %93 = vector.extract_strided_slice %92 {offsets = [0, 0, 0], sizes = [8, 1, 8], strides = [1, 1, 1]} : vector<8x18x8xf32> to vector<8x1x8xf32>
    %94 = vector.extract_strided_slice %92 {offsets = [0, 1, 0], sizes = [8, 1, 8], strides = [1, 1, 1]} : vector<8x18x8xf32> to vector<8x1x8xf32>
    %95 = arith.maximumf %93, %94 : vector<8x1x8xf32>
    %96 = vector.extract_strided_slice %92 {offsets = [0, 2, 0], sizes = [8, 1, 8], strides = [1, 1, 1]} : vector<8x18x8xf32> to vector<8x1x8xf32>
    %97 = arith.maximumf %95, %96 : vector<8x1x8xf32>
    %c0_60 = arith.constant 0 : index
    %c0_61 = arith.constant 0 : index
    %c0_62 = arith.constant 0 : index
    %98 = vector.load %arg17[%c0_60, %c0_61, %c0_62] : memref<8x8x8xf32, #tpu.memory_space<vmem>>, vector<8x1x8xf32>
    tpu.vector_store %arg17[%c0_60, %c0_61, %c0_62], %97 {strides = array<i32>} : memref<8x8x8xf32, #tpu.memory_space<vmem>>, vector<8x1x8xf32>,
    %99 = vector.extract_strided_slice %92 {offsets = [0, 2, 0], sizes = [8, 1, 8], strides = [1, 1, 1]} : vector<8x18x8xf32> to vector<8x1x8xf32>
    %100 = vector.extract_strided_slice %92 {offsets = [0, 3, 0], sizes = [8, 1, 8], strides = [1, 1, 1]} : vector<8x18x8xf32> to vector<8x1x8xf32>
    %101 = arith.maximumf %99, %100 : vector<8x1x8xf32>
    %102 = vector.extract_strided_slice %92 {offsets = [0, 4, 0], sizes = [8, 1, 8], strides = [1, 1, 1]} : vector<8x18x8xf32> to vector<8x1x8xf32>
    %103 = arith.maximumf %101, %102 : vector<8x1x8xf32>
    %c0_63 = arith.constant 0 : index
    %c1_64 = arith.constant 1 : index
    %c0_65 = arith.constant 0 : index
    %104 = vector.load %arg17[%c0_63, %c1_64, %c0_65] : memref<8x8x8xf32, #tpu.memory_space<vmem>>, vector<8x1x8xf32>
    tpu.vector_store %arg17[%c0_63, %c1_64, %c0_65], %103 {strides = array<i32>} : memref<8x8x8xf32, #tpu.memory_space<vmem>>, vector<8x1x8xf32>,
    %105 = vector.extract_strided_slice %92 {offsets = [0, 4, 0], sizes = [8, 1, 8], strides = [1, 1, 1]} : vector<8x18x8xf32> to vector<8x1x8xf32>
    %106 = vector.extract_strided_slice %92 {offsets = [0, 5, 0], sizes = [8, 1, 8], strides = [1, 1, 1]} : vector<8x18x8xf32> to vector<8x1x8xf32>
    %107 = arith.maximumf %105, %106 : vector<8x1x8xf32>
    %108 = vector.extract_strided_slice %92 {offsets = [0, 6, 0], sizes = [8, 1, 8], strides = [1, 1, 1]} : vector<8x18x8xf32> to vector<8x1x8xf32>
    %109 = arith.maximumf %107, %108 : vector<8x1x8xf32>
    %c0_66 = arith.constant 0 : index
    %c2_67 = arith.constant 2 : index
    %c0_68 = arith.constant 0 : index
    %110 = vector.load %arg17[%c0_66, %c2_67, %c0_68] : memref<8x8x8xf32, #tpu.memory_space<vmem>>, vector<8x1x8xf32>
    tpu.vector_store %arg17[%c0_66, %c2_67, %c0_68], %109 {strides = array<i32>} : memref<8x8x8xf32, #tpu.memory_space<vmem>>, vector<8x1x8xf32>,
    %111 = vector.extract_strided_slice %92 {offsets = [0, 6, 0], sizes = [8, 1, 8], strides = [1, 1, 1]} : vector<8x18x8xf32> to vector<8x1x8xf32>
    %112 = vector.extract_strided_slice %92 {offsets = [0, 7, 0], sizes = [8, 1, 8], strides = [1, 1, 1]} : vector<8x18x8xf32> to vector<8x1x8xf32>
    %113 = arith.maximumf %111, %112 : vector<8x1x8xf32>
    %114 = vector.extract_strided_slice %92 {offsets = [0, 8, 0], sizes = [8, 1, 8], strides = [1, 1, 1]} : vector<8x18x8xf32> to vector<8x1x8xf32>
    %115 = arith.maximumf %113, %114 : vector<8x1x8xf32>
    %c0_69 = arith.constant 0 : index
    %c3_70 = arith.constant 3 : index
    %c0_71 = arith.constant 0 : index
    %116 = vector.load %arg17[%c0_69, %c3_70, %c0_71] : memref<8x8x8xf32, #tpu.memory_space<vmem>>, vector<8x1x8xf32>
    tpu.vector_store %arg17[%c0_69, %c3_70, %c0_71], %115 {strides = array<i32>} : memref<8x8x8xf32, #tpu.memory_space<vmem>>, vector<8x1x8xf32>,
    %117 = vector.extract_strided_slice %92 {offsets = [0, 8, 0], sizes = [8, 1, 8], strides = [1, 1, 1]} : vector<8x18x8xf32> to vector<8x1x8xf32>
    %118 = vector.extract_strided_slice %92 {offsets = [0, 9, 0], sizes = [8, 1, 8], strides = [1, 1, 1]} : vector<8x18x8xf32> to vector<8x1x8xf32>
    %119 = arith.maximumf %117, %118 : vector<8x1x8xf32>
    %120 = vector.extract_strided_slice %92 {offsets = [0, 10, 0], sizes = [8, 1, 8], strides = [1, 1, 1]} : vector<8x18x8xf32> to vector<8x1x8xf32>
    %121 = arith.maximumf %119, %120 : vector<8x1x8xf32>
    %c0_72 = arith.constant 0 : index
    %c4_73 = arith.constant 4 : index
    %c0_74 = arith.constant 0 : index
    %122 = vector.load %arg17[%c0_72, %c4_73, %c0_74] : memref<8x8x8xf32, #tpu.memory_space<vmem>>, vector<8x1x8xf32>
    tpu.vector_store %arg17[%c0_72, %c4_73, %c0_74], %121 {strides = array<i32>} : memref<8x8x8xf32, #tpu.memory_space<vmem>>, vector<8x1x8xf32>,
    %123 = vector.extract_strided_slice %92 {offsets = [0, 10, 0], sizes = [8, 1, 8], strides = [1, 1, 1]} : vector<8x18x8xf32> to vector<8x1x8xf32>
    %124 = vector.extract_strided_slice %92 {offsets = [0, 11, 0], sizes = [8, 1, 8], strides = [1, 1, 1]} : vector<8x18x8xf32> to vector<8x1x8xf32>
    %125 = arith.maximumf %123, %124 : vector<8x1x8xf32>
    %126 = vector.extract_strided_slice %92 {offsets = [0, 12, 0], sizes = [8, 1, 8], strides = [1, 1, 1]} : vector<8x18x8xf32> to vector<8x1x8xf32>
    %127 = arith.maximumf %125, %126 : vector<8x1x8xf32>
    %c0_75 = arith.constant 0 : index
    %c5_76 = arith.constant 5 : index
    %c0_77 = arith.constant 0 : index
    %128 = vector.load %arg17[%c0_75, %c5_76, %c0_77] : memref<8x8x8xf32, #tpu.memory_space<vmem>>, vector<8x1x8xf32>
    tpu.vector_store %arg17[%c0_75, %c5_76, %c0_77], %127 {strides = array<i32>} : memref<8x8x8xf32, #tpu.memory_space<vmem>>, vector<8x1x8xf32>,
    %129 = vector.extract_strided_slice %92 {offsets = [0, 12, 0], sizes = [8, 1, 8], strides = [1, 1, 1]} : vector<8x18x8xf32> to vector<8x1x8xf32>
    %130 = vector.extract_strided_slice %92 {offsets = [0, 13, 0], sizes = [8, 1, 8], strides = [1, 1, 1]} : vector<8x18x8xf32> to vector<8x1x8xf32>
    %131 = arith.maximumf %129, %130 : vector<8x1x8xf32>
    %132 = vector.extract_strided_slice %92 {offsets = [0, 14, 0], sizes = [8, 1, 8], strides = [1, 1, 1]} : vector<8x18x8xf32> to vector<8x1x8xf32>
    %133 = arith.maximumf %131, %132 : vector<8x1x8xf32>
    %c0_78 = arith.constant 0 : index
    %c6_79 = arith.constant 6 : index
    %c0_80 = arith.constant 0 : index
    %134 = vector.load %arg17[%c0_78, %c6_79, %c0_80] : memref<8x8x8xf32, #tpu.memory_space<vmem>>, vector<8x1x8xf32>
    tpu.vector_store %arg17[%c0_78, %c6_79, %c0_80], %133 {strides = array<i32>} : memref<8x8x8xf32, #tpu.memory_space<vmem>>, vector<8x1x8xf32>,
    %135 = vector.extract_strided_slice %92 {offsets = [0, 14, 0], sizes = [8, 1, 8], strides = [1, 1, 1]} : vector<8x18x8xf32> to vector<8x1x8xf32>
    %136 = vector.extract_strided_slice %92 {offsets = [0, 15, 0], sizes = [8, 1, 8], strides = [1, 1, 1]} : vector<8x18x8xf32> to vector<8x1x8xf32>
    %137 = arith.maximumf %135, %136 : vector<8x1x8xf32>
    %138 = vector.extract_strided_slice %92 {offsets = [0, 16, 0], sizes = [8, 1, 8], strides = [1, 1, 1]} : vector<8x18x8xf32> to vector<8x1x8xf32>
    %139 = arith.maximumf %137, %138 : vector<8x1x8xf32>
    %c0_81 = arith.constant 0 : index
    %c7_82 = arith.constant 7 : index
    %c0_83 = arith.constant 0 : index
    %140 = vector.load %arg17[%c0_81, %c7_82, %c0_83] : memref<8x8x8xf32, #tpu.memory_space<vmem>>, vector<8x1x8xf32>
    tpu.vector_store %arg17[%c0_81, %c7_82, %c0_83], %139 {strides = array<i32>} : memref<8x8x8xf32, #tpu.memory_space<vmem>>, vector<8x1x8xf32>,
    %c0_84 = arith.constant 0 : index
    %c0_85 = arith.constant 0 : index
    %c0_86 = arith.constant 0 : index
    %141 = vector.load %arg17[%c0_84, %c0_85, %c0_86] : memref<8x8x8xf32, #tpu.memory_space<vmem>>, vector<8x8x8xf32>
    %cst_87 = arith.constant 0.000000e+00 : f32
    %142 = vector.broadcast %cst_87 : f32 to vector<10x10x8xf32>
    %c0_88 = arith.constant 0 : index
    %c0_89 = arith.constant 0 : index
    %c0_90 = arith.constant 0 : index
    %143 = vector.load %arg18[%c0_88, %c0_89, %c0_90] : memref<10x10x8xf32, #tpu.memory_space<vmem>>, vector<10x10x8xf32>
    tpu.vector_store %arg18[%c0_88, %c0_89, %c0_90], %142 {strides = array<i32>} : memref<10x10x8xf32, #tpu.memory_space<vmem>>, vector<10x10x8xf32>,
    %cst_91 = arith.constant 0.000000e+00 : f32
    %144 = vector.broadcast %cst_91 : f32 to vector<8x8x8xf32>
    %145 = arith.maximumf %141, %144 : vector<8x8x8xf32>
    %c1_92 = arith.constant 1 : index
    %c1_93 = arith.constant 1 : index
    %c0_94 = arith.constant 0 : index
    %146 = vector.load %arg18[%c1_92, %c1_93, %c0_94] : memref<10x10x8xf32, #tpu.memory_space<vmem>>, vector<8x8x8xf32>
    tpu.vector_store %arg18[%c1_92, %c1_93, %c0_94], %145 {strides = array<i32>} : memref<10x10x8xf32, #tpu.memory_space<vmem>>, vector<8x8x8xf32>,
    %c0_95 = arith.constant 0 : index
    %c0_96 = arith.constant 0 : index
    %c0_97 = arith.constant 0 : index
    %147 = vector.load %arg18[%c0_95, %c0_96, %c0_97] : memref<10x10x8xf32, #tpu.memory_space<vmem>>, vector<10x10x8xf32>
    %148 = vector.extract_strided_slice %147 {offsets = [0, 0, 0], sizes = [8, 8, 8], strides = [1, 1, 1]} : vector<10x10x8xf32> to vector<8x8x8xf32>
    %149 = vector.shape_cast %148 : vector<8x8x8xf32> to vector<64x8xf32>
    %c0_98 = arith.constant 0 : index
    %c0_99 = arith.constant 0 : index
    %150 = vector.load %arg19[%c0_98, %c0_99] : memref<64x72xf32, #tpu.memory_space<vmem>>, vector<64x8xf32>
    tpu.vector_store %arg19[%c0_98, %c0_99], %149 {strides = array<i32>} : memref<64x72xf32, #tpu.memory_space<vmem>>, vector<64x8xf32>,
    %151 = vector.extract_strided_slice %147 {offsets = [0, 1, 0], sizes = [8, 8, 8], strides = [1, 1, 1]} : vector<10x10x8xf32> to vector<8x8x8xf32>
    %152 = vector.shape_cast %151 : vector<8x8x8xf32> to vector<64x8xf32>
    %c0_100 = arith.constant 0 : index
    %c8_101 = arith.constant 8 : index
    %153 = vector.load %arg19[%c0_100, %c8_101] : memref<64x72xf32, #tpu.memory_space<vmem>>, vector<64x8xf32>
    tpu.vector_store %arg19[%c0_100, %c8_101], %152 {strides = array<i32>} : memref<64x72xf32, #tpu.memory_space<vmem>>, vector<64x8xf32>,
    %154 = vector.extract_strided_slice %147 {offsets = [0, 2, 0], sizes = [8, 8, 8], strides = [1, 1, 1]} : vector<10x10x8xf32> to vector<8x8x8xf32>
    %155 = vector.shape_cast %154 : vector<8x8x8xf32> to vector<64x8xf32>
    %c0_102 = arith.constant 0 : index
    %c16_103 = arith.constant 16 : index
    %156 = vector.load %arg19[%c0_102, %c16_103] : memref<64x72xf32, #tpu.memory_space<vmem>>, vector<64x8xf32>
    tpu.vector_store %arg19[%c0_102, %c16_103], %155 {strides = array<i32>} : memref<64x72xf32, #tpu.memory_space<vmem>>, vector<64x8xf32>,
    %157 = vector.extract_strided_slice %147 {offsets = [1, 0, 0], sizes = [8, 8, 8], strides = [1, 1, 1]} : vector<10x10x8xf32> to vector<8x8x8xf32>
    %158 = vector.shape_cast %157 : vector<8x8x8xf32> to vector<64x8xf32>
    %c0_104 = arith.constant 0 : index
    %c24_105 = arith.constant 24 : index
    %159 = vector.load %arg19[%c0_104, %c24_105] : memref<64x72xf32, #tpu.memory_space<vmem>>, vector<64x8xf32>
    tpu.vector_store %arg19[%c0_104, %c24_105], %158 {strides = array<i32>} : memref<64x72xf32, #tpu.memory_space<vmem>>, vector<64x8xf32>,
    %160 = vector.extract_strided_slice %147 {offsets = [1, 1, 0], sizes = [8, 8, 8], strides = [1, 1, 1]} : vector<10x10x8xf32> to vector<8x8x8xf32>
    %161 = vector.shape_cast %160 : vector<8x8x8xf32> to vector<64x8xf32>
    %c0_106 = arith.constant 0 : index
    %c32_107 = arith.constant 32 : index
    %162 = vector.load %arg19[%c0_106, %c32_107] : memref<64x72xf32, #tpu.memory_space<vmem>>, vector<64x8xf32>
    tpu.vector_store %arg19[%c0_106, %c32_107], %161 {strides = array<i32>} : memref<64x72xf32, #tpu.memory_space<vmem>>, vector<64x8xf32>,
    %163 = vector.extract_strided_slice %147 {offsets = [1, 2, 0], sizes = [8, 8, 8], strides = [1, 1, 1]} : vector<10x10x8xf32> to vector<8x8x8xf32>
    %164 = vector.shape_cast %163 : vector<8x8x8xf32> to vector<64x8xf32>
    %c0_108 = arith.constant 0 : index
    %c40 = arith.constant 40 : index
    %165 = vector.load %arg19[%c0_108, %c40] : memref<64x72xf32, #tpu.memory_space<vmem>>, vector<64x8xf32>
    tpu.vector_store %arg19[%c0_108, %c40], %164 {strides = array<i32>} : memref<64x72xf32, #tpu.memory_space<vmem>>, vector<64x8xf32>,
    %166 = vector.extract_strided_slice %147 {offsets = [2, 0, 0], sizes = [8, 8, 8], strides = [1, 1, 1]} : vector<10x10x8xf32> to vector<8x8x8xf32>
    %167 = vector.shape_cast %166 : vector<8x8x8xf32> to vector<64x8xf32>
    %c0_109 = arith.constant 0 : index
    %c48 = arith.constant 48 : index
    %168 = vector.load %arg19[%c0_109, %c48] : memref<64x72xf32, #tpu.memory_space<vmem>>, vector<64x8xf32>
    tpu.vector_store %arg19[%c0_109, %c48], %167 {strides = array<i32>} : memref<64x72xf32, #tpu.memory_space<vmem>>, vector<64x8xf32>,
    %169 = vector.extract_strided_slice %147 {offsets = [2, 1, 0], sizes = [8, 8, 8], strides = [1, 1, 1]} : vector<10x10x8xf32> to vector<8x8x8xf32>
    %170 = vector.shape_cast %169 : vector<8x8x8xf32> to vector<64x8xf32>
    %c0_110 = arith.constant 0 : index
    %c56 = arith.constant 56 : index
    %171 = vector.load %arg19[%c0_110, %c56] : memref<64x72xf32, #tpu.memory_space<vmem>>, vector<64x8xf32>
    tpu.vector_store %arg19[%c0_110, %c56], %170 {strides = array<i32>} : memref<64x72xf32, #tpu.memory_space<vmem>>, vector<64x8xf32>,
    %172 = vector.extract_strided_slice %147 {offsets = [2, 2, 0], sizes = [8, 8, 8], strides = [1, 1, 1]} : vector<10x10x8xf32> to vector<8x8x8xf32>
    %173 = vector.shape_cast %172 : vector<8x8x8xf32> to vector<64x8xf32>
    %c0_111 = arith.constant 0 : index
    %c64 = arith.constant 64 : index
    %174 = vector.load %arg19[%c0_111, %c64] : memref<64x72xf32, #tpu.memory_space<vmem>>, vector<64x8xf32>
    tpu.vector_store %arg19[%c0_111, %c64], %173 {strides = array<i32>} : memref<64x72xf32, #tpu.memory_space<vmem>>, vector<64x8xf32>,
    %c0_112 = arith.constant 0 : index
    %c0_113 = arith.constant 0 : index
    %175 = vector.load %arg19[%c0_112, %c0_113] : memref<64x72xf32, #tpu.memory_space<vmem>>, vector<64x72xf32>
    %c0_114 = arith.constant 0 : index
    %c0_115 = arith.constant 0 : index
    %176 = vector.load %arg4[%c0_114, %c0_115] : memref<72x8xf32, #tpu.memory_space<vmem>>, vector<72x8xf32>
    %cst_116 = arith.constant dense<0.000000e+00> : vector<64x8xf32>
    %177 = tpu.matmul %175, %176, %cst_116 {dimension_numbers = #tpu.dot_dimension_numbers<[1], [0], [0], [1], [0, 0, 1, 1], [], []>} : vector<64x72xf32>, vector<72x8xf32>, vector<64x8xf32> -> vector<64x8xf32>
    %c0_117 = arith.constant 0 : index
    %c0_118 = arith.constant 0 : index
    %178 = vector.load %arg5[%c0_117, %c0_118] : memref<1x8xf32, #tpu.memory_space<vmem>>, vector<1x8xf32>
    %179 = vector.broadcast %178 : vector<1x8xf32> to vector<64x8xf32>
    %180 = arith.addf %177, %179 : vector<64x8xf32>
    %181 = vector.shape_cast %180 : vector<64x8xf32> to vector<8x8x8xf32>
    %cst_119 = arith.constant 0.000000e+00 : f32
    %182 = vector.broadcast %cst_119 : f32 to vector<8x8x8xf32>
    %183 = arith.maximumf %181, %182 : vector<8x8x8xf32>
    %c1_120 = arith.constant 1 : index
    %c1_121 = arith.constant 1 : index
    %c0_122 = arith.constant 0 : index
    %184 = vector.load %arg18[%c1_120, %c1_121, %c0_122] : memref<10x10x8xf32, #tpu.memory_space<vmem>>, vector<8x8x8xf32>
    tpu.vector_store %arg18[%c1_120, %c1_121, %c0_122], %183 {strides = array<i32>} : memref<10x10x8xf32, #tpu.memory_space<vmem>>, vector<8x8x8xf32>,
    %c0_123 = arith.constant 0 : index
    %c0_124 = arith.constant 0 : index
    %c0_125 = arith.constant 0 : index
    %185 = vector.load %arg18[%c0_123, %c0_124, %c0_125] : memref<10x10x8xf32, #tpu.memory_space<vmem>>, vector<10x10x8xf32>
    %186 = vector.extract_strided_slice %185 {offsets = [0, 0, 0], sizes = [8, 8, 8], strides = [1, 1, 1]} : vector<10x10x8xf32> to vector<8x8x8xf32>
    %187 = vector.shape_cast %186 : vector<8x8x8xf32> to vector<64x8xf32>
    %c0_126 = arith.constant 0 : index
    %c0_127 = arith.constant 0 : index
    %188 = vector.load %arg19[%c0_126, %c0_127] : memref<64x72xf32, #tpu.memory_space<vmem>>, vector<64x8xf32>
    tpu.vector_store %arg19[%c0_126, %c0_127], %187 {strides = array<i32>} : memref<64x72xf32, #tpu.memory_space<vmem>>, vector<64x8xf32>,
    %189 = vector.extract_strided_slice %185 {offsets = [0, 1, 0], sizes = [8, 8, 8], strides = [1, 1, 1]} : vector<10x10x8xf32> to vector<8x8x8xf32>
    %190 = vector.shape_cast %189 : vector<8x8x8xf32> to vector<64x8xf32>
    %c0_128 = arith.constant 0 : index
    %c8_129 = arith.constant 8 : index
    %191 = vector.load %arg19[%c0_128, %c8_129] : memref<64x72xf32, #tpu.memory_space<vmem>>, vector<64x8xf32>
    tpu.vector_store %arg19[%c0_128, %c8_129], %190 {strides = array<i32>} : memref<64x72xf32, #tpu.memory_space<vmem>>, vector<64x8xf32>,
    %192 = vector.extract_strided_slice %185 {offsets = [0, 2, 0], sizes = [8, 8, 8], strides = [1, 1, 1]} : vector<10x10x8xf32> to vector<8x8x8xf32>
    %193 = vector.shape_cast %192 : vector<8x8x8xf32> to vector<64x8xf32>
    %c0_130 = arith.constant 0 : index
    %c16_131 = arith.constant 16 : index
    %194 = vector.load %arg19[%c0_130, %c16_131] : memref<64x72xf32, #tpu.memory_space<vmem>>, vector<64x8xf32>
    tpu.vector_store %arg19[%c0_130, %c16_131], %193 {strides = array<i32>} : memref<64x72xf32, #tpu.memory_space<vmem>>, vector<64x8xf32>,
    %195 = vector.extract_strided_slice %185 {offsets = [1, 0, 0], sizes = [8, 8, 8], strides = [1, 1, 1]} : vector<10x10x8xf32> to vector<8x8x8xf32>
    %196 = vector.shape_cast %195 : vector<8x8x8xf32> to vector<64x8xf32>
    %c0_132 = arith.constant 0 : index
    %c24_133 = arith.constant 24 : index
    %197 = vector.load %arg19[%c0_132, %c24_133] : memref<64x72xf32, #tpu.memory_space<vmem>>, vector<64x8xf32>
    tpu.vector_store %arg19[%c0_132, %c24_133], %196 {strides = array<i32>} : memref<64x72xf32, #tpu.memory_space<vmem>>, vector<64x8xf32>,
    %198 = vector.extract_strided_slice %185 {offsets = [1, 1, 0], sizes = [8, 8, 8], strides = [1, 1, 1]} : vector<10x10x8xf32> to vector<8x8x8xf32>
    %199 = vector.shape_cast %198 : vector<8x8x8xf32> to vector<64x8xf32>
    %c0_134 = arith.constant 0 : index
    %c32_135 = arith.constant 32 : index
    %200 = vector.load %arg19[%c0_134, %c32_135] : memref<64x72xf32, #tpu.memory_space<vmem>>, vector<64x8xf32>
    tpu.vector_store %arg19[%c0_134, %c32_135], %199 {strides = array<i32>} : memref<64x72xf32, #tpu.memory_space<vmem>>, vector<64x8xf32>,
    %201 = vector.extract_strided_slice %185 {offsets = [1, 2, 0], sizes = [8, 8, 8], strides = [1, 1, 1]} : vector<10x10x8xf32> to vector<8x8x8xf32>
    %202 = vector.shape_cast %201 : vector<8x8x8xf32> to vector<64x8xf32>
    %c0_136 = arith.constant 0 : index
    %c40_137 = arith.constant 40 : index
    %203 = vector.load %arg19[%c0_136, %c40_137] : memref<64x72xf32, #tpu.memory_space<vmem>>, vector<64x8xf32>
    tpu.vector_store %arg19[%c0_136, %c40_137], %202 {strides = array<i32>} : memref<64x72xf32, #tpu.memory_space<vmem>>, vector<64x8xf32>,
    %204 = vector.extract_strided_slice %185 {offsets = [2, 0, 0], sizes = [8, 8, 8], strides = [1, 1, 1]} : vector<10x10x8xf32> to vector<8x8x8xf32>
    %205 = vector.shape_cast %204 : vector<8x8x8xf32> to vector<64x8xf32>
    %c0_138 = arith.constant 0 : index
    %c48_139 = arith.constant 48 : index
    %206 = vector.load %arg19[%c0_138, %c48_139] : memref<64x72xf32, #tpu.memory_space<vmem>>, vector<64x8xf32>
    tpu.vector_store %arg19[%c0_138, %c48_139], %205 {strides = array<i32>} : memref<64x72xf32, #tpu.memory_space<vmem>>, vector<64x8xf32>,
    %207 = vector.extract_strided_slice %185 {offsets = [2, 1, 0], sizes = [8, 8, 8], strides = [1, 1, 1]} : vector<10x10x8xf32> to vector<8x8x8xf32>
    %208 = vector.shape_cast %207 : vector<8x8x8xf32> to vector<64x8xf32>
    %c0_140 = arith.constant 0 : index
    %c56_141 = arith.constant 56 : index
    %209 = vector.load %arg19[%c0_140, %c56_141] : memref<64x72xf32, #tpu.memory_space<vmem>>, vector<64x8xf32>
    tpu.vector_store %arg19[%c0_140, %c56_141], %208 {strides = array<i32>} : memref<64x72xf32, #tpu.memory_space<vmem>>, vector<64x8xf32>,
    %210 = vector.extract_strided_slice %185 {offsets = [2, 2, 0], sizes = [8, 8, 8], strides = [1, 1, 1]} : vector<10x10x8xf32> to vector<8x8x8xf32>
    %211 = vector.shape_cast %210 : vector<8x8x8xf32> to vector<64x8xf32>
    %c0_142 = arith.constant 0 : index
    %c64_143 = arith.constant 64 : index
    %212 = vector.load %arg19[%c0_142, %c64_143] : memref<64x72xf32, #tpu.memory_space<vmem>>, vector<64x8xf32>
    tpu.vector_store %arg19[%c0_142, %c64_143], %211 {strides = array<i32>} : memref<64x72xf32, #tpu.memory_space<vmem>>, vector<64x8xf32>,
    %c0_144 = arith.constant 0 : index
    %c0_145 = arith.constant 0 : index
    %213 = vector.load %arg19[%c0_144, %c0_145] : memref<64x72xf32, #tpu.memory_space<vmem>>, vector<64x72xf32>
    %c0_146 = arith.constant 0 : index
    %c0_147 = arith.constant 0 : index
    %214 = vector.load %arg6[%c0_146, %c0_147] : memref<72x8xf32, #tpu.memory_space<vmem>>, vector<72x8xf32>
    %cst_148 = arith.constant dense<0.000000e+00> : vector<64x8xf32>
    %215 = tpu.matmul %213, %214, %cst_148 {dimension_numbers = #tpu.dot_dimension_numbers<[1], [0], [0], [1], [0, 0, 1, 1], [], []>} : vector<64x72xf32>, vector<72x8xf32>, vector<64x8xf32> -> vector<64x8xf32>
    %c0_149 = arith.constant 0 : index
    %c0_150 = arith.constant 0 : index
    %216 = vector.load %arg7[%c0_149, %c0_150] : memref<1x8xf32, #tpu.memory_space<vmem>>, vector<1x8xf32>
    %217 = vector.broadcast %216 : vector<1x8xf32> to vector<64x8xf32>
    %218 = arith.addf %215, %217 : vector<64x8xf32>
    %219 = vector.shape_cast %218 : vector<64x8xf32> to vector<8x8x8xf32>
    %220 = arith.addf %141, %219 : vector<8x8x8xf32>
    %cst_151 = arith.constant 0.000000e+00 : f32
    %221 = vector.broadcast %cst_151 : f32 to vector<10x10x8xf32>
    %c0_152 = arith.constant 0 : index
    %c0_153 = arith.constant 0 : index
    %c0_154 = arith.constant 0 : index
    %222 = vector.load %arg18[%c0_152, %c0_153, %c0_154] : memref<10x10x8xf32, #tpu.memory_space<vmem>>, vector<10x10x8xf32>
    tpu.vector_store %arg18[%c0_152, %c0_153, %c0_154], %221 {strides = array<i32>} : memref<10x10x8xf32, #tpu.memory_space<vmem>>, vector<10x10x8xf32>,
    %cst_155 = arith.constant 0.000000e+00 : f32
    %223 = vector.broadcast %cst_155 : f32 to vector<8x8x8xf32>
    %224 = arith.maximumf %220, %223 : vector<8x8x8xf32>
    %c1_156 = arith.constant 1 : index
    %c1_157 = arith.constant 1 : index
    %c0_158 = arith.constant 0 : index
    %225 = vector.load %arg18[%c1_156, %c1_157, %c0_158] : memref<10x10x8xf32, #tpu.memory_space<vmem>>, vector<8x8x8xf32>
    tpu.vector_store %arg18[%c1_156, %c1_157, %c0_158], %224 {strides = array<i32>} : memref<10x10x8xf32, #tpu.memory_space<vmem>>, vector<8x8x8xf32>,
    %c0_159 = arith.constant 0 : index
    %c0_160 = arith.constant 0 : index
    %c0_161 = arith.constant 0 : index
    %226 = vector.load %arg18[%c0_159, %c0_160, %c0_161] : memref<10x10x8xf32, #tpu.memory_space<vmem>>, vector<10x10x8xf32>
    %227 = vector.extract_strided_slice %226 {offsets = [0, 0, 0], sizes = [8, 8, 8], strides = [1, 1, 1]} : vector<10x10x8xf32> to vector<8x8x8xf32>
    %228 = vector.shape_cast %227 : vector<8x8x8xf32> to vector<64x8xf32>
    %c0_162 = arith.constant 0 : index
    %c0_163 = arith.constant 0 : index
    %229 = vector.load %arg19[%c0_162, %c0_163] : memref<64x72xf32, #tpu.memory_space<vmem>>, vector<64x8xf32>
    tpu.vector_store %arg19[%c0_162, %c0_163], %228 {strides = array<i32>} : memref<64x72xf32, #tpu.memory_space<vmem>>, vector<64x8xf32>,
    %230 = vector.extract_strided_slice %226 {offsets = [0, 1, 0], sizes = [8, 8, 8], strides = [1, 1, 1]} : vector<10x10x8xf32> to vector<8x8x8xf32>
    %231 = vector.shape_cast %230 : vector<8x8x8xf32> to vector<64x8xf32>
    %c0_164 = arith.constant 0 : index
    %c8_165 = arith.constant 8 : index
    %232 = vector.load %arg19[%c0_164, %c8_165] : memref<64x72xf32, #tpu.memory_space<vmem>>, vector<64x8xf32>
    tpu.vector_store %arg19[%c0_164, %c8_165], %231 {strides = array<i32>} : memref<64x72xf32, #tpu.memory_space<vmem>>, vector<64x8xf32>,
    %233 = vector.extract_strided_slice %226 {offsets = [0, 2, 0], sizes = [8, 8, 8], strides = [1, 1, 1]} : vector<10x10x8xf32> to vector<8x8x8xf32>
    %234 = vector.shape_cast %233 : vector<8x8x8xf32> to vector<64x8xf32>
    %c0_166 = arith.constant 0 : index
    %c16_167 = arith.constant 16 : index
    %235 = vector.load %arg19[%c0_166, %c16_167] : memref<64x72xf32, #tpu.memory_space<vmem>>, vector<64x8xf32>
    tpu.vector_store %arg19[%c0_166, %c16_167], %234 {strides = array<i32>} : memref<64x72xf32, #tpu.memory_space<vmem>>, vector<64x8xf32>,
    %236 = vector.extract_strided_slice %226 {offsets = [1, 0, 0], sizes = [8, 8, 8], strides = [1, 1, 1]} : vector<10x10x8xf32> to vector<8x8x8xf32>
    %237 = vector.shape_cast %236 : vector<8x8x8xf32> to vector<64x8xf32>
    %c0_168 = arith.constant 0 : index
    %c24_169 = arith.constant 24 : index
    %238 = vector.load %arg19[%c0_168, %c24_169] : memref<64x72xf32, #tpu.memory_space<vmem>>, vector<64x8xf32>
    tpu.vector_store %arg19[%c0_168, %c24_169], %237 {strides = array<i32>} : memref<64x72xf32, #tpu.memory_space<vmem>>, vector<64x8xf32>,
    %239 = vector.extract_strided_slice %226 {offsets = [1, 1, 0], sizes = [8, 8, 8], strides = [1, 1, 1]} : vector<10x10x8xf32> to vector<8x8x8xf32>
    %240 = vector.shape_cast %239 : vector<8x8x8xf32> to vector<64x8xf32>
    %c0_170 = arith.constant 0 : index
    %c32_171 = arith.constant 32 : index
    %241 = vector.load %arg19[%c0_170, %c32_171] : memref<64x72xf32, #tpu.memory_space<vmem>>, vector<64x8xf32>
    tpu.vector_store %arg19[%c0_170, %c32_171], %240 {strides = array<i32>} : memref<64x72xf32, #tpu.memory_space<vmem>>, vector<64x8xf32>,
    %242 = vector.extract_strided_slice %226 {offsets = [1, 2, 0], sizes = [8, 8, 8], strides = [1, 1, 1]} : vector<10x10x8xf32> to vector<8x8x8xf32>
    %243 = vector.shape_cast %242 : vector<8x8x8xf32> to vector<64x8xf32>
    %c0_172 = arith.constant 0 : index
    %c40_173 = arith.constant 40 : index
    %244 = vector.load %arg19[%c0_172, %c40_173] : memref<64x72xf32, #tpu.memory_space<vmem>>, vector<64x8xf32>
    tpu.vector_store %arg19[%c0_172, %c40_173], %243 {strides = array<i32>} : memref<64x72xf32, #tpu.memory_space<vmem>>, vector<64x8xf32>,
    %245 = vector.extract_strided_slice %226 {offsets = [2, 0, 0], sizes = [8, 8, 8], strides = [1, 1, 1]} : vector<10x10x8xf32> to vector<8x8x8xf32>
    %246 = vector.shape_cast %245 : vector<8x8x8xf32> to vector<64x8xf32>
    %c0_174 = arith.constant 0 : index
    %c48_175 = arith.constant 48 : index
    %247 = vector.load %arg19[%c0_174, %c48_175] : memref<64x72xf32, #tpu.memory_space<vmem>>, vector<64x8xf32>
    tpu.vector_store %arg19[%c0_174, %c48_175], %246 {strides = array<i32>} : memref<64x72xf32, #tpu.memory_space<vmem>>, vector<64x8xf32>,
    %248 = vector.extract_strided_slice %226 {offsets = [2, 1, 0], sizes = [8, 8, 8], strides = [1, 1, 1]} : vector<10x10x8xf32> to vector<8x8x8xf32>
    %249 = vector.shape_cast %248 : vector<8x8x8xf32> to vector<64x8xf32>
    %c0_176 = arith.constant 0 : index
    %c56_177 = arith.constant 56 : index
    %250 = vector.load %arg19[%c0_176, %c56_177] : memref<64x72xf32, #tpu.memory_space<vmem>>, vector<64x8xf32>
    tpu.vector_store %arg19[%c0_176, %c56_177], %249 {strides = array<i32>} : memref<64x72xf32, #tpu.memory_space<vmem>>, vector<64x8xf32>,
    %251 = vector.extract_strided_slice %226 {offsets = [2, 2, 0], sizes = [8, 8, 8], strides = [1, 1, 1]} : vector<10x10x8xf32> to vector<8x8x8xf32>
    %252 = vector.shape_cast %251 : vector<8x8x8xf32> to vector<64x8xf32>
    %c0_178 = arith.constant 0 : index
    %c64_179 = arith.constant 64 : index
    %253 = vector.load %arg19[%c0_178, %c64_179] : memref<64x72xf32, #tpu.memory_space<vmem>>, vector<64x8xf32>
    tpu.vector_store %arg19[%c0_178, %c64_179], %252 {strides = array<i32>} : memref<64x72xf32, #tpu.memory_space<vmem>>, vector<64x8xf32>,
    %c0_180 = arith.constant 0 : index
    %c0_181 = arith.constant 0 : index
    %254 = vector.load %arg19[%c0_180, %c0_181] : memref<64x72xf32, #tpu.memory_space<vmem>>, vector<64x72xf32>
    %c0_182 = arith.constant 0 : index
    %c0_183 = arith.constant 0 : index
    %255 = vector.load %arg8[%c0_182, %c0_183] : memref<72x8xf32, #tpu.memory_space<vmem>>, vector<72x8xf32>
    %cst_184 = arith.constant dense<0.000000e+00> : vector<64x8xf32>
    %256 = tpu.matmul %254, %255, %cst_184 {dimension_numbers = #tpu.dot_dimension_numbers<[1], [0], [0], [1], [0, 0, 1, 1], [], []>} : vector<64x72xf32>, vector<72x8xf32>, vector<64x8xf32> -> vector<64x8xf32>
    %c0_185 = arith.constant 0 : index
    %c0_186 = arith.constant 0 : index
    %257 = vector.load %arg9[%c0_185, %c0_186] : memref<1x8xf32, #tpu.memory_space<vmem>>, vector<1x8xf32>
    %258 = vector.broadcast %257 : vector<1x8xf32> to vector<64x8xf32>
    %259 = arith.addf %256, %258 : vector<64x8xf32>
    %260 = vector.shape_cast %259 : vector<64x8xf32> to vector<8x8x8xf32>
    %cst_187 = arith.constant 0.000000e+00 : f32
    %261 = vector.broadcast %cst_187 : f32 to vector<8x8x8xf32>
    %262 = arith.maximumf %260, %261 : vector<8x8x8xf32>
    %c1_188 = arith.constant 1 : index
    %c1_189 = arith.constant 1 : index
    %c0_190 = arith.constant 0 : index
    %263 = vector.load %arg18[%c1_188, %c1_189, %c0_190] : memref<10x10x8xf32, #tpu.memory_space<vmem>>, vector<8x8x8xf32>
    tpu.vector_store %arg18[%c1_188, %c1_189, %c0_190], %262 {strides = array<i32>} : memref<10x10x8xf32, #tpu.memory_space<vmem>>, vector<8x8x8xf32>,
    %c0_191 = arith.constant 0 : index
    %c0_192 = arith.constant 0 : index
    %c0_193 = arith.constant 0 : index
    %264 = vector.load %arg18[%c0_191, %c0_192, %c0_193] : memref<10x10x8xf32, #tpu.memory_space<vmem>>, vector<10x10x8xf32>
    %265 = vector.extract_strided_slice %264 {offsets = [0, 0, 0], sizes = [8, 8, 8], strides = [1, 1, 1]} : vector<10x10x8xf32> to vector<8x8x8xf32>
    %266 = vector.shape_cast %265 : vector<8x8x8xf32> to vector<64x8xf32>
    %c0_194 = arith.constant 0 : index
    %c0_195 = arith.constant 0 : index
    %267 = vector.load %arg19[%c0_194, %c0_195] : memref<64x72xf32, #tpu.memory_space<vmem>>, vector<64x8xf32>
    tpu.vector_store %arg19[%c0_194, %c0_195], %266 {strides = array<i32>} : memref<64x72xf32, #tpu.memory_space<vmem>>, vector<64x8xf32>,
    %268 = vector.extract_strided_slice %264 {offsets = [0, 1, 0], sizes = [8, 8, 8], strides = [1, 1, 1]} : vector<10x10x8xf32> to vector<8x8x8xf32>
    %269 = vector.shape_cast %268 : vector<8x8x8xf32> to vector<64x8xf32>
    %c0_196 = arith.constant 0 : index
    %c8_197 = arith.constant 8 : index
    %270 = vector.load %arg19[%c0_196, %c8_197] : memref<64x72xf32, #tpu.memory_space<vmem>>, vector<64x8xf32>
    tpu.vector_store %arg19[%c0_196, %c8_197], %269 {strides = array<i32>} : memref<64x72xf32, #tpu.memory_space<vmem>>, vector<64x8xf32>,
    %271 = vector.extract_strided_slice %264 {offsets = [0, 2, 0], sizes = [8, 8, 8], strides = [1, 1, 1]} : vector<10x10x8xf32> to vector<8x8x8xf32>
    %272 = vector.shape_cast %271 : vector<8x8x8xf32> to vector<64x8xf32>
    %c0_198 = arith.constant 0 : index
    %c16_199 = arith.constant 16 : index
    %273 = vector.load %arg19[%c0_198, %c16_199] : memref<64x72xf32, #tpu.memory_space<vmem>>, vector<64x8xf32>
    tpu.vector_store %arg19[%c0_198, %c16_199], %272 {strides = array<i32>} : memref<64x72xf32, #tpu.memory_space<vmem>>, vector<64x8xf32>,
    %274 = vector.extract_strided_slice %264 {offsets = [1, 0, 0], sizes = [8, 8, 8], strides = [1, 1, 1]} : vector<10x10x8xf32> to vector<8x8x8xf32>
    %275 = vector.shape_cast %274 : vector<8x8x8xf32> to vector<64x8xf32>
    %c0_200 = arith.constant 0 : index
    %c24_201 = arith.constant 24 : index
    %276 = vector.load %arg19[%c0_200, %c24_201] : memref<64x72xf32, #tpu.memory_space<vmem>>, vector<64x8xf32>
    tpu.vector_store %arg19[%c0_200, %c24_201], %275 {strides = array<i32>} : memref<64x72xf32, #tpu.memory_space<vmem>>, vector<64x8xf32>,
    %277 = vector.extract_strided_slice %264 {offsets = [1, 1, 0], sizes = [8, 8, 8], strides = [1, 1, 1]} : vector<10x10x8xf32> to vector<8x8x8xf32>
    %278 = vector.shape_cast %277 : vector<8x8x8xf32> to vector<64x8xf32>
    %c0_202 = arith.constant 0 : index
    %c32_203 = arith.constant 32 : index
    %279 = vector.load %arg19[%c0_202, %c32_203] : memref<64x72xf32, #tpu.memory_space<vmem>>, vector<64x8xf32>
    tpu.vector_store %arg19[%c0_202, %c32_203], %278 {strides = array<i32>} : memref<64x72xf32, #tpu.memory_space<vmem>>, vector<64x8xf32>,
    %280 = vector.extract_strided_slice %264 {offsets = [1, 2, 0], sizes = [8, 8, 8], strides = [1, 1, 1]} : vector<10x10x8xf32> to vector<8x8x8xf32>
    %281 = vector.shape_cast %280 : vector<8x8x8xf32> to vector<64x8xf32>
    %c0_204 = arith.constant 0 : index
    %c40_205 = arith.constant 40 : index
    %282 = vector.load %arg19[%c0_204, %c40_205] : memref<64x72xf32, #tpu.memory_space<vmem>>, vector<64x8xf32>
    tpu.vector_store %arg19[%c0_204, %c40_205], %281 {strides = array<i32>} : memref<64x72xf32, #tpu.memory_space<vmem>>, vector<64x8xf32>,
    %283 = vector.extract_strided_slice %264 {offsets = [2, 0, 0], sizes = [8, 8, 8], strides = [1, 1, 1]} : vector<10x10x8xf32> to vector<8x8x8xf32>
    %284 = vector.shape_cast %283 : vector<8x8x8xf32> to vector<64x8xf32>
    %c0_206 = arith.constant 0 : index
    %c48_207 = arith.constant 48 : index
    %285 = vector.load %arg19[%c0_206, %c48_207] : memref<64x72xf32, #tpu.memory_space<vmem>>, vector<64x8xf32>
    tpu.vector_store %arg19[%c0_206, %c48_207], %284 {strides = array<i32>} : memref<64x72xf32, #tpu.memory_space<vmem>>, vector<64x8xf32>,
    %286 = vector.extract_strided_slice %264 {offsets = [2, 1, 0], sizes = [8, 8, 8], strides = [1, 1, 1]} : vector<10x10x8xf32> to vector<8x8x8xf32>
    %287 = vector.shape_cast %286 : vector<8x8x8xf32> to vector<64x8xf32>
    %c0_208 = arith.constant 0 : index
    %c56_209 = arith.constant 56 : index
    %288 = vector.load %arg19[%c0_208, %c56_209] : memref<64x72xf32, #tpu.memory_space<vmem>>, vector<64x8xf32>
    tpu.vector_store %arg19[%c0_208, %c56_209], %287 {strides = array<i32>} : memref<64x72xf32, #tpu.memory_space<vmem>>, vector<64x8xf32>,
    %289 = vector.extract_strided_slice %264 {offsets = [2, 2, 0], sizes = [8, 8, 8], strides = [1, 1, 1]} : vector<10x10x8xf32> to vector<8x8x8xf32>
    %290 = vector.shape_cast %289 : vector<8x8x8xf32> to vector<64x8xf32>
    %c0_210 = arith.constant 0 : index
    %c64_211 = arith.constant 64 : index
    %291 = vector.load %arg19[%c0_210, %c64_211] : memref<64x72xf32, #tpu.memory_space<vmem>>, vector<64x8xf32>
    tpu.vector_store %arg19[%c0_210, %c64_211], %290 {strides = array<i32>} : memref<64x72xf32, #tpu.memory_space<vmem>>, vector<64x8xf32>,
    %c0_212 = arith.constant 0 : index
    %c0_213 = arith.constant 0 : index
    %292 = vector.load %arg19[%c0_212, %c0_213] : memref<64x72xf32, #tpu.memory_space<vmem>>, vector<64x72xf32>
    %c0_214 = arith.constant 0 : index
    %c0_215 = arith.constant 0 : index
    %293 = vector.load %arg10[%c0_214, %c0_215] : memref<72x8xf32, #tpu.memory_space<vmem>>, vector<72x8xf32>
    %cst_216 = arith.constant dense<0.000000e+00> : vector<64x8xf32>
    %294 = tpu.matmul %292, %293, %cst_216 {dimension_numbers = #tpu.dot_dimension_numbers<[1], [0], [0], [1], [0, 0, 1, 1], [], []>} : vector<64x72xf32>, vector<72x8xf32>, vector<64x8xf32> -> vector<64x8xf32>
    %c0_217 = arith.constant 0 : index
    %c0_218 = arith.constant 0 : index
    %295 = vector.load %arg11[%c0_217, %c0_218] : memref<1x8xf32, #tpu.memory_space<vmem>>, vector<1x8xf32>
    %296 = vector.broadcast %295 : vector<1x8xf32> to vector<64x8xf32>
    %297 = arith.addf %294, %296 : vector<64x8xf32>
    %298 = vector.shape_cast %297 : vector<64x8xf32> to vector<8x8x8xf32>
    %299 = arith.addf %220, %298 : vector<8x8x8xf32>
    %c0_219 = arith.constant 0 : index
    %c0_220 = arith.constant 0 : index
    %c0_221 = arith.constant 0 : index
    %c0_222 = arith.constant 0 : index
    %300 = vector.load %arg12[%c0_219, %c0_220, %c0_221, %c0_222] : memref<1x8x8x8xf32, #tpu.memory_space<vmem>>, vector<1x8x8x8xf32>
    %301 = vector.shape_cast %300 : vector<1x8x8x8xf32> to vector<8x8x8xf32>
    %302 = vector.shape_cast %299 : vector<8x8x8xf32> to vector<1x8x8x8xf32>
    tpu.vector_store %arg12[%c0_219, %c0_220, %c0_221, %c0_222], %302 {strides = array<i32>} : memref<1x8x8x8xf32, #tpu.memory_space<vmem>>, vector<1x8x8x8xf32>,
    return
  }
  func.func @transform_0(%arg0: i32) -> (i32, i32, i32, i32) {
    %c0_i32 = arith.constant 0 : i32
    %c0_i32_0 = arith.constant 0 : i32
    %c0_i32_1 = arith.constant 0 : i32
    %c0_i32_2 = arith.constant 0 : i32
    return %arg0, %c0_i32, %c0_i32_0, %c0_i32_1 : i32, i32, i32, i32
  }
  func.func @transform_1(%arg0: i32) -> (i32, i32) {
    %c0_i32 = arith.constant 0 : i32
    %c0_i32_0 = arith.constant 0 : i32
    %c0_i32_1 = arith.constant 0 : i32
    return %c0_i32, %c0_i32_0 : i32, i32
  }
  func.func @transform_2(%arg0: i32) -> (i32, i32) {
    %c0_i32 = arith.constant 0 : i32
    %c0_i32_0 = arith.constant 0 : i32
    %c0_i32_1 = arith.constant 0 : i32
    return %c0_i32, %c0_i32_0 : i32, i32
  }
  func.func @transform_3(%arg0: i32) -> (i32, i32) {
    %c0_i32 = arith.constant 0 : i32
    %c0_i32_0 = arith.constant 0 : i32
    %c0_i32_1 = arith.constant 0 : i32
    return %c0_i32, %c0_i32_0 : i32, i32
  }
  func.func @transform_4(%arg0: i32) -> (i32, i32) {
    %c0_i32 = arith.constant 0 : i32
    %c0_i32_0 = arith.constant 0 : i32
    %c0_i32_1 = arith.constant 0 : i32
    return %c0_i32, %c0_i32_0 : i32, i32
  }
  func.func @transform_5(%arg0: i32) -> (i32, i32) {
    %c0_i32 = arith.constant 0 : i32
    %c0_i32_0 = arith.constant 0 : i32
    %c0_i32_1 = arith.constant 0 : i32
    return %c0_i32, %c0_i32_0 : i32, i32
  }
  func.func @transform_6(%arg0: i32) -> (i32, i32) {
    %c0_i32 = arith.constant 0 : i32
    %c0_i32_0 = arith.constant 0 : i32
    %c0_i32_1 = arith.constant 0 : i32
    return %c0_i32, %c0_i32_0 : i32, i32
  }
  func.func @transform_7(%arg0: i32) -> (i32, i32) {
    %c0_i32 = arith.constant 0 : i32
    %c0_i32_0 = arith.constant 0 : i32
    %c0_i32_1 = arith.constant 0 : i32
    return %c0_i32, %c0_i32_0 : i32, i32
  }
  func.func @transform_8(%arg0: i32) -> (i32, i32) {
    %c0_i32 = arith.constant 0 : i32
    %c0_i32_0 = arith.constant 0 : i32
    %c0_i32_1 = arith.constant 0 : i32
    return %c0_i32, %c0_i32_0 : i32, i32
  }
  func.func @transform_9(%arg0: i32) -> (i32, i32) {
    %c0_i32 = arith.constant 0 : i32
    %c0_i32_0 = arith.constant 0 : i32
    %c0_i32_1 = arith.constant 0 : i32
    return %c0_i32, %c0_i32_0 : i32, i32
  }
  func.func @transform_10(%arg0: i32) -> (i32, i32) {
    %c0_i32 = arith.constant 0 : i32
    %c0_i32_0 = arith.constant 0 : i32
    %c0_i32_1 = arith.constant 0 : i32
    return %c0_i32, %c0_i32_0 : i32, i32
  }
  func.func @transform_11(%arg0: i32) -> (i32, i32, i32, i32) {
    %c0_i32 = arith.constant 0 : i32
    %c0_i32_0 = arith.constant 0 : i32
    %c0_i32_1 = arith.constant 0 : i32
    %c0_i32_2 = arith.constant 0 : i32
    return %arg0, %c0_i32, %c0_i32_0, %c0_i32_1 : i32, i32, i32, i32
  }
}

</mosaic_0001>

<llo_original>
// kernel: impala_block_pallas.1
$region0: #{impala_block_pallas.1}
  #allocation0 [shape = 'u32[]', space=smem, size = 0x4, offset = 0x4, fixed_abs, tag = 'smem constant byte address 0x4 - core index']
  #allocation1 [shape = 'u32[144,128]{1,0:T(1,128)}', space=vmem, size = 0x12000, scoped, tag = 'internal scratch']
  #allocation2 [shape = 'f32[18,18,4]{2,1,0:T(8,128)}', space=vmem, size = 0x36000, scoped, tag = 'scratch operand']
  #allocation3 [shape = 'f32[256,36]{1,0:T(8,128)}', space=vmem, size = 0x20000, scoped, tag = 'scratch operand']
  #allocation4 [shape = 'f32[18,18,8]{2,1,0:T(8,128)}', space=vmem, size = 0x36000, scoped, tag = 'scratch operand']
  #allocation5 [shape = 'f32[8,18,8]{2,1,0:T(8,128)}', space=vmem, size = 0x18000, scoped, tag = 'scratch operand']
  #allocation6 [shape = 'f32[8,8,8]{2,1,0:T(8,128)}', space=vmem, size = 0x8000, scoped, tag = 'scratch operand']
  #allocation7 [shape = 'f32[10,10,8]{2,1,0:T(8,128)}', space=vmem, size = 0x14000, scoped, tag = 'scratch operand']
  #allocation8 [shape = 'f32[64,72]{1,0:T(8,128)}', space=vmem, size = 0x8000, scoped, tag = 'scratch operand']
  %s0 = inlined_call_operand.vmem [shape: f32[2,16,16,4], index: 0, kind: input, shape index: {}]
  %s1 = inlined_call_operand.vmem [shape: f32[36,8], index: 1, kind: input, shape index: {}]
  %s2 = inlined_call_operand.vmem [shape: f32[1,8], index: 2, kind: input, shape index: {}]
  %s3 = inlined_call_operand.vmem [shape: f32[72,8], index: 3, kind: input, shape index: {}]
  %s4 = inlined_call_operand.vmem [shape: f32[1,8], index: 4, kind: input, shape index: {}]
  %s5 = inlined_call_operand.vmem [shape: f32[72,8], index: 5, kind: input, shape index: {}]
  %s6 = inlined_call_operand.vmem [shape: f32[1,8], index: 6, kind: input, shape index: {}]
  %s7 = inlined_call_operand.vmem [shape: f32[72,8], index: 7, kind: input, shape index: {}]
  %s8 = inlined_call_operand.vmem [shape: f32[1,8], index: 8, kind: input, shape index: {}]
  %s9 = inlined_call_operand.vmem [shape: f32[72,8], index: 9, kind: input, shape index: {}]
  %s10 = inlined_call_operand.vmem [shape: f32[1,8], index: 10, kind: input, shape index: {}]
  %s11 = inlined_call_operand.vmem [shape: f32[2,8,8,8], index: 11, kind: output, shape index: {}]
  %s12 = sld [smem:[#allocation0]]
  $region77: #{impala_block_pallas.1} parent=0
    _
  %s14 = ssub.s32 1, %s12
  %s15 = scalar_select 0, %s14, %s12
  loop: start=0, step=1, limit=4
  $region2: #{impala_block_pallas.1} parent=0 // loop_pre_header
    _
  $region3: #{impala_block_pallas.1} parent=0 // loop_header
    %s17 = sphi 0, %s21
    %p18 = scmp.ge.s32.totalorder %s17, 4
    %s27 = sphi 0, %s29
    %s30 = sphi 0, %s27
    %s31 = sphi 0, %s30
    %s47 = sphi 0, %s31
    %s51 = sphi 0, %s51
    %s53 = sphi 0, %s51
    %s54 = sphi 0, %s53
    %s68 = sphi 0, %s54
    %s72 = sphi 0, %s72
    %s74 = sphi 0, %s72
    %s75 = sphi 0, %s74
    %s89 = sphi 0, %s75
    %s93 = sphi 0, %s93
    %s95 = sphi 0, %s93
    %s96 = sphi 0, %s95
    %s110 = sphi 0, %s96
    %s114 = sphi 0, %s114
    %s116 = sphi 0, %s114
    %s117 = sphi 0, %s116
    %s131 = sphi 0, %s117
    %s135 = sphi 0, %s135
    %s137 = sphi 0, %s135
    %s138 = sphi 0, %s137
    %s152 = sphi 0, %s138
    %s156 = sphi 0, %s156
    %s158 = sphi 0, %s156
    %s159 = sphi 0, %s158
    %s173 = sphi 0, %s159
    %s177 = sphi 0, %s177
    %s179 = sphi 0, %s177
    %s180 = sphi 0, %s179
    %s194 = sphi 0, %s180
    %s198 = sphi 0, %s198
    %s200 = sphi 0, %s198
    %s201 = sphi 0, %s200
    %s215 = sphi 0, %s201
    %s219 = sphi 0, %s219
    %s221 = sphi 0, %s219
    %s222 = sphi 0, %s221
    %s236 = sphi 0, %s222
    %s240 = sphi 0, %s240
    %s242 = sphi 0, %s240
    %s243 = sphi 0, %s242
    %s257 = sphi 0, %s243
    %s263 = sphi 0, %s265
    %s266 = sphi 0, %s263
    %s267 = sphi 0, %s266
    %s283 = sphi 0, %s267
  $region4: #{impala_block_pallas.1} parent=0 // loop_header_branch
    %20 = sbr.rel (%p18) target = $region8
  $region5: #{impala_block_pallas.1} parent=0 // loop_body
    %s22 = ssub.s32 %s17, 1
    %s23 = ssub.s32 %s17, 2
    %s24 = sadd.s32 %s17, 1
    %s25 = ssub.s32 %s17, %s24
    %p26 = scmp.eq.s32.totalorder %s25, 0
    %s28 = sadd.s32 %s27, 1
    %s29 = scalar_select %p26, %s27, %s28
    %p32 = pneg %p26
    %p33 = scmp.eq.s32.totalorder %s17, 1
    %p34 = por %p32, %p33
    %p35 = scmp.ne.s32.totalorder %s27, %s30
    %p36 = scmp.eq.s32.totalorder %s17, 0
    %p37 = por %p35, %p36
    %p38 = scmp.ne.s32.totalorder %s27, %s30
    %p39 = scmp.eq.s32.totalorder %s22, 1
    %p40 = por %p38, %p39
    %p41 = scmp.ne.s32.totalorder %s30, %s31
    %p42 = scmp.eq.s32.totalorder %s22, 0
    %p43 = por %p41, %p42
    %p44 = scmp.ne.s32.totalorder %s30, %s31
    %p45 = scmp.eq.s32.totalorder %s23, 1
    %p46 = por %p44, %p45
    %p48 = scmp.ne.s32.totalorder %s31, %s47
    %p49 = scmp.eq.s32.totalorder %s23, 0
    %p50 = por %p48, %p49
    %s52 = sadd.s32 %s51, 1
    %p55 = scmp.eq.s32.totalorder %s17, 1
    %p56 = scmp.ne.s32.totalorder %s51, %s53
    %p57 = scmp.eq.s32.totalorder %s17, 0
    %p58 = por %p56, %p57
    %p59 = scmp.ne.s32.totalorder %s51, %s53
    %p60 = scmp.eq.s32.totalorder %s22, 1
    %p61 = por %p59, %p60
    %p62 = scmp.ne.s32.totalorder %s53, %s54
    %p63 = scmp.eq.s32.totalorder %s22, 0
    %p64 = por %p62, %p63
    %p65 = scmp.ne.s32.totalorder %s53, %s54
    %p66 = scmp.eq.s32.totalorder %s23, 1
    %p67 = por %p65, %p66
    %p69 = scmp.ne.s32.totalorder %s54, %s68
    %p70 = scmp.eq.s32.totalorder %s23, 0
    %p71 = por %p69, %p70
    %s73 = sadd.s32 %s72, 1
    %p76 = scmp.eq.s32.totalorder %s17, 1
    %p77 = scmp.ne.s32.totalorder %s72, %s74
    %p78 = scmp.eq.s32.totalorder %s17, 0
    %p79 = por %p77, %p78
    %p80 = scmp.ne.s32.totalorder %s72, %s74
    %p81 = scmp.eq.s32.totalorder %s22, 1
    %p82 = por %p80, %p81
    %p83 = scmp.ne.s32.totalorder %s74, %s75
    %p84 = scmp.eq.s32.totalorder %s22, 0
    %p85 = por %p83, %p84
    %p86 = scmp.ne.s32.totalorder %s74, %s75
    %p87 = scmp.eq.s32.totalorder %s23, 1
    %p88 = por %p86, %p87
    %p90 = scmp.ne.s32.totalorder %s75, %s89
    %p91 = scmp.eq.s32.totalorder %s23, 0
    %p92 = por %p90, %p91
    %s94 = sadd.s32 %s93, 1
    %p97 = scmp.eq.s32.totalorder %s17, 1
    %p98 = scmp.ne.s32.totalorder %s93, %s95
    %p99 = scmp.eq.s32.totalorder %s17, 0
    %p100 = por %p98, %p99
    %p101 = scmp.ne.s32.totalorder %s93, %s95
    %p102 = scmp.eq.s32.totalorder %s22, 1
    %p103 = por %p101, %p102
    %p104 = scmp.ne.s32.totalorder %s95, %s96
    %p105 = scmp.eq.s32.totalorder %s22, 0
    %p106 = por %p104, %p105
    %p107 = scmp.ne.s32.totalorder %s95, %s96
    %p108 = scmp.eq.s32.totalorder %s23, 1
    %p109 = por %p107, %p108
    %p111 = scmp.ne.s32.totalorder %s96, %s110
    %p112 = scmp.eq.s32.totalorder %s23, 0
    %p113 = por %p111, %p112
    %s115 = sadd.s32 %s114, 1
    %p118 = scmp.eq.s32.totalorder %s17, 1
    %p119 = scmp.ne.s32.totalorder %s114, %s116
    %p120 = scmp.eq.s32.totalorder %s17, 0
    %p121 = por %p119, %p120
    %p122 = scmp.ne.s32.totalorder %s114, %s116
    %p123 = scmp.eq.s32.totalorder %s22, 1
    %p124 = por %p122, %p123
    %p125 = scmp.ne.s32.totalorder %s116, %s117
    %p126 = scmp.eq.s32.totalorder %s22, 0
    %p127 = por %p125, %p126
    %p128 = scmp.ne.s32.totalorder %s116, %s117
    %p129 = scmp.eq.s32.totalorder %s23, 1
    %p130 = por %p128, %p129
    %p132 = scmp.ne.s32.totalorder %s117, %s131
    %p133 = scmp.eq.s32.totalorder %s23, 0
    %p134 = por %p132, %p133
    %s136 = sadd.s32 %s135, 1
    %p139 = scmp.eq.s32.totalorder %s17, 1
    %p140 = scmp.ne.s32.totalorder %s135, %s137
    %p141 = scmp.eq.s32.totalorder %s17, 0
    %p142 = por %p140, %p141
    %p143 = scmp.ne.s32.totalorder %s135, %s137
    %p144 = scmp.eq.s32.totalorder %s22, 1
    %p145 = por %p143, %p144
    %p146 = scmp.ne.s32.totalorder %s137, %s138
    %p147 = scmp.eq.s32.totalorder %s22, 0
    %p148 = por %p146, %p147
    %p149 = scmp.ne.s32.totalorder %s137, %s138
    %p150 = scmp.eq.s32.totalorder %s23, 1
    %p151 = por %p149, %p150
    %p153 = scmp.ne.s32.totalorder %s138, %s152
    %p154 = scmp.eq.s32.totalorder %s23, 0
    %p155 = por %p153, %p154
    %s157 = sadd.s32 %s156, 1
    %p160 = scmp.eq.s32.totalorder %s17, 1
    %p161 = scmp.ne.s32.totalorder %s156, %s158
    %p162 = scmp.eq.s32.totalorder %s17, 0
    %p163 = por %p161, %p162
    %p164 = scmp.ne.s32.totalorder %s156, %s158
    %p165 = scmp.eq.s32.totalorder %s22, 1
    %p166 = por %p164, %p165
    %p167 = scmp.ne.s32.totalorder %s158, %s159
    %p168 = scmp.eq.s32.totalorder %s22, 0
    %p169 = por %p167, %p168
    %p170 = scmp.ne.s32.totalorder %s158, %s159
    %p171 = scmp.eq.s32.totalorder %s23, 1
    %p172 = por %p170, %p171
    %p174 = scmp.ne.s32.totalorder %s159, %s173
    %p175 = scmp.eq.s32.totalorder %s23, 0
    %p176 = por %p174, %p175
    %s178 = sadd.s32 %s177, 1
    %p181 = scmp.eq.s32.totalorder %s17, 1
    %p182 = scmp.ne.s32.totalorder %s177, %s179
    %p183 = scmp.eq.s32.totalorder %s17, 0
    %p184 = por %p182, %p183
    %p185 = scmp.ne.s32.totalorder %s177, %s179
    %p186 = scmp.eq.s32.totalorder %s22, 1
    %p187 = por %p185, %p186
    %p188 = scmp.ne.s32.totalorder %s179, %s180
    %p189 = scmp.eq.s32.totalorder %s22, 0
    %p190 = por %p188, %p189
    %p191 = scmp.ne.s32.totalorder %s179, %s180
    %p192 = scmp.eq.s32.totalorder %s23, 1
    %p193 = por %p191, %p192
    %p195 = scmp.ne.s32.totalorder %s180, %s194
    %p196 = scmp.eq.s32.totalorder %s23, 0
    %p197 = por %p195, %p196
    %s199 = sadd.s32 %s198, 1
    %p202 = scmp.eq.s32.totalorder %s17, 1
    %p203 = scmp.ne.s32.totalorder %s198, %s200
    %p204 = scmp.eq.s32.totalorder %s17, 0
    %p205 = por %p203, %p204
    %p206 = scmp.ne.s32.totalorder %s198, %s200
    %p207 = scmp.eq.s32.totalorder %s22, 1
    %p208 = por %p206, %p207
    %p209 = scmp.ne.s32.totalorder %s200, %s201
    %p210 = scmp.eq.s32.totalorder %s22, 0
    %p211 = por %p209, %p210
    %p212 = scmp.ne.s32.totalorder %s200, %s201
    %p213 = scmp.eq.s32.totalorder %s23, 1
    %p214 = por %p212, %p213
    %p216 = scmp.ne.s32.totalorder %s201, %s215
    %p217 = scmp.eq.s32.totalorder %s23, 0
    %p218 = por %p216, %p217
    %s220 = sadd.s32 %s219, 1
    %p223 = scmp.eq.s32.totalorder %s17, 1
    %p224 = scmp.ne.s32.totalorder %s219, %s221
    %p225 = scmp.eq.s32.totalorder %s17, 0
    %p226 = por %p224, %p225
    %p227 = scmp.ne.s32.totalorder %s219, %s221
    %p228 = scmp.eq.s32.totalorder %s22, 1
    %p229 = por %p227, %p228
    %p230 = scmp.ne.s32.totalorder %s221, %s222
    %p231 = scmp.eq.s32.totalorder %s22, 0
    %p232 = por %p230, %p231
    %p233 = scmp.ne.s32.totalorder %s221, %s222
    %p234 = scmp.eq.s32.totalorder %s23, 1
    %p235 = por %p233, %p234
    %p237 = scmp.ne.s32.totalorder %s222, %s236
    %p238 = scmp.eq.s32.totalorder %s23, 0
    %p239 = por %p237, %p238
    %s241 = sadd.s32 %s240, 1
    %p244 = scmp.eq.s32.totalorder %s17, 1
    %p245 = scmp.ne.s32.totalorder %s240, %s242
    %p246 = scmp.eq.s32.totalorder %s17, 0
    %p247 = por %p245, %p246
    %p248 = scmp.ne.s32.totalorder %s240, %s242
    %p249 = scmp.eq.s32.totalorder %s22, 1
    %p250 = por %p248, %p249
    %p251 = scmp.ne.s32.totalorder %s242, %s243
    %p252 = scmp.eq.s32.totalorder %s22, 0
    %p253 = por %p251, %p252
    %p254 = scmp.ne.s32.totalorder %s242, %s243
    %p255 = scmp.eq.s32.totalorder %s23, 1
    %p256 = por %p254, %p255
    %p258 = scmp.ne.s32.totalorder %s243, %s257
    %p259 = scmp.eq.s32.totalorder %s23, 0
    %p260 = por %p258, %p259
    %s261 = ssub.s32 %s17, %s24
    %p262 = scmp.eq.s32.totalorder %s261, 0
    %s264 = sadd.s32 %s263, 1
    %s265 = scalar_select %p262, %s263, %s264
    %p268 = pneg %p262
    %p269 = scmp.eq.s32.totalorder %s17, 1
    %p270 = por %p268, %p269
    %p271 = scmp.ne.s32.totalorder %s263, %s266
    %p272 = scmp.eq.s32.totalorder %s17, 0
    %p273 = por %p271, %p272
    %p274 = scmp.ne.s32.totalorder %s263, %s266
    %p275 = scmp.eq.s32.totalorder %s22, 1
    %p276 = por %p274, %p275
    %p277 = scmp.ne.s32.totalorder %s266, %s267
    %p278 = scmp.eq.s32.totalorder %s22, 0
    %p279 = por %p277, %p278
    %p280 = scmp.ne.s32.totalorder %s266, %s267
    %p281 = scmp.eq.s32.totalorder %s23, 1
    %p282 = por %p280, %p281
    %p284 = scmp.ne.s32.totalorder %s267, %s283
    %p285 = scmp.eq.s32.totalorder %s23, 0
    %p286 = por %p284, %p285
    %p287 = scmp.le.s32.totalorder 1, %s17
    %p288 = scmp.lt.s32.totalorder %s17, 3
    %p289 = pnand %p287, %p288
    %p290 = pneg %p289
    // Predicated region
    $region9: #{impala_block_pallas.1} parent=5 // pred_check
      _
    $region10: #{impala_block_pallas.1} parent=5 // pred_check_branch
      %292 = sbr.rel (%p289) target = $region12
    $region11: #{impala_block_pallas.1} parent=5 // pred_region
      %s293 = ssub.s32 %s17, 1
      // Predicated region
      $region13: #{impala_block_pallas.1} parent=11 // pred_check
        %p294 = pneg %p64
      $region14: #{impala_block_pallas.1} parent=11 // pred_check_branch
        %296 = sbr.rel (%p294) target = $region16
      $region15: #{impala_block_pallas.1} parent=11 // pred_region
        _
      $region16: #{impala_block_pallas.1} parent=11 // pred_fallthru
        _
      // Predicated region
      $region17: #{impala_block_pallas.1} parent=11 // pred_check
        %p297 = pneg %p85
      $region18: #{impala_block_pallas.1} parent=11 // pred_check_branch
        %299 = sbr.rel (%p297) target = $region20
      $region19: #{impala_block_pallas.1} parent=11 // pred_region
        _
      $region20: #{impala_block_pallas.1} parent=11 // pred_fallthru
        _
      // Predicated region
      $region21: #{impala_block_pallas.1} parent=11 // pred_check
        %p300 = pneg %p106
      $region22: #{impala_block_pallas.1} parent=11 // pred_check_branch
        %302 = sbr.rel (%p300) target = $region24
      $region23: #{impala_block_pallas.1} parent=11 // pred_region
        _
      $region24: #{impala_block_pallas.1} parent=11 // pred_fallthru
        _
      // Predicated region
      $region25: #{impala_block_pallas.1} parent=11 // pred_check
        %p303 = pneg %p127
      $region26: #{impala_block_pallas.1} parent=11 // pred_check_branch
        %305 = sbr.rel (%p303) target = $region28
      $region27: #{impala_block_pallas.1} parent=11 // pred_region
        _
      $region28: #{impala_block_pallas.1} parent=11 // pred_fallthru
        _
      // Predicated region
      $region29: #{impala_block_pallas.1} parent=11 // pred_check
        %p306 = pneg %p148
      $region30: #{impala_block_pallas.1} parent=11 // pred_check_branch
        %308 = sbr.rel (%p306) target = $region32
      $region31: #{impala_block_pallas.1} parent=11 // pred_region
        _
      $region32: #{impala_block_pallas.1} parent=11 // pred_fallthru
        _
      // Predicated region
      $region33: #{impala_block_pallas.1} parent=11 // pred_check
        %p309 = pneg %p169
      $region34: #{impala_block_pallas.1} parent=11 // pred_check_branch
        %311 = sbr.rel (%p309) target = $region36
      $region35: #{impala_block_pallas.1} parent=11 // pred_region
        _
      $region36: #{impala_block_pallas.1} parent=11 // pred_fallthru
        _
      // Predicated region
      $region37: #{impala_block_pallas.1} parent=11 // pred_check
        %p312 = pneg %p190
      $region38: #{impala_block_pallas.1} parent=11 // pred_check_branch
        %314 = sbr.rel (%p312) target = $region40
      $region39: #{impala_block_pallas.1} parent=11 // pred_region
        _
      $region40: #{impala_block_pallas.1} parent=11 // pred_fallthru
        _
      // Predicated region
      $region41: #{impala_block_pallas.1} parent=11 // pred_check
        %p315 = pneg %p211
      $region42: #{impala_block_pallas.1} parent=11 // pred_check_branch
        %317 = sbr.rel (%p315) target = $region44
      $region43: #{impala_block_pallas.1} parent=11 // pred_region
        _
      $region44: #{impala_block_pallas.1} parent=11 // pred_fallthru
        _
      // Predicated region
      $region45: #{impala_block_pallas.1} parent=11 // pred_check
        %p318 = pneg %p232
      $region46: #{impala_block_pallas.1} parent=11 // pred_check_branch
        %320 = sbr.rel (%p318) target = $region48
      $region47: #{impala_block_pallas.1} parent=11 // pred_region
        _
      $region48: #{impala_block_pallas.1} parent=11 // pred_fallthru
        _
      // Predicated region
      $region49: #{impala_block_pallas.1} parent=11 // pred_check
        %p321 = pneg %p253
      $region50: #{impala_block_pallas.1} parent=11 // pred_check_branch
        %323 = sbr.rel (%p321) target = $region52
      $region51: #{impala_block_pallas.1} parent=11 // pred_region
        _
      $region52: #{impala_block_pallas.1} parent=11 // pred_fallthru
        _
    $region12: #{impala_block_pallas.1} parent=5 // pred_fallthru
      _
    %p324 = scmp.lt.s32.totalorder %s17, 2
    // Predicated region
    $region53: #{impala_block_pallas.1} parent=5 // pred_check
      %p325 = pneg %p324
    $region54: #{impala_block_pallas.1} parent=5 // pred_check_branch
      %327 = sbr.rel (%p325) target = $region56
    $region55: #{impala_block_pallas.1} parent=5 // pred_region
      // Predicated region
      $region57: #{impala_block_pallas.1} parent=55 // pred_check
        %p328 = pneg %p37
      $region58: #{impala_block_pallas.1} parent=55 // pred_check_branch
        %330 = sbr.rel (%p328) target = $region60
      $region59: #{impala_block_pallas.1} parent=55 // pred_region
        %p331 = scmp.lt.s32.totalorder %s17, 1
        %s332 = scalar_select %p331, %s17, 1
        %s333 = smul.addr %s332, 32
        %s334 = smul.addr %s333, 8
        %s335 = scalar_lea.vmem %s0, %s334
      $region60: #{impala_block_pallas.1} parent=55 // pred_fallthru
        _
    $region56: #{impala_block_pallas.1} parent=5 // pred_fallthru
      _
    %p336 = scmp.le.s32.totalorder 1, %s17
    %p337 = scmp.lt.s32.totalorder %s17, 3
    %p338 = pnand %p336, %p337
    %p339 = pneg %p338
    // Predicated region
    $region61: #{impala_block_pallas.1} parent=5 // pred_check
      _
    $region62: #{impala_block_pallas.1} parent=5 // pred_check_branch
      %341 = sbr.rel (%p338) target = $region64
    $region63: #{impala_block_pallas.1} parent=5 // pred_region
      %s342 = ssub.s32 %s17, 1
      %p343 = scmp.lt.s32.totalorder %s22, 1
      %s344 = scalar_select %p343, %s22, 1
      %s345 = smul.addr %s344, 32
      %s346 = smul.addr %s345, 8
      %s347 = scalar_lea.vmem %s0, %s346
      %p348 = pneg %p43
      %p349 = pneg %p40
      %p350 = pneg %p64
      %p351 = pneg %p61
      %p352 = pneg %p85
      %p353 = pneg %p82
      %p354 = pneg %p106
      %p355 = pneg %p103
      %p356 = pneg %p127
      %p357 = pneg %p124
      %p358 = pneg %p148
      %p359 = pneg %p145
      %p360 = pneg %p169
      %p361 = pneg %p166
      %p362 = pneg %p190
      %p363 = pneg %p187
      %p364 = pneg %p211
      %p365 = pneg %p208
      %p366 = pneg %p232
      %p367 = pneg %p229
      %p368 = pneg %p253
      %p369 = pneg %p250
      %p370 = pneg %p279
      %p371 = pneg %p276
      %p372 = scmp.lt.s32.totalorder %s22, 1
      %s373 = scalar_select %p372, %s22, 1
      %s374 = smul.addr %s373, 8
      %s375 = smul.addr %s374, 8
      %s376 = scalar_lea.vmem %s11, %s375
      %p377 = scmp.lt.s32.totalorder %s22, 1
      %s378 = scalar_select %p377, %s22, 1
      %s379 = smul.addr %s378, 32
      %s380 = smul.addr %s379, 8
      %s381 = scalar_lea.vmem %s0, %s380
      %p382 = scmp.lt.s32.totalorder %s22, 1
      %s383 = scalar_select %p382, %s22, 1
      %s384 = smul.addr %s383, 8
      %s385 = smul.addr %s384, 8
      %s386 = scalar_lea.vmem %s11, %s385
      %vm387 = vcmask 31744
      %388 = vst.msk [vmem:[#allocation2] sm:$0xff] %vm387, 0.0
      %389 = vst.msk [vmem:[#allocation2 + $0x8] sm:$0xff] %vm387, 0.0
      %vm390 = vcmask 25600
      %391 = vst.msk [vmem:[#allocation2 + $0x10] sm:$0x3] %vm390, 0.0
      %392 = vst.msk [vmem:[#allocation2 + $0x18] sm:$0xff] %vm387, 0.0
      %393 = vst.msk [vmem:[#allocation2 + $0x20] sm:$0xff] %vm387, 0.0
      %394 = vst.msk [vmem:[#allocation2 + $0x28] sm:$0x3] %vm390, 0.0
      %395 = vst.msk [vmem:[#allocation2 + $0x30] sm:$0xff] %vm387, 0.0
      %396 = vst.msk [vmem:[#allocation2 + $0x38] sm:$0xff] %vm387, 0.0
      %397 = vst.msk [vmem:[#allocation2 + $0x40] sm:$0x3] %vm390, 0.0
      %398 = vst.msk [vmem:[#allocation2 + $0x48] sm:$0xff] %vm387, 0.0
      %399 = vst.msk [vmem:[#allocation2 + $0x50] sm:$0xff] %vm387, 0.0
      %400 = vst.msk [vmem:[#allocation2 + $0x58] sm:$0x3] %vm390, 0.0
      %401 = vst.msk [vmem:[#allocation2 + $0x60] sm:$0xff] %vm387, 0.0
      %402 = vst.msk [vmem:[#allocation2 + $0x68] sm:$0xff] %vm387, 0.0
      %403 = vst.msk [vmem:[#allocation2 + $0x70] sm:$0x3] %vm390, 0.0
      %404 = vst.msk [vmem:[#allocation2 + $0x78] sm:$0xff] %vm387, 0.0
      %405 = vst.msk [vmem:[#allocation2 + $0x80] sm:$0xff] %vm387, 0.0
      %406 = vst.msk [vmem:[#allocation2 + $0x88] sm:$0x3] %vm390, 0.0
      %407 = vst.msk [vmem:[#allocation2 + $0x90] sm:$0xff] %vm387, 0.0
      %408 = vst.msk [vmem:[#allocation2 + $0x98] sm:$0xff] %vm387, 0.0
      %409 = vst.msk [vmem:[#allocation2 + $0xa0] sm:$0x3] %vm390, 0.0
      %410 = vst.msk [vmem:[#allocation2 + $0xa8] sm:$0xff] %vm387, 0.0
      %411 = vst.msk [vmem:[#allocation2 + $0xb0] sm:$0xff] %vm387, 0.0
      %412 = vst.msk [vmem:[#allocation2 + $0xb8] sm:$0x3] %vm390, 0.0
      %413 = vst.msk [vmem:[#allocation2 + $0xc0] sm:$0xff] %vm387, 0.0
      %414 = vst.msk [vmem:[#allocation2 + $0xc8] sm:$0xff] %vm387, 0.0
      %415 = vst.msk [vmem:[#allocation2 + $0xd0] sm:$0x3] %vm390, 0.0
      %416 = vst.msk [vmem:[#allocation2 + $0xd8] sm:$0xff] %vm387, 0.0
      %417 = vst.msk [vmem:[#allocation2 + $0xe0] sm:$0xff] %vm387, 0.0
      %418 = vst.msk [vmem:[#allocation2 + $0xe8] sm:$0x3] %vm390, 0.0
      %419 = vst.msk [vmem:[#allocation2 + $0xf0] sm:$0xff] %vm387, 0.0
      %420 = vst.msk [vmem:[#allocation2 + $0xf8] sm:$0xff] %vm387, 0.0
      %421 = vst.msk [vmem:[#allocation2 + $0x100] sm:$0x3] %vm390, 0.0
      %422 = vst.msk [vmem:[#allocation2 + $0x108] sm:$0xff] %vm387, 0.0
      %423 = vst.msk [vmem:[#allocation2 + $0x110] sm:$0xff] %vm387, 0.0
      %424 = vst.msk [vmem:[#allocation2 + $0x118] sm:$0x3] %vm390, 0.0
      %425 = vst.msk [vmem:[#allocation2 + $0x120] sm:$0xff] %vm387, 0.0
      %426 = vst.msk [vmem:[#allocation2 + $0x128] sm:$0xff] %vm387, 0.0
      %427 = vst.msk [vmem:[#allocation2 + $0x130] sm:$0x3] %vm390, 0.0
      %428 = vst.msk [vmem:[#allocation2 + $0x138] sm:$0xff] %vm387, 0.0
      %429 = vst.msk [vmem:[#allocation2 + $0x140] sm:$0xff] %vm387, 0.0
      %430 = vst.msk [vmem:[#allocation2 + $0x148] sm:$0x3] %vm390, 0.0
      %431 = vst.msk [vmem:[#allocation2 + $0x150] sm:$0xff] %vm387, 0.0
      %432 = vst.msk [vmem:[#allocation2 + $0x158] sm:$0xff] %vm387, 0.0
      %433 = vst.msk [vmem:[#allocation2 + $0x160] sm:$0x3] %vm390, 0.0
      %434 = vst.msk [vmem:[#allocation2 + $0x168] sm:$0xff] %vm387, 0.0
      %435 = vst.msk [vmem:[#allocation2 + $0x170] sm:$0xff] %vm387, 0.0
      %436 = vst.msk [vmem:[#allocation2 + $0x178] sm:$0x3] %vm390, 0.0
      %437 = vst.msk [vmem:[#allocation2 + $0x180] sm:$0xff] %vm387, 0.0
      %438 = vst.msk [vmem:[#allocation2 + $0x188] sm:$0xff] %vm387, 0.0
      %439 = vst.msk [vmem:[#allocation2 + $0x190] sm:$0x3] %vm390, 0.0
      %440 = vst.msk [vmem:[#allocation2 + $0x198] sm:$0xff] %vm387, 0.0
      %441 = vst.msk [vmem:[#allocation2 + $0x1a0] sm:$0xff] %vm387, 0.0
      %442 = vst.msk [vmem:[#allocation2 + $0x1a8] sm:$0x3] %vm390, 0.0
      %v443 = vld [vmem:[%s381] sm:$0xff]
      %v444 = vld [vmem:[%s381 + $0x8] sm:$0xff]
      %v445 = vld [vmem:[%s381 + $0x10] sm:$0xff]
      %v446 = vld [vmem:[%s381 + $0x18] sm:$0xff]
      %v447 = vld [vmem:[%s381 + $0x20] sm:$0xff]
      %v448 = vld [vmem:[%s381 + $0x28] sm:$0xff]
      %v449 = vld [vmem:[%s381 + $0x30] sm:$0xff]
      %v450 = vld [vmem:[%s381 + $0x38] sm:$0xff]
      %v451 = vld [vmem:[%s381 + $0x40] sm:$0xff]
      %v452 = vld [vmem:[%s381 + $0x48] sm:$0xff]
      %v453 = vld [vmem:[%s381 + $0x50] sm:$0xff]
      %v454 = vld [vmem:[%s381 + $0x58] sm:$0xff]
      %v455 = vld [vmem:[%s381 + $0x60] sm:$0xff]
      %v456 = vld [vmem:[%s381 + $0x68] sm:$0xff]
      %v457 = vld [vmem:[%s381 + $0x70] sm:$0xff]
      %v458 = vld [vmem:[%s381 + $0x78] sm:$0xff]
      %v459 = vld [vmem:[%s381 + $0x80] sm:$0xff]
      %v460 = vld [vmem:[%s381 + $0x88] sm:$0xff]
      %v461 = vld [vmem:[%s381 + $0x90] sm:$0xff]
      %v462 = vld [vmem:[%s381 + $0x98] sm:$0xff]
      %v463 = vld [vmem:[%s381 + $0xa0] sm:$0xff]
      %v464 = vld [vmem:[%s381 + $0xa8] sm:$0xff]
      %v465 = vld [vmem:[%s381 + $0xb0] sm:$0xff]
      %v466 = vld [vmem:[%s381 + $0xb8] sm:$0xff]
      %v467 = vld [vmem:[%s381 + $0xc0] sm:$0xff]
      %v468 = vld [vmem:[%s381 + $0xc8] sm:$0xff]
      %v469 = vld [vmem:[%s381 + $0xd0] sm:$0xff]
      %v470 = vld [vmem:[%s381 + $0xd8] sm:$0xff]
      %v471 = vld [vmem:[%s381 + $0xe0] sm:$0xff]
      %v472 = vld [vmem:[%s381 + $0xe8] sm:$0xff]
      %v473 = vld [vmem:[%s381 + $0xf0] sm:$0xff]
      %v474 = vld [vmem:[%s381 + $0xf8] sm:$0xff]
      %s475 = scalar_lea.vmem [#allocation2], 24
      %476 = vst.msk [vmem:[%s475 + $0x1] sm:$0xff] %vm387, %v443
      %477 = vst.msk [vmem:[%s475 + $0x9] sm:$0xff] %vm387, %v444
      %478 = vst.msk [vmem:[%s475 + $0x19] sm:$0xff] %vm387, %v445
      %479 = vst.msk [vmem:[%s475 + $0x21] sm:$0xff] %vm387, %v446
      %480 = vst.msk [vmem:[%s475 + $0x31] sm:$0xff] %vm387, %v447
      %481 = vst.msk [vmem:[%s475 + $0x39] sm:$0xff] %vm387, %v448
      %482 = vst.msk [vmem:[%s475 + $0x49] sm:$0xff] %vm387, %v449
      %483 = vst.msk [vmem:[%s475 + $0x51] sm:$0xff] %vm387, %v450
      %484 = vst.msk [vmem:[%s475 + $0x61] sm:$0xff] %vm387, %v451
      %485 = vst.msk [vmem:[%s475 + $0x69] sm:$0xff] %vm387, %v452
      %486 = vst.msk [vmem:[%s475 + $0x79] sm:$0xff] %vm387, %v453
      %487 = vst.msk [vmem:[%s475 + $0x81] sm:$0xff] %vm387, %v454
      %488 = vst.msk [vmem:[%s475 + $0x91] sm:$0xff] %vm387, %v455
      %489 = vst.msk [vmem:[%s475 + $0x99] sm:$0xff] %vm387, %v456
      %490 = vst.msk [vmem:[%s475 + $0xa9] sm:$0xff] %vm387, %v457
      %491 = vst.msk [vmem:[%s475 + $0xb1] sm:$0xff] %vm387, %v458
      %492 = vst.msk [vmem:[%s475 + $0xc1] sm:$0xff] %vm387, %v459
      %493 = vst.msk [vmem:[%s475 + $0xc9] sm:$0xff] %vm387, %v460
      %494 = vst.msk [vmem:[%s475 + $0xd9] sm:$0xff] %vm387, %v461
      %495 = vst.msk [vmem:[%s475 + $0xe1] sm:$0xff] %vm387, %v462
      %496 = vst.msk [vmem:[%s475 + $0xf1] sm:$0xff] %vm387, %v463
      %497 = vst.msk [vmem:[%s475 + $0xf9] sm:$0xff] %vm387, %v464
      %498 = vst.msk [vmem:[%s475 + $0x109] sm:$0xff] %vm387, %v465
      %499 = vst.msk [vmem:[%s475 + $0x111] sm:$0xff] %vm387, %v466
      %500 = vst.msk [vmem:[%s475 + $0x121] sm:$0xff] %vm387, %v467
      %501 = vst.msk [vmem:[%s475 + $0x129] sm:$0xff] %vm387, %v468
      %502 = vst.msk [vmem:[%s475 + $0x139] sm:$0xff] %vm387, %v469
      %503 = vst.msk [vmem:[%s475 + $0x141] sm:$0xff] %vm387, %v470
      %504 = vst.msk [vmem:[%s475 + $0x151] sm:$0xff] %vm387, %v471
      %505 = vst.msk [vmem:[%s475 + $0x159] sm:$0xff] %vm387, %v472
      %506 = vst.msk [vmem:[%s475 + $0x169] sm:$0xff] %vm387, %v473
      %507 = vst.msk [vmem:[%s475 + $0x171] sm:$0xff] %vm387, %v474
      %v508 = vld [vmem:[#allocation2] sm:$0xff]
      %v509 = vld [vmem:[#allocation2 + $0x8] sm:$0xff]
      %v510 = vld [vmem:[#allocation2 + $0x10] sm:$0x3]
      %v511 = vld [vmem:[#allocation2 + $0x18] sm:$0xff]
      %v512 = vld [vmem:[#allocation2 + $0x20] sm:$0xff]
      %v513 = vld [vmem:[#allocation2 + $0x28] sm:$0x3]
      %v514 = vld [vmem:[#allocation2 + $0x30] sm:$0xff]
      %v515 = vld [vmem:[#allocation2 + $0x38] sm:$0xff]
      %v516 = vld [vmem:[#allocation2 + $0x40] sm:$0x3]
      %v517 = vld [vmem:[#allocation2 + $0x48] sm:$0xff]
      %v518 = vld [vmem:[#allocation2 + $0x50] sm:$0xff]
      %v519 = vld [vmem:[#allocation2 + $0x58] sm:$0x3]
      %v520 = vld [vmem:[#allocation2 + $0x60] sm:$0xff]
      %v521 = vld [vmem:[#allocation2 + $0x68] sm:$0xff]
      %v522 = vld [vmem:[#allocation2 + $0x70] sm:$0x3]
      %v523 = vld [vmem:[#allocation2 + $0x78] sm:$0xff]
      %v524 = vld [vmem:[#allocation2 + $0x80] sm:$0xff]
      %v525 = vld [vmem:[#allocation2 + $0x88] sm:$0x3]
      %v526 = vld [vmem:[#allocation2 + $0x90] sm:$0xff]
      %v527 = vld [vmem:[#allocation2 + $0x98] sm:$0xff]
      %v528 = vld [vmem:[#allocation2 + $0xa0] sm:$0x3]
      %v529 = vld [vmem:[#allocation2 + $0xa8] sm:$0xff]
      %v530 = vld [vmem:[#allocation2 + $0xb0] sm:$0xff]
      %v531 = vld [vmem:[#allocation2 + $0xb8] sm:$0x3]
      %v532 = vld [vmem:[#allocation2 + $0xc0] sm:$0xff]
      %v533 = vld [vmem:[#allocation2 + $0xc8] sm:$0xff]
      %v534 = vld [vmem:[#allocation2 + $0xd0] sm:$0x3]
      %v535 = vld [vmem:[#allocation2 + $0xd8] sm:$0xff]
      %v536 = vld [vmem:[#allocation2 + $0xe0] sm:$0xff]
      %v537 = vld [vmem:[#allocation2 + $0xe8] sm:$0x3]
      %v538 = vld [vmem:[#allocation2 + $0xf0] sm:$0xff]
      %v539 = vld [vmem:[#allocation2 + $0xf8] sm:$0xff]
      %v540 = vld [vmem:[#allocation2 + $0x100] sm:$0x3]
      %v541 = vld [vmem:[#allocation2 + $0x108] sm:$0xff]
      %v542 = vld [vmem:[#allocation2 + $0x110] sm:$0xff]
      %v543 = vld [vmem:[#allocation2 + $0x118] sm:$0x3]
      %v544 = vld [vmem:[#allocation2 + $0x120] sm:$0xff]
      %v545 = vld [vmem:[#allocation2 + $0x128] sm:$0xff]
      %v546 = vld [vmem:[#allocation2 + $0x130] sm:$0x3]
      %v547 = vld [vmem:[#allocation2 + $0x138] sm:$0xff]
      %v548 = vld [vmem:[#allocation2 + $0x140] sm:$0xff]
      %v549 = vld [vmem:[#allocation2 + $0x148] sm:$0x3]
      %v550 = vld [vmem:[#allocation2 + $0x150] sm:$0xff]
      %v551 = vld [vmem:[#allocation2 + $0x158] sm:$0xff]
      %v552 = vld [vmem:[#allocation2 + $0x160] sm:$0x3]
      %v553 = vld [vmem:[#allocation2 + $0x168] sm:$0xff]
      %v554 = vld [vmem:[#allocation2 + $0x170] sm:$0xff]
      %v555 = vld [vmem:[#allocation2 + $0x178] sm:$0x3]
      %v556 = vld [vmem:[#allocation2 + $0x180] sm:$0xff]
      %v557 = vld [vmem:[#allocation2 + $0x188] sm:$0xff]
      %v558 = vld [vmem:[#allocation2 + $0x190] sm:$0x3]
      %v559 = vld [vmem:[#allocation2 + $0x198] sm:$0xff]
      %v560 = vld [vmem:[#allocation2 + $0x1a0] sm:$0xff]
      %v561 = vld [vmem:[#allocation2 + $0x1a8] sm:$0x3]
      %562 = vst.msk [vmem:[#allocation3] sm:$0xff] %vm387, %v508
      %563 = vst.msk [vmem:[#allocation3 + $0x8] sm:$0xff] %vm387, %v509
      %564 = vst.msk [vmem:[#allocation3 + $0x10] sm:$0xff] %vm387, %v511
      %565 = vst.msk [vmem:[#allocation3 + $0x18] sm:$0xff] %vm387, %v512
      %566 = vst.msk [vmem:[#allocation3 + $0x20] sm:$0xff] %vm387, %v514
      %567 = vst.msk [vmem:[#allocation3 + $0x28] sm:$0xff] %vm387, %v515
      %568 = vst.msk [vmem:[#allocation3 + $0x30] sm:$0xff] %vm387, %v517
      %569 = vst.msk [vmem:[#allocation3 + $0x38] sm:$0xff] %vm387, %v518
      %570 = vst.msk [vmem:[#allocation3 + $0x40] sm:$0xff] %vm387, %v520
      %571 = vst.msk [vmem:[#allocation3 + $0x48] sm:$0xff] %vm387, %v521
      %572 = vst.msk [vmem:[#allocation3 + $0x50] sm:$0xff] %vm387, %v523
      %573 = vst.msk [vmem:[#allocation3 + $0x58] sm:$0xff] %vm387, %v524
      %574 = vst.msk [vmem:[#allocation3 + $0x60] sm:$0xff] %vm387, %v526
      %575 = vst.msk [vmem:[#allocation3 + $0x68] sm:$0xff] %vm387, %v527
      %576 = vst.msk [vmem:[#allocation3 + $0x70] sm:$0xff] %vm387, %v529
      %577 = vst.msk [vmem:[#allocation3 + $0x78] sm:$0xff] %vm387, %v530
      %578 = vst.msk [vmem:[#allocation3 + $0x80] sm:$0xff] %vm387, %v532
      %579 = vst.msk [vmem:[#allocation3 + $0x88] sm:$0xff] %vm387, %v533
      %580 = vst.msk [vmem:[#allocation3 + $0x90] sm:$0xff] %vm387, %v535
      %581 = vst.msk [vmem:[#allocation3 + $0x98] sm:$0xff] %vm387, %v536
      %582 = vst.msk [vmem:[#allocation3 + $0xa0] sm:$0xff] %vm387, %v538
      %583 = vst.msk [vmem:[#allocation3 + $0xa8] sm:$0xff] %vm387, %v539
      %584 = vst.msk [vmem:[#allocation3 + $0xb0] sm:$0xff] %vm387, %v541
      %585 = vst.msk [vmem:[#allocation3 + $0xb8] sm:$0xff] %vm387, %v542
      %586 = vst.msk [vmem:[#allocation3 + $0xc0] sm:$0xff] %vm387, %v544
      %587 = vst.msk [vmem:[#allocation3 + $0xc8] sm:$0xff] %vm387, %v545
      %588 = vst.msk [vmem:[#allocation3 + $0xd0] sm:$0xff] %vm387, %v547
      %589 = vst.msk [vmem:[#allocation3 + $0xd8] sm:$0xff] %vm387, %v548
      %590 = vst.msk [vmem:[#allocation3 + $0xe0] sm:$0xff] %vm387, %v550
      %591 = vst.msk [vmem:[#allocation3 + $0xe8] sm:$0xff] %vm387, %v551
      %592 = vst.msk [vmem:[#allocation3 + $0xf0] sm:$0xff] %vm387, %v553
      %593 = vst.msk [vmem:[#allocation3 + $0xf8] sm:$0xff] %vm387, %v554
      %vm642 = vcmask 1046528
      %v643 = vrot.slane %v508, 1
      %v644 = vrot.slane %v509, 1
      %v645 = vsel %vm642, %v643, %v644
      %v646 = vrot.slane %v510, 1
      %v647 = vsel %vm642, %v644, %v646
      %v648 = vrot.slane %v511, 1
      %v649 = vrot.slane %v512, 1
      %v650 = vsel %vm642, %v648, %v649
      %v651 = vrot.slane %v513, 1
      %v652 = vsel %vm642, %v649, %v651
      %v653 = vrot.slane %v514, 1
      %v654 = vrot.slane %v515, 1
      %v655 = vsel %vm642, %v653, %v654
      %v656 = vrot.slane %v516, 1
      %v657 = vsel %vm642, %v654, %v656
      %v658 = vrot.slane %v517, 1
      %v659 = vrot.slane %v518, 1
      %v660 = vsel %vm642, %v658, %v659
      %v661 = vrot.slane %v519, 1
      %v662 = vsel %vm642, %v659, %v661
      %v663 = vrot.slane %v520, 1
      %v664 = vrot.slane %v521, 1
      %v665 = vsel %vm642, %v663, %v664
      %v666 = vrot.slane %v522, 1
      %v667 = vsel %vm642, %v664, %v666
      %v668 = vrot.slane %v523, 1
      %v669 = vrot.slane %v524, 1
      %v670 = vsel %vm642, %v668, %v669
      %v671 = vrot.slane %v525, 1
      %v672 = vsel %vm642, %v669, %v671
      %v673 = vrot.slane %v526, 1
      %v674 = vrot.slane %v527, 1
      %v675 = vsel %vm642, %v673, %v674
      %v676 = vrot.slane %v528, 1
      %v677 = vsel %vm642, %v674, %v676
      %v678 = vrot.slane %v529, 1
      %v679 = vrot.slane %v530, 1
      %v680 = vsel %vm642, %v678, %v679
      %v681 = vrot.slane %v531, 1
      %v682 = vsel %vm642, %v679, %v681
      %v683 = vrot.slane %v532, 1
      %v684 = vrot.slane %v533, 1
      %v685 = vsel %vm642, %v683, %v684
      %v686 = vrot.slane %v534, 1
      %v687 = vsel %vm642, %v684, %v686
      %v688 = vrot.slane %v535, 1
      %v689 = vrot.slane %v536, 1
      %v690 = vsel %vm642, %v688, %v689
      %v691 = vrot.slane %v537, 1
      %v692 = vsel %vm642, %v689, %v691
      %v693 = vrot.slane %v538, 1
      %v694 = vrot.slane %v539, 1
      %v695 = vsel %vm642, %v693, %v694
      %v696 = vrot.slane %v540, 1
      %v697 = vsel %vm642, %v694, %v696
      %v698 = vrot.slane %v541, 1
      %v699 = vrot.slane %v542, 1
      %v700 = vsel %vm642, %v698, %v699
      %v701 = vrot.slane %v543, 1
      %v702 = vsel %vm642, %v699, %v701
      %v703 = vrot.slane %v544, 1
      %v704 = vrot.slane %v545, 1
      %v705 = vsel %vm642, %v703, %v704
      %v706 = vrot.slane %v546, 1
      %v707 = vsel %vm642, %v704, %v706
      %v708 = vrot.slane %v547, 1
      %v709 = vrot.slane %v548, 1
      %v710 = vsel %vm642, %v708, %v709
      %v711 = vrot.slane %v549, 1
      %v712 = vsel %vm642, %v709, %v711
      %v713 = vrot.slane %v550, 1
      %v714 = vrot.slane %v551, 1
      %v715 = vsel %vm642, %v713, %v714
      %v716 = vrot.slane %v552, 1
      %v717 = vsel %vm642, %v714, %v716
      %v718 = vrot.slane %v553, 1
      %v719 = vrot.slane %v554, 1
      %v720 = vsel %vm642, %v718, %v719
      %v721 = vrot.slane %v555, 1
      %v722 = vsel %vm642, %v719, %v721
      %723 = vrot.lane.b32.xlu0 %v645, 4
      %v724 = vpop.permute.xlu0 %723
      %725 = vrot.lane.b32.xlu0 %v647, 4
      %v726 = vpop.permute.xlu0 %725
      %727 = vrot.lane.b32.xlu0 %v650, 4
      %v728 = vpop.permute.xlu0 %727
      %729 = vrot.lane.b32.xlu0 %v652, 4
      %v730 = vpop.permute.xlu0 %729
      %731 = vrot.lane.b32.xlu0 %v655, 4
      %v732 = vpop.permute.xlu0 %731
      %733 = vrot.lane.b32.xlu0 %v657, 4
      %v734 = vpop.permute.xlu0 %733
      %735 = vrot.lane.b32.xlu0 %v660, 4
      %v736 = vpop.permute.xlu0 %735
      %737 = vrot.lane.b32.xlu0 %v662, 4
      %v738 = vpop.permute.xlu0 %737
      %739 = vrot.lane.b32.xlu0 %v665, 4
      %v740 = vpop.permute.xlu0 %739
      %741 = vrot.lane.b32.xlu0 %v667, 4
      %v742 = vpop.permute.xlu0 %741
      %743 = vrot.lane.b32.xlu0 %v670, 4
      %v744 = vpop.permute.xlu0 %743
      %745 = vrot.lane.b32.xlu0 %v672, 4
      %v746 = vpop.permute.xlu0 %745
      %747 = vrot.lane.b32.xlu0 %v675, 4
      %v748 = vpop.permute.xlu0 %747
      %749 = vrot.lane.b32.xlu0 %v677, 4
      %v750 = vpop.permute.xlu0 %749
      %751 = vrot.lane.b32.xlu0 %v680, 4
      %v752 = vpop.permute.xlu0 %751
      %753 = vrot.lane.b32.xlu0 %v682, 4
      %v754 = vpop.permute.xlu0 %753
      %755 = vrot.lane.b32.xlu0 %v685, 4
      %v756 = vpop.permute.xlu0 %755
      %757 = vrot.lane.b32.xlu0 %v687, 4
      %v758 = vpop.permute.xlu0 %757
      %759 = vrot.lane.b32.xlu0 %v690, 4
      %v760 = vpop.permute.xlu0 %759
      %761 = vrot.lane.b32.xlu0 %v692, 4
      %v762 = vpop.permute.xlu0 %761
      %763 = vrot.lane.b32.xlu0 %v695, 4
      %v764 = vpop.permute.xlu0 %763
      %765 = vrot.lane.b32.xlu0 %v697, 4
      %v766 = vpop.permute.xlu0 %765
      %767 = vrot.lane.b32.xlu0 %v700, 4
      %v768 = vpop.permute.xlu0 %767
      %769 = vrot.lane.b32.xlu0 %v702, 4
      %v770 = vpop.permute.xlu0 %769
      %771 = vrot.lane.b32.xlu0 %v705, 4
      %v772 = vpop.permute.xlu0 %771
      %773 = vrot.lane.b32.xlu0 %v707, 4
      %v774 = vpop.permute.xlu0 %773
      %775 = vrot.lane.b32.xlu0 %v710, 4
      %v776 = vpop.permute.xlu0 %775
      %777 = vrot.lane.b32.xlu0 %v712, 4
      %v778 = vpop.permute.xlu0 %777
      %779 = vrot.lane.b32.xlu0 %v715, 4
      %v780 = vpop.permute.xlu0 %779
      %781 = vrot.lane.b32.xlu0 %v717, 4
      %v782 = vpop.permute.xlu0 %781
      %783 = vrot.lane.b32.xlu0 %v720, 4
      %v784 = vpop.permute.xlu0 %783
      %785 = vrot.lane.b32.xlu0 %v722, 4
      %v786 = vpop.permute.xlu0 %785
      %vm819 = vcmask 64544
      %820 = vst.msk [vmem:[#allocation3] sm:$0xff] %vm819, %v724
      %821 = vst.msk [vmem:[#allocation3 + $0x8] sm:$0xff] %vm819, %v726
      %822 = vst.msk [vmem:[#allocation3 + $0x10] sm:$0xff] %vm819, %v728
      %823 = vst.msk [vmem:[#allocation3 + $0x18] sm:$0xff] %vm819, %v730
      %824 = vst.msk [vmem:[#allocation3 + $0x20] sm:$0xff] %vm819, %v732
      %825 = vst.msk [vmem:[#allocation3 + $0x28] sm:$0xff] %vm819, %v734
      %826 = vst.msk [vmem:[#allocation3 + $0x30] sm:$0xff] %vm819, %v736
      %827 = vst.msk [vmem:[#allocation3 + $0x38] sm:$0xff] %vm819, %v738
      %828 = vst.msk [vmem:[#allocation3 + $0x40] sm:$0xff] %vm819, %v740
      %829 = vst.msk [vmem:[#allocation3 + $0x48] sm:$0xff] %vm819, %v742
      %830 = vst.msk [vmem:[#allocation3 + $0x50] sm:$0xff] %vm819, %v744
      %831 = vst.msk [vmem:[#allocation3 + $0x58] sm:$0xff] %vm819, %v746
      %832 = vst.msk [vmem:[#allocation3 + $0x60] sm:$0xff] %vm819, %v748
      %833 = vst.msk [vmem:[#allocation3 + $0x68] sm:$0xff] %vm819, %v750
      %834 = vst.msk [vmem:[#allocation3 + $0x70] sm:$0xff] %vm819, %v752
      %835 = vst.msk [vmem:[#allocation3 + $0x78] sm:$0xff] %vm819, %v754
      %836 = vst.msk [vmem:[#allocation3 + $0x80] sm:$0xff] %vm819, %v756
      %837 = vst.msk [vmem:[#allocation3 + $0x88] sm:$0xff] %vm819, %v758
      %838 = vst.msk [vmem:[#allocation3 + $0x90] sm:$0xff] %vm819, %v760
      %839 = vst.msk [vmem:[#allocation3 + $0x98] sm:$0xff] %vm819, %v762
      %840 = vst.msk [vmem:[#allocation3 + $0xa0] sm:$0xff] %vm819, %v764
      %841 = vst.msk [vmem:[#allocation3 + $0xa8] sm:$0xff] %vm819, %v766
      %842 = vst.msk [vmem:[#allocation3 + $0xb0] sm:$0xff] %vm819, %v768
      %843 = vst.msk [vmem:[#allocation3 + $0xb8] sm:$0xff] %vm819, %v770
      %844 = vst.msk [vmem:[#allocation3 + $0xc0] sm:$0xff] %vm819, %v772
      %845 = vst.msk [vmem:[#allocation3 + $0xc8] sm:$0xff] %vm819, %v774
      %846 = vst.msk [vmem:[#allocation3 + $0xd0] sm:$0xff] %vm819, %v776
      %847 = vst.msk [vmem:[#allocation3 + $0xd8] sm:$0xff] %vm819, %v778
      %848 = vst.msk [vmem:[#allocation3 + $0xe0] sm:$0xff] %vm819, %v780
      %849 = vst.msk [vmem:[#allocation3 + $0xe8] sm:$0xff] %vm819, %v782
      %850 = vst.msk [vmem:[#allocation3 + $0xf0] sm:$0xff] %vm819, %v784
      %851 = vst.msk [vmem:[#allocation3 + $0xf8] sm:$0xff] %vm819, %v786
      %vm852 = vcmask 1045504
      %v853 = vrot.slane %v508, 2
      %v854 = vrot.slane %v509, 2
      %v855 = vsel %vm852, %v853, %v854
      %v856 = vrot.slane %v510, 2
      %v857 = vsel %vm852, %v854, %v856
      %v858 = vrot.slane %v511, 2
      %v859 = vrot.slane %v512, 2
      %v860 = vsel %vm852, %v858, %v859
      %v861 = vrot.slane %v513, 2
      %v862 = vsel %vm852, %v859, %v861
      %v863 = vrot.slane %v514, 2
      %v864 = vrot.slane %v515, 2
      %v865 = vsel %vm852, %v863, %v864
      %v866 = vrot.slane %v516, 2
      %v867 = vsel %vm852, %v864, %v866
      %v868 = vrot.slane %v517, 2
      %v869 = vrot.slane %v518, 2
      %v870 = vsel %vm852, %v868, %v869
      %v871 = vrot.slane %v519, 2
      %v872 = vsel %vm852, %v869, %v871
      %v873 = vrot.slane %v520, 2
      %v874 = vrot.slane %v521, 2
      %v875 = vsel %vm852, %v873, %v874
      %v876 = vrot.slane %v522, 2
      %v877 = vsel %vm852, %v874, %v876
      %v878 = vrot.slane %v523, 2
      %v879 = vrot.slane %v524, 2
      %v880 = vsel %vm852, %v878, %v879
      %v881 = vrot.slane %v525, 2
      %v882 = vsel %vm852, %v879, %v881
      %v883 = vrot.slane %v526, 2
      %v884 = vrot.slane %v527, 2
      %v885 = vsel %vm852, %v883, %v884
      %v886 = vrot.slane %v528, 2
      %v887 = vsel %vm852, %v884, %v886
      %v888 = vrot.slane %v529, 2
      %v889 = vrot.slane %v530, 2
      %v890 = vsel %vm852, %v888, %v889
      %v891 = vrot.slane %v531, 2
      %v892 = vsel %vm852, %v889, %v891
      %v893 = vrot.slane %v532, 2
      %v894 = vrot.slane %v533, 2
      %v895 = vsel %vm852, %v893, %v894
      %v896 = vrot.slane %v534, 2
      %v897 = vsel %vm852, %v894, %v896
      %v898 = vrot.slane %v535, 2
      %v899 = vrot.slane %v536, 2
      %v900 = vsel %vm852, %v898, %v899
      %v901 = vrot.slane %v537, 2
      %v902 = vsel %vm852, %v899, %v901
      %v903 = vrot.slane %v538, 2
      %v904 = vrot.slane %v539, 2
      %v905 = vsel %vm852, %v903, %v904
      %v906 = vrot.slane %v540, 2
      %v907 = vsel %vm852, %v904, %v906
      %v908 = vrot.slane %v541, 2
      %v909 = vrot.slane %v542, 2
      %v910 = vsel %vm852, %v908, %v909
      %v911 = vrot.slane %v543, 2
      %v912 = vsel %vm852, %v909, %v911
      %v913 = vrot.slane %v544, 2
      %v914 = vrot.slane %v545, 2
      %v915 = vsel %vm852, %v913, %v914
      %v916 = vrot.slane %v546, 2
      %v917 = vsel %vm852, %v914, %v916
      %v918 = vrot.slane %v547, 2
      %v919 = vrot.slane %v548, 2
      %v920 = vsel %vm852, %v918, %v919
      %v921 = vrot.slane %v549, 2
      %v922 = vsel %vm852, %v919, %v921
      %v923 = vrot.slane %v550, 2
      %v924 = vrot.slane %v551, 2
      %v925 = vsel %vm852, %v923, %v924
      %v926 = vrot.slane %v552, 2
      %v927 = vsel %vm852, %v924, %v926
      %v928 = vrot.slane %v553, 2
      %v929 = vrot.slane %v554, 2
      %v930 = vsel %vm852, %v928, %v929
      %v931 = vrot.slane %v555, 2
      %v932 = vsel %vm852, %v929, %v931
      %933 = vrot.lane.b32.xlu0 %v855, 8
      %v934 = vpop.permute.xlu0 %933
      %935 = vrot.lane.b32.xlu0 %v857, 8
      %v936 = vpop.permute.xlu0 %935
      %937 = vrot.lane.b32.xlu0 %v860, 8
      %v938 = vpop.permute.xlu0 %937
      %939 = vrot.lane.b32.xlu0 %v862, 8
      %v940 = vpop.permute.xlu0 %939
      %941 = vrot.lane.b32.xlu0 %v865, 8
      %v942 = vpop.permute.xlu0 %941
      %943 = vrot.lane.b32.xlu0 %v867, 8
      %v944 = vpop.permute.xlu0 %943
      %945 = vrot.lane.b32.xlu0 %v870, 8
      %v946 = vpop.permute.xlu0 %945
      %947 = vrot.lane.b32.xlu0 %v872, 8
      %v948 = vpop.permute.xlu0 %947
      %949 = vrot.lane.b32.xlu0 %v875, 8
      %v950 = vpop.permute.xlu0 %949
      %951 = vrot.lane.b32.xlu0 %v877, 8
      %v952 = vpop.permute.xlu0 %951
      %953 = vrot.lane.b32.xlu0 %v880, 8
      %v954 = vpop.permute.xlu0 %953
      %955 = vrot.lane.b32.xlu0 %v882, 8
      %v956 = vpop.permute.xlu0 %955
      %957 = vrot.lane.b32.xlu0 %v885, 8
      %v958 = vpop.permute.xlu0 %957
      %959 = vrot.lane.b32.xlu0 %v887, 8
      %v960 = vpop.permute.xlu0 %959
      %961 = vrot.lane.b32.xlu0 %v890, 8
      %v962 = vpop.permute.xlu0 %961
      %963 = vrot.lane.b32.xlu0 %v892, 8
      %v964 = vpop.permute.xlu0 %963
      %965 = vrot.lane.b32.xlu0 %v895, 8
      %v966 = vpop.permute.xlu0 %965
      %967 = vrot.lane.b32.xlu0 %v897, 8
      %v968 = vpop.permute.xlu0 %967
      %969 = vrot.lane.b32.xlu0 %v900, 8
      %v970 = vpop.permute.xlu0 %969
      %971 = vrot.lane.b32.xlu0 %v902, 8
      %v972 = vpop.permute.xlu0 %971
      %973 = vrot.lane.b32.xlu0 %v905, 8
      %v974 = vpop.permute.xlu0 %973
      %975 = vrot.lane.b32.xlu0 %v907, 8
      %v976 = vpop.permute.xlu0 %975
      %977 = vrot.lane.b32.xlu0 %v910, 8
      %v978 = vpop.permute.xlu0 %977
      %979 = vrot.lane.b32.xlu0 %v912, 8
      %v980 = vpop.permute.xlu0 %979
      %981 = vrot.lane.b32.xlu0 %v915, 8
      %v982 = vpop.permute.xlu0 %981
      %983 = vrot.lane.b32.xlu0 %v917, 8
      %v984 = vpop.permute.xlu0 %983
      %985 = vrot.lane.b32.xlu0 %v920, 8
      %v986 = vpop.permute.xlu0 %985
      %987 = vrot.lane.b32.xlu0 %v922, 8
      %v988 = vpop.permute.xlu0 %987
      %989 = vrot.lane.b32.xlu0 %v925, 8
      %v990 = vpop.permute.xlu0 %989
      %991 = vrot.lane.b32.xlu0 %v927, 8
      %v992 = vpop.permute.xlu0 %991
      %993 = vrot.lane.b32.xlu0 %v930, 8
      %v994 = vpop.permute.xlu0 %993
      %995 = vrot.lane.b32.xlu0 %v932, 8
      %v996 = vpop.permute.xlu0 %995
      %vm1029 = vcmask 97344
      %1030 = vst.msk [vmem:[#allocation3] sm:$0xff] %vm1029, %v934
      %1031 = vst.msk [vmem:[#allocation3 + $0x8] sm:$0xff] %vm1029, %v936
      %1032 = vst.msk [vmem:[#allocation3 + $0x10] sm:$0xff] %vm1029, %v938
      %1033 = vst.msk [vmem:[#allocation3 + $0x18] sm:$0xff] %vm1029, %v940
      %1034 = vst.msk [vmem:[#allocation3 + $0x20] sm:$0xff] %vm1029, %v942
      %1035 = vst.msk [vmem:[#allocation3 + $0x28] sm:$0xff] %vm1029, %v944
      %1036 = vst.msk [vmem:[#allocation3 + $0x30] sm:$0xff] %vm1029, %v946
      %1037 = vst.msk [vmem:[#allocation3 + $0x38] sm:$0xff] %vm1029, %v948
      %1038 = vst.msk [vmem:[#allocation3 + $0x40] sm:$0xff] %vm1029, %v950
      %1039 = vst.msk [vmem:[#allocation3 + $0x48] sm:$0xff] %vm1029, %v952
      %1040 = vst.msk [vmem:[#allocation3 + $0x50] sm:$0xff] %vm1029, %v954
      %1041 = vst.msk [vmem:[#allocation3 + $0x58] sm:$0xff] %vm1029, %v956
      %1042 = vst.msk [vmem:[#allocation3 + $0x60] sm:$0xff] %vm1029, %v958
      %1043 = vst.msk [vmem:[#allocation3 + $0x68] sm:$0xff] %vm1029, %v960
      %1044 = vst.msk [vmem:[#allocation3 + $0x70] sm:$0xff] %vm1029, %v962
      %1045 = vst.msk [vmem:[#allocation3 + $0x78] sm:$0xff] %vm1029, %v964
      %1046 = vst.msk [vmem:[#allocation3 + $0x80] sm:$0xff] %vm1029, %v966
      %1047 = vst.msk [vmem:[#allocation3 + $0x88] sm:$0xff] %vm1029, %v968
      %1048 = vst.msk [vmem:[#allocation3 + $0x90] sm:$0xff] %vm1029, %v970
      %1049 = vst.msk [vmem:[#allocation3 + $0x98] sm:$0xff] %vm1029, %v972
      %1050 = vst.msk [vmem:[#allocation3 + $0xa0] sm:$0xff] %vm1029, %v974
      %1051 = vst.msk [vmem:[#allocation3 + $0xa8] sm:$0xff] %vm1029, %v976
      %1052 = vst.msk [vmem:[#allocation3 + $0xb0] sm:$0xff] %vm1029, %v978
      %1053 = vst.msk [vmem:[#allocation3 + $0xb8] sm:$0xff] %vm1029, %v980
      %1054 = vst.msk [vmem:[#allocation3 + $0xc0] sm:$0xff] %vm1029, %v982
      %1055 = vst.msk [vmem:[#allocation3 + $0xc8] sm:$0xff] %vm1029, %v984
      %1056 = vst.msk [vmem:[#allocation3 + $0xd0] sm:$0xff] %vm1029, %v986
      %1057 = vst.msk [vmem:[#allocation3 + $0xd8] sm:$0xff] %vm1029, %v988
      %1058 = vst.msk [vmem:[#allocation3 + $0xe0] sm:$0xff] %vm1029, %v990
      %1059 = vst.msk [vmem:[#allocation3 + $0xe8] sm:$0xff] %vm1029, %v992
      %1060 = vst.msk [vmem:[#allocation3 + $0xf0] sm:$0xff] %vm1029, %v994
      %1061 = vst.msk [vmem:[#allocation3 + $0xf8] sm:$0xff] %vm1029, %v996
      %1064 = vrot.lane.b32.xlu0 %v511, 12
      %v1065 = vpop.permute.xlu0 %1064
      %1066 = vrot.lane.b32.xlu0 %v512, 12
      %v1067 = vpop.permute.xlu0 %1066
      %1068 = vrot.lane.b32.xlu0 %v514, 12
      %v1069 = vpop.permute.xlu0 %1068
      %1070 = vrot.lane.b32.xlu0 %v515, 12
      %v1071 = vpop.permute.xlu0 %1070
      %1072 = vrot.lane.b32.xlu0 %v517, 12
      %v1073 = vpop.permute.xlu0 %1072
      %1074 = vrot.lane.b32.xlu0 %v518, 12
      %v1075 = vpop.permute.xlu0 %1074
      %1076 = vrot.lane.b32.xlu0 %v520, 12
      %v1077 = vpop.permute.xlu0 %1076
      %1078 = vrot.lane.b32.xlu0 %v521, 12
      %v1079 = vpop.permute.xlu0 %1078
      %1080 = vrot.lane.b32.xlu0 %v523, 12
      %v1081 = vpop.permute.xlu0 %1080
      %1082 = vrot.lane.b32.xlu0 %v524, 12
      %v1083 = vpop.permute.xlu0 %1082
      %1084 = vrot.lane.b32.xlu0 %v526, 12
      %v1085 = vpop.permute.xlu0 %1084
      %1086 = vrot.lane.b32.xlu0 %v527, 12
      %v1087 = vpop.permute.xlu0 %1086
      %1088 = vrot.lane.b32.xlu0 %v529, 12
      %v1089 = vpop.permute.xlu0 %1088
      %1090 = vrot.lane.b32.xlu0 %v530, 12
      %v1091 = vpop.permute.xlu0 %1090
      %1092 = vrot.lane.b32.xlu0 %v532, 12
      %v1093 = vpop.permute.xlu0 %1092
      %1094 = vrot.lane.b32.xlu0 %v533, 12
      %v1095 = vpop.permute.xlu0 %1094
      %1096 = vrot.lane.b32.xlu0 %v535, 12
      %v1097 = vpop.permute.xlu0 %1096
      %1098 = vrot.lane.b32.xlu0 %v536, 12
      %v1099 = vpop.permute.xlu0 %1098
      %1100 = vrot.lane.b32.xlu0 %v538, 12
      %v1101 = vpop.permute.xlu0 %1100
      %1102 = vrot.lane.b32.xlu0 %v539, 12
      %v1103 = vpop.permute.xlu0 %1102
      %1104 = vrot.lane.b32.xlu0 %v541, 12
      %v1105 = vpop.permute.xlu0 %1104
      %1106 = vrot.lane.b32.xlu0 %v542, 12
      %v1107 = vpop.permute.xlu0 %1106
      %1108 = vrot.lane.b32.xlu0 %v544, 12
      %v1109 = vpop.permute.xlu0 %1108
      %1110 = vrot.lane.b32.xlu0 %v545, 12
      %v1111 = vpop.permute.xlu0 %1110
      %1112 = vrot.lane.b32.xlu0 %v547, 12
      %v1113 = vpop.permute.xlu0 %1112
      %1114 = vrot.lane.b32.xlu0 %v548, 12
      %v1115 = vpop.permute.xlu0 %1114
      %1116 = vrot.lane.b32.xlu0 %v550, 12
      %v1117 = vpop.permute.xlu0 %1116
      %1118 = vrot.lane.b32.xlu0 %v551, 12
      %v1119 = vpop.permute.xlu0 %1118
      %1120 = vrot.lane.b32.xlu0 %v553, 12
      %v1121 = vpop.permute.xlu0 %1120
      %1122 = vrot.lane.b32.xlu0 %v554, 12
      %v1123 = vpop.permute.xlu0 %1122
      %1124 = vrot.lane.b32.xlu0 %v556, 12
      %v1125 = vpop.permute.xlu0 %1124
      %1126 = vrot.lane.b32.xlu0 %v557, 12
      %v1127 = vpop.permute.xlu0 %1126
      %vm1160 = vcmask 130144
      %1161 = vst.msk [vmem:[#allocation3] sm:$0xff] %vm1160, %v1065
      %1162 = vst.msk [vmem:[#allocation3 + $0x8] sm:$0xff] %vm1160, %v1067
      %1163 = vst.msk [vmem:[#allocation3 + $0x10] sm:$0xff] %vm1160, %v1069
      %1164 = vst.msk [vmem:[#allocation3 + $0x18] sm:$0xff] %vm1160, %v1071
      %1165 = vst.msk [vmem:[#allocation3 + $0x20] sm:$0xff] %vm1160, %v1073
      %1166 = vst.msk [vmem:[#allocation3 + $0x28] sm:$0xff] %vm1160, %v1075
      %1167 = vst.msk [vmem:[#allocation3 + $0x30] sm:$0xff] %vm1160, %v1077
      %1168 = vst.msk [vmem:[#allocation3 + $0x38] sm:$0xff] %vm1160, %v1079
      %1169 = vst.msk [vmem:[#allocation3 + $0x40] sm:$0xff] %vm1160, %v1081
      %1170 = vst.msk [vmem:[#allocation3 + $0x48] sm:$0xff] %vm1160, %v1083
      %1171 = vst.msk [vmem:[#allocation3 + $0x50] sm:$0xff] %vm1160, %v1085
      %1172 = vst.msk [vmem:[#allocation3 + $0x58] sm:$0xff] %vm1160, %v1087
      %1173 = vst.msk [vmem:[#allocation3 + $0x60] sm:$0xff] %vm1160, %v1089
      %1174 = vst.msk [vmem:[#allocation3 + $0x68] sm:$0xff] %vm1160, %v1091
      %1175 = vst.msk [vmem:[#allocation3 + $0x70] sm:$0xff] %vm1160, %v1093
      %1176 = vst.msk [vmem:[#allocation3 + $0x78] sm:$0xff] %vm1160, %v1095
      %1177 = vst.msk [vmem:[#allocation3 + $0x80] sm:$0xff] %vm1160, %v1097
      %1178 = vst.msk [vmem:[#allocation3 + $0x88] sm:$0xff] %vm1160, %v1099
      %1179 = vst.msk [vmem:[#allocation3 + $0x90] sm:$0xff] %vm1160, %v1101
      %1180 = vst.msk [vmem:[#allocation3 + $0x98] sm:$0xff] %vm1160, %v1103
      %1181 = vst.msk [vmem:[#allocation3 + $0xa0] sm:$0xff] %vm1160, %v1105
      %1182 = vst.msk [vmem:[#allocation3 + $0xa8] sm:$0xff] %vm1160, %v1107
      %1183 = vst.msk [vmem:[#allocation3 + $0xb0] sm:$0xff] %vm1160, %v1109
      %1184 = vst.msk [vmem:[#allocation3 + $0xb8] sm:$0xff] %vm1160, %v1111
      %1185 = vst.msk [vmem:[#allocation3 + $0xc0] sm:$0xff] %vm1160, %v1113
      %1186 = vst.msk [vmem:[#allocation3 + $0xc8] sm:$0xff] %vm1160, %v1115
      %1187 = vst.msk [vmem:[#allocation3 + $0xd0] sm:$0xff] %vm1160, %v1117
      %1188 = vst.msk [vmem:[#allocation3 + $0xd8] sm:$0xff] %vm1160, %v1119
      %1189 = vst.msk [vmem:[#allocation3 + $0xe0] sm:$0xff] %vm1160, %v1121
      %1190 = vst.msk [vmem:[#allocation3 + $0xe8] sm:$0xff] %vm1160, %v1123
      %1191 = vst.msk [vmem:[#allocation3 + $0xf0] sm:$0xff] %vm1160, %v1125
      %1192 = vst.msk [vmem:[#allocation3 + $0xf8] sm:$0xff] %vm1160, %v1127
      %v1194 = vrot.slane %v556, 1
      %v1195 = vrot.slane %v557, 1
      %v1196 = vsel %vm642, %v1194, %v1195
      %v1197 = vrot.slane %v558, 1
      %v1198 = vsel %vm642, %v1195, %v1197
      %1199 = vrot.lane.b32.xlu0 %v650, 16
      %v1200 = vpop.permute.xlu0 %1199
      %1201 = vrot.lane.b32.xlu0 %v652, 16
      %v1202 = vpop.permute.xlu0 %1201
      %1203 = vrot.lane.b32.xlu0 %v655, 16
      %v1204 = vpop.permute.xlu0 %1203
      %1205 = vrot.lane.b32.xlu0 %v657, 16
      %v1206 = vpop.permute.xlu0 %1205
      %1207 = vrot.lane.b32.xlu0 %v660, 16
      %v1208 = vpop.permute.xlu0 %1207
      %1209 = vrot.lane.b32.xlu0 %v662, 16
      %v1210 = vpop.permute.xlu0 %1209
      %1211 = vrot.lane.b32.xlu0 %v665, 16
      %v1212 = vpop.permute.xlu0 %1211
      %1213 = vrot.lane.b32.xlu0 %v667, 16
      %v1214 = vpop.permute.xlu0 %1213
      %1215 = vrot.lane.b32.xlu0 %v670, 16
      %v1216 = vpop.permute.xlu0 %1215
      %1217 = vrot.lane.b32.xlu0 %v672, 16
      %v1218 = vpop.permute.xlu0 %1217
      %1219 = vrot.lane.b32.xlu0 %v675, 16
      %v1220 = vpop.permute.xlu0 %1219
      %1221 = vrot.lane.b32.xlu0 %v677, 16
      %v1222 = vpop.permute.xlu0 %1221
      %1223 = vrot.lane.b32.xlu0 %v680, 16
      %v1224 = vpop.permute.xlu0 %1223
      %1225 = vrot.lane.b32.xlu0 %v682, 16
      %v1226 = vpop.permute.xlu0 %1225
      %1227 = vrot.lane.b32.xlu0 %v685, 16
      %v1228 = vpop.permute.xlu0 %1227
      %1229 = vrot.lane.b32.xlu0 %v687, 16
      %v1230 = vpop.permute.xlu0 %1229
      %1231 = vrot.lane.b32.xlu0 %v690, 16
      %v1232 = vpop.permute.xlu0 %1231
      %1233 = vrot.lane.b32.xlu0 %v692, 16
      %v1234 = vpop.permute.xlu0 %1233
      %1235 = vrot.lane.b32.xlu0 %v695, 16
      %v1236 = vpop.permute.xlu0 %1235
      %1237 = vrot.lane.b32.xlu0 %v697, 16
      %v1238 = vpop.permute.xlu0 %1237
      %1239 = vrot.lane.b32.xlu0 %v700, 16
      %v1240 = vpop.permute.xlu0 %1239
      %1241 = vrot.lane.b32.xlu0 %v702, 16
      %v1242 = vpop.permute.xlu0 %1241
      %1243 = vrot.lane.b32.xlu0 %v705, 16
      %v1244 = vpop.permute.xlu0 %1243
      %1245 = vrot.lane.b32.xlu0 %v707, 16
      %v1246 = vpop.permute.xlu0 %1245
      %1247 = vrot.lane.b32.xlu0 %v710, 16
      %v1248 = vpop.permute.xlu0 %1247
      %1249 = vrot.lane.b32.xlu0 %v712, 16
      %v1250 = vpop.permute.xlu0 %1249
      %1251 = vrot.lane.b32.xlu0 %v715, 16
      %v1252 = vpop.permute.xlu0 %1251
      %1253 = vrot.lane.b32.xlu0 %v717, 16
      %v1254 = vpop.permute.xlu0 %1253
      %1255 = vrot.lane.b32.xlu0 %v720, 16
      %v1256 = vpop.permute.xlu0 %1255
      %1257 = vrot.lane.b32.xlu0 %v722, 16
      %v1258 = vpop.permute.xlu0 %1257
      %1259 = vrot.lane.b32.xlu0 %v1196, 16
      %v1260 = vpop.permute.xlu0 %1259
      %1261 = vrot.lane.b32.xlu0 %v1198, 16
      %v1262 = vpop.permute.xlu0 %1261
      %vm1295 = vcmask 162944
      %1296 = vst.msk [vmem:[#allocation3] sm:$0xff] %vm1295, %v1200
      %1297 = vst.msk [vmem:[#allocation3 + $0x8] sm:$0xff] %vm1295, %v1202
      %1298 = vst.msk [vmem:[#allocation3 + $0x10] sm:$0xff] %vm1295, %v1204
      %1299 = vst.msk [vmem:[#allocation3 + $0x18] sm:$0xff] %vm1295, %v1206
      %1300 = vst.msk [vmem:[#allocation3 + $0x20] sm:$0xff] %vm1295, %v1208
      %1301 = vst.msk [vmem:[#allocation3 + $0x28] sm:$0xff] %vm1295, %v1210
      %1302 = vst.msk [vmem:[#allocation3 + $0x30] sm:$0xff] %vm1295, %v1212
      %1303 = vst.msk [vmem:[#allocation3 + $0x38] sm:$0xff] %vm1295, %v1214
      %1304 = vst.msk [vmem:[#allocation3 + $0x40] sm:$0xff] %vm1295, %v1216
      %1305 = vst.msk [vmem:[#allocation3 + $0x48] sm:$0xff] %vm1295, %v1218
      %1306 = vst.msk [vmem:[#allocation3 + $0x50] sm:$0xff] %vm1295, %v1220
      %1307 = vst.msk [vmem:[#allocation3 + $0x58] sm:$0xff] %vm1295, %v1222
      %1308 = vst.msk [vmem:[#allocation3 + $0x60] sm:$0xff] %vm1295, %v1224
      %1309 = vst.msk [vmem:[#allocation3 + $0x68] sm:$0xff] %vm1295, %v1226
      %1310 = vst.msk [vmem:[#allocation3 + $0x70] sm:$0xff] %vm1295, %v1228
      %1311 = vst.msk [vmem:[#allocation3 + $0x78] sm:$0xff] %vm1295, %v1230
      %1312 = vst.msk [vmem:[#allocation3 + $0x80] sm:$0xff] %vm1295, %v1232
      %1313 = vst.msk [vmem:[#allocation3 + $0x88] sm:$0xff] %vm1295, %v1234
      %1314 = vst.msk [vmem:[#allocation3 + $0x90] sm:$0xff] %vm1295, %v1236
      %1315 = vst.msk [vmem:[#allocation3 + $0x98] sm:$0xff] %vm1295, %v1238
      %1316 = vst.msk [vmem:[#allocation3 + $0xa0] sm:$0xff] %vm1295, %v1240
      %1317 = vst.msk [vmem:[#allocation3 + $0xa8] sm:$0xff] %vm1295, %v1242
      %1318 = vst.msk [vmem:[#allocation3 + $0xb0] sm:$0xff] %vm1295, %v1244
      %1319 = vst.msk [vmem:[#allocation3 + $0xb8] sm:$0xff] %vm1295, %v1246
      %1320 = vst.msk [vmem:[#allocation3 + $0xc0] sm:$0xff] %vm1295, %v1248
      %1321 = vst.msk [vmem:[#allocation3 + $0xc8] sm:$0xff] %vm1295, %v1250
      %1322 = vst.msk [vmem:[#allocation3 + $0xd0] sm:$0xff] %vm1295, %v1252
      %1323 = vst.msk [vmem:[#allocation3 + $0xd8] sm:$0xff] %vm1295, %v1254
      %1324 = vst.msk [vmem:[#allocation3 + $0xe0] sm:$0xff] %vm1295, %v1256
      %1325 = vst.msk [vmem:[#allocation3 + $0xe8] sm:$0xff] %vm1295, %v1258
      %1326 = vst.msk [vmem:[#allocation3 + $0xf0] sm:$0xff] %vm1295, %v1260
      %1327 = vst.msk [vmem:[#allocation3 + $0xf8] sm:$0xff] %vm1295, %v1262
      %v1328 = vrot.slane %v556, 2
      %v1329 = vrot.slane %v557, 2
      %v1330 = vsel %vm852, %v1328, %v1329
      %v1331 = vrot.slane %v558, 2
      %v1332 = vsel %vm852, %v1329, %v1331
      %1333 = vrot.lane.b32.xlu0 %v860, 20
      %v1334 = vpop.permute.xlu0 %1333
      %1335 = vrot.lane.b32.xlu0 %v862, 20
      %v1336 = vpop.permute.xlu0 %1335
      %1337 = vrot.lane.b32.xlu0 %v865, 20
      %v1338 = vpop.permute.xlu0 %1337
      %1339 = vrot.lane.b32.xlu0 %v867, 20
      %v1340 = vpop.permute.xlu0 %1339
      %1341 = vrot.lane.b32.xlu0 %v870, 20
      %v1342 = vpop.permute.xlu0 %1341
      %1343 = vrot.lane.b32.xlu0 %v872, 20
      %v1344 = vpop.permute.xlu0 %1343
      %1345 = vrot.lane.b32.xlu0 %v875, 20
      %v1346 = vpop.permute.xlu0 %1345
      %1347 = vrot.lane.b32.xlu0 %v877, 20
      %v1348 = vpop.permute.xlu0 %1347
      %1349 = vrot.lane.b32.xlu0 %v880, 20
      %v1350 = vpop.permute.xlu0 %1349
      %1351 = vrot.lane.b32.xlu0 %v882, 20
      %v1352 = vpop.permute.xlu0 %1351
      %1353 = vrot.lane.b32.xlu0 %v885, 20
      %v1354 = vpop.permute.xlu0 %1353
      %1355 = vrot.lane.b32.xlu0 %v887, 20
      %v1356 = vpop.permute.xlu0 %1355
      %1357 = vrot.lane.b32.xlu0 %v890, 20
      %v1358 = vpop.permute.xlu0 %1357
      %1359 = vrot.lane.b32.xlu0 %v892, 20
      %v1360 = vpop.permute.xlu0 %1359
      %1361 = vrot.lane.b32.xlu0 %v895, 20
      %v1362 = vpop.permute.xlu0 %1361
      %1363 = vrot.lane.b32.xlu0 %v897, 20
      %v1364 = vpop.permute.xlu0 %1363
      %1365 = vrot.lane.b32.xlu0 %v900, 20
      %v1366 = vpop.permute.xlu0 %1365
      %1367 = vrot.lane.b32.xlu0 %v902, 20
      %v1368 = vpop.permute.xlu0 %1367
      %1369 = vrot.lane.b32.xlu0 %v905, 20
      %v1370 = vpop.permute.xlu0 %1369
      %1371 = vrot.lane.b32.xlu0 %v907, 20
      %v1372 = vpop.permute.xlu0 %1371
      %1373 = vrot.lane.b32.xlu0 %v910, 20
      %v1374 = vpop.permute.xlu0 %1373
      %1375 = vrot.lane.b32.xlu0 %v912, 20
      %v1376 = vpop.permute.xlu0 %1375
      %1377 = vrot.lane.b32.xlu0 %v915, 20
      %v1378 = vpop.permute.xlu0 %1377
      %1379 = vrot.lane.b32.xlu0 %v917, 20
      %v1380 = vpop.permute.xlu0 %1379
      %1381 = vrot.lane.b32.xlu0 %v920, 20
      %v1382 = vpop.permute.xlu0 %1381
      %1383 = vrot.lane.b32.xlu0 %v922, 20
      %v1384 = vpop.permute.xlu0 %1383
      %1385 = vrot.lane.b32.xlu0 %v925, 20
      %v1386 = vpop.permute.xlu0 %1385
      %1387 = vrot.lane.b32.xlu0 %v927, 20
      %v1388 = vpop.permute.xlu0 %1387
      %1389 = vrot.lane.b32.xlu0 %v930, 20
      %v1390 = vpop.permute.xlu0 %1389
      %1391 = vrot.lane.b32.xlu0 %v932, 20
      %v1392 = vpop.permute.xlu0 %1391
      %1393 = vrot.lane.b32.xlu0 %v1330, 20
      %v1394 = vpop.permute.xlu0 %1393
      %1395 = vrot.lane.b32.xlu0 %v1332, 20
      %v1396 = vpop.permute.xlu0 %1395
      %vm1429 = vcmask 195744
      %1430 = vst.msk [vmem:[#allocation3] sm:$0xff] %vm1429, %v1334
      %1431 = vst.msk [vmem:[#allocation3 + $0x8] sm:$0xff] %vm1429, %v1336
      %1432 = vst.msk [vmem:[#allocation3 + $0x10] sm:$0xff] %vm1429, %v1338
      %1433 = vst.msk [vmem:[#allocation3 + $0x18] sm:$0xff] %vm1429, %v1340
      %1434 = vst.msk [vmem:[#allocation3 + $0x20] sm:$0xff] %vm1429, %v1342
      %1435 = vst.msk [vmem:[#allocation3 + $0x28] sm:$0xff] %vm1429, %v1344
      %1436 = vst.msk [vmem:[#allocation3 + $0x30] sm:$0xff] %vm1429, %v1346
      %1437 = vst.msk [vmem:[#allocation3 + $0x38] sm:$0xff] %vm1429, %v1348
      %1438 = vst.msk [vmem:[#allocation3 + $0x40] sm:$0xff] %vm1429, %v1350
      %1439 = vst.msk [vmem:[#allocation3 + $0x48] sm:$0xff] %vm1429, %v1352
      %1440 = vst.msk [vmem:[#allocation3 + $0x50] sm:$0xff] %vm1429, %v1354
      %1441 = vst.msk [vmem:[#allocation3 + $0x58] sm:$0xff] %vm1429, %v1356
      %1442 = vst.msk [vmem:[#allocation3 + $0x60] sm:$0xff] %vm1429, %v1358
      %1443 = vst.msk [vmem:[#allocation3 + $0x68] sm:$0xff] %vm1429, %v1360
      %1444 = vst.msk [vmem:[#allocation3 + $0x70] sm:$0xff] %vm1429, %v1362
      %1445 = vst.msk [vmem:[#allocation3 + $0x78] sm:$0xff] %vm1429, %v1364
      %1446 = vst.msk [vmem:[#allocation3 + $0x80] sm:$0xff] %vm1429, %v1366
      %1447 = vst.msk [vmem:[#allocation3 + $0x88] sm:$0xff] %vm1429, %v1368
      %1448 = vst.msk [vmem:[#allocation3 + $0x90] sm:$0xff] %vm1429, %v1370
      %1449 = vst.msk [vmem:[#allocation3 + $0x98] sm:$0xff] %vm1429, %v1372
      %1450 = vst.msk [vmem:[#allocation3 + $0xa0] sm:$0xff] %vm1429, %v1374
      %1451 = vst.msk [vmem:[#allocation3 + $0xa8] sm:$0xff] %vm1429, %v1376
      %1452 = vst.msk [vmem:[#allocation3 + $0xb0] sm:$0xff] %vm1429, %v1378
      %1453 = vst.msk [vmem:[#allocation3 + $0xb8] sm:$0xff] %vm1429, %v1380
      %1454 = vst.msk [vmem:[#allocation3 + $0xc0] sm:$0xff] %vm1429, %v1382
      %1455 = vst.msk [vmem:[#allocation3 + $0xc8] sm:$0xff] %vm1429, %v1384
      %1456 = vst.msk [vmem:[#allocation3 + $0xd0] sm:$0xff] %vm1429, %v1386
      %1457 = vst.msk [vmem:[#allocation3 + $0xd8] sm:$0xff] %vm1429, %v1388
      %1458 = vst.msk [vmem:[#allocation3 + $0xe0] sm:$0xff] %vm1429, %v1390
      %1459 = vst.msk [vmem:[#allocation3 + $0xe8] sm:$0xff] %vm1429, %v1392
      %1460 = vst.msk [vmem:[#allocation3 + $0xf0] sm:$0xff] %vm1429, %v1394
      %1461 = vst.msk [vmem:[#allocation3 + $0xf8] sm:$0xff] %vm1429, %v1396
      %1464 = vrot.lane.b32.xlu0 %v514, 24
      %v1465 = vpop.permute.xlu0 %1464
      %1466 = vrot.lane.b32.xlu0 %v515, 24
      %v1467 = vpop.permute.xlu0 %1466
      %1468 = vrot.lane.b32.xlu0 %v517, 24
      %v1469 = vpop.permute.xlu0 %1468
      %1470 = vrot.lane.b32.xlu0 %v518, 24
      %v1471 = vpop.permute.xlu0 %1470
      %1472 = vrot.lane.b32.xlu0 %v520, 24
      %v1473 = vpop.permute.xlu0 %1472
      %1474 = vrot.lane.b32.xlu0 %v521, 24
      %v1475 = vpop.permute.xlu0 %1474
      %1476 = vrot.lane.b32.xlu0 %v523, 24
      %v1477 = vpop.permute.xlu0 %1476
      %1478 = vrot.lane.b32.xlu0 %v524, 24
      %v1479 = vpop.permute.xlu0 %1478
      %1480 = vrot.lane.b32.xlu0 %v526, 24
      %v1481 = vpop.permute.xlu0 %1480
      %1482 = vrot.lane.b32.xlu0 %v527, 24
      %v1483 = vpop.permute.xlu0 %1482
      %1484 = vrot.lane.b32.xlu0 %v529, 24
      %v1485 = vpop.permute.xlu0 %1484
      %1486 = vrot.lane.b32.xlu0 %v530, 24
      %v1487 = vpop.permute.xlu0 %1486
      %1488 = vrot.lane.b32.xlu0 %v532, 24
      %v1489 = vpop.permute.xlu0 %1488
      %1490 = vrot.lane.b32.xlu0 %v533, 24
      %v1491 = vpop.permute.xlu0 %1490
      %1492 = vrot.lane.b32.xlu0 %v535, 24
      %v1493 = vpop.permute.xlu0 %1492
      %1494 = vrot.lane.b32.xlu0 %v536, 24
      %v1495 = vpop.permute.xlu0 %1494
      %1496 = vrot.lane.b32.xlu0 %v538, 24
      %v1497 = vpop.permute.xlu0 %1496
      %1498 = vrot.lane.b32.xlu0 %v539, 24
      %v1499 = vpop.permute.xlu0 %1498
      %1500 = vrot.lane.b32.xlu0 %v541, 24
      %v1501 = vpop.permute.xlu0 %1500
      %1502 = vrot.lane.b32.xlu0 %v542, 24
      %v1503 = vpop.permute.xlu0 %1502
      %1504 = vrot.lane.b32.xlu0 %v544, 24
      %v1505 = vpop.permute.xlu0 %1504
      %1506 = vrot.lane.b32.xlu0 %v545, 24
      %v1507 = vpop.permute.xlu0 %1506
      %1508 = vrot.lane.b32.xlu0 %v547, 24
      %v1509 = vpop.permute.xlu0 %1508
      %1510 = vrot.lane.b32.xlu0 %v548, 24
      %v1511 = vpop.permute.xlu0 %1510
      %1512 = vrot.lane.b32.xlu0 %v550, 24
      %v1513 = vpop.permute.xlu0 %1512
      %1514 = vrot.lane.b32.xlu0 %v551, 24
      %v1515 = vpop.permute.xlu0 %1514
      %1516 = vrot.lane.b32.xlu0 %v553, 24
      %v1517 = vpop.permute.xlu0 %1516
      %1518 = vrot.lane.b32.xlu0 %v554, 24
      %v1519 = vpop.permute.xlu0 %1518
      %1520 = vrot.lane.b32.xlu0 %v556, 24
      %v1521 = vpop.permute.xlu0 %1520
      %1522 = vrot.lane.b32.xlu0 %v557, 24
      %v1523 = vpop.permute.xlu0 %1522
      %1524 = vrot.lane.b32.xlu0 %v559, 24
      %v1525 = vpop.permute.xlu0 %1524
      %1526 = vrot.lane.b32.xlu0 %v560, 24
      %v1527 = vpop.permute.xlu0 %1526
      %vm1560 = vcmask 228544
      %1561 = vst.msk [vmem:[#allocation3] sm:$0xff] %vm1560, %v1465
      %1562 = vst.msk [vmem:[#allocation3 + $0x8] sm:$0xff] %vm1560, %v1467
      %1563 = vst.msk [vmem:[#allocation3 + $0x10] sm:$0xff] %vm1560, %v1469
      %1564 = vst.msk [vmem:[#allocation3 + $0x18] sm:$0xff] %vm1560, %v1471
      %1565 = vst.msk [vmem:[#allocation3 + $0x20] sm:$0xff] %vm1560, %v1473
      %1566 = vst.msk [vmem:[#allocation3 + $0x28] sm:$0xff] %vm1560, %v1475
      %1567 = vst.msk [vmem:[#allocation3 + $0x30] sm:$0xff] %vm1560, %v1477
      %1568 = vst.msk [vmem:[#allocation3 + $0x38] sm:$0xff] %vm1560, %v1479
      %1569 = vst.msk [vmem:[#allocation3 + $0x40] sm:$0xff] %vm1560, %v1481
      %1570 = vst.msk [vmem:[#allocation3 + $0x48] sm:$0xff] %vm1560, %v1483
      %1571 = vst.msk [vmem:[#allocation3 + $0x50] sm:$0xff] %vm1560, %v1485
      %1572 = vst.msk [vmem:[#allocation3 + $0x58] sm:$0xff] %vm1560, %v1487
      %1573 = vst.msk [vmem:[#allocation3 + $0x60] sm:$0xff] %vm1560, %v1489
      %1574 = vst.msk [vmem:[#allocation3 + $0x68] sm:$0xff] %vm1560, %v1491
      %1575 = vst.msk [vmem:[#allocation3 + $0x70] sm:$0xff] %vm1560, %v1493
      %1576 = vst.msk [vmem:[#allocation3 + $0x78] sm:$0xff] %vm1560, %v1495
      %1577 = vst.msk [vmem:[#allocation3 + $0x80] sm:$0xff] %vm1560, %v1497
      %1578 = vst.msk [vmem:[#allocation3 + $0x88] sm:$0xff] %vm1560, %v1499
      %1579 = vst.msk [vmem:[#allocation3 + $0x90] sm:$0xff] %vm1560, %v1501
      %1580 = vst.msk [vmem:[#allocation3 + $0x98] sm:$0xff] %vm1560, %v1503
      %1581 = vst.msk [vmem:[#allocation3 + $0xa0] sm:$0xff] %vm1560, %v1505
      %1582 = vst.msk [vmem:[#allocation3 + $0xa8] sm:$0xff] %vm1560, %v1507
      %1583 = vst.msk [vmem:[#allocation3 + $0xb0] sm:$0xff] %vm1560, %v1509
      %1584 = vst.msk [vmem:[#allocation3 + $0xb8] sm:$0xff] %vm1560, %v1511
      %1585 = vst.msk [vmem:[#allocation3 + $0xc0] sm:$0xff] %vm1560, %v1513
      %1586 = vst.msk [vmem:[#allocation3 + $0xc8] sm:$0xff] %vm1560, %v1515
      %1587 = vst.msk [vmem:[#allocation3 + $0xd0] sm:$0xff] %vm1560, %v1517
      %1588 = vst.msk [vmem:[#allocation3 + $0xd8] sm:$0xff] %vm1560, %v1519
      %1589 = vst.msk [vmem:[#allocation3 + $0xe0] sm:$0xff] %vm1560, %v1521
      %1590 = vst.msk [vmem:[#allocation3 + $0xe8] sm:$0xff] %vm1560, %v1523
      %1591 = vst.msk [vmem:[#allocation3 + $0xf0] sm:$0xff] %vm1560, %v1525
      %1592 = vst.msk [vmem:[#allocation3 + $0xf8] sm:$0xff] %vm1560, %v1527
      %v1594 = vrot.slane %v559, 1
      %v1595 = vrot.slane %v560, 1
      %v1596 = vsel %vm642, %v1594, %v1595
      %v1597 = vrot.slane %v561, 1
      %v1598 = vsel %vm642, %v1595, %v1597
      %1599 = vrot.lane.b32.xlu0 %v655, 28
      %v1600 = vpop.permute.xlu0 %1599
      %1601 = vrot.lane.b32.xlu0 %v657, 28
      %v1602 = vpop.permute.xlu0 %1601
      %1603 = vrot.lane.b32.xlu0 %v660, 28
      %v1604 = vpop.permute.xlu0 %1603
      %1605 = vrot.lane.b32.xlu0 %v662, 28
      %v1606 = vpop.permute.xlu0 %1605
      %1607 = vrot.lane.b32.xlu0 %v665, 28
      %v1608 = vpop.permute.xlu0 %1607
      %1609 = vrot.lane.b32.xlu0 %v667, 28
      %v1610 = vpop.permute.xlu0 %1609
      %1611 = vrot.lane.b32.xlu0 %v670, 28
      %v1612 = vpop.permute.xlu0 %1611
      %1613 = vrot.lane.b32.xlu0 %v672, 28
      %v1614 = vpop.permute.xlu0 %1613
      %1615 = vrot.lane.b32.xlu0 %v675, 28
      %v1616 = vpop.permute.xlu0 %1615
      %1617 = vrot.lane.b32.xlu0 %v677, 28
      %v1618 = vpop.permute.xlu0 %1617
      %1619 = vrot.lane.b32.xlu0 %v680, 28
      %v1620 = vpop.permute.xlu0 %1619
      %1621 = vrot.lane.b32.xlu0 %v682, 28
      %v1622 = vpop.permute.xlu0 %1621
      %1623 = vrot.lane.b32.xlu0 %v685, 28
      %v1624 = vpop.permute.xlu0 %1623
      %1625 = vrot.lane.b32.xlu0 %v687, 28
      %v1626 = vpop.permute.xlu0 %1625
      %1627 = vrot.lane.b32.xlu0 %v690, 28
      %v1628 = vpop.permute.xlu0 %1627
      %1629 = vrot.lane.b32.xlu0 %v692, 28
      %v1630 = vpop.permute.xlu0 %1629
      %1631 = vrot.lane.b32.xlu0 %v695, 28
      %v1632 = vpop.permute.xlu0 %1631
      %1633 = vrot.lane.b32.xlu0 %v697, 28
      %v1634 = vpop.permute.xlu0 %1633
      %1635 = vrot.lane.b32.xlu0 %v700, 28
      %v1636 = vpop.permute.xlu0 %1635
      %1637 = vrot.lane.b32.xlu0 %v702, 28
      %v1638 = vpop.permute.xlu0 %1637
      %1639 = vrot.lane.b32.xlu0 %v705, 28
      %v1640 = vpop.permute.xlu0 %1639
      %1641 = vrot.lane.b32.xlu0 %v707, 28
      %v1642 = vpop.permute.xlu0 %1641
      %1643 = vrot.lane.b32.xlu0 %v710, 28
      %v1644 = vpop.permute.xlu0 %1643
      %1645 = vrot.lane.b32.xlu0 %v712, 28
      %v1646 = vpop.permute.xlu0 %1645
      %1647 = vrot.lane.b32.xlu0 %v715, 28
      %v1648 = vpop.permute.xlu0 %1647
      %1649 = vrot.lane.b32.xlu0 %v717, 28
      %v1650 = vpop.permute.xlu0 %1649
      %1651 = vrot.lane.b32.xlu0 %v720, 28
      %v1652 = vpop.permute.xlu0 %1651
      %1653 = vrot.lane.b32.xlu0 %v722, 28
      %v1654 = vpop.permute.xlu0 %1653
      %1655 = vrot.lane.b32.xlu0 %v1196, 28
      %v1656 = vpop.permute.xlu0 %1655
      %1657 = vrot.lane.b32.xlu0 %v1198, 28
      %v1658 = vpop.permute.xlu0 %1657
      %1659 = vrot.lane.b32.xlu0 %v1596, 28
      %v1660 = vpop.permute.xlu0 %1659
      %1661 = vrot.lane.b32.xlu0 %v1598, 28
      %v1662 = vpop.permute.xlu0 %1661
      %vm1695 = vcmask 261344
      %1696 = vst.msk [vmem:[#allocation3] sm:$0xff] %vm1695, %v1600
      %1697 = vst.msk [vmem:[#allocation3 + $0x8] sm:$0xff] %vm1695, %v1602
      %1698 = vst.msk [vmem:[#allocation3 + $0x10] sm:$0xff] %vm1695, %v1604
      %1699 = vst.msk [vmem:[#allocation3 + $0x18] sm:$0xff] %vm1695, %v1606
      %1700 = vst.msk [vmem:[#allocation3 + $0x20] sm:$0xff] %vm1695, %v1608
      %1701 = vst.msk [vmem:[#allocation3 + $0x28] sm:$0xff] %vm1695, %v1610
      %1702 = vst.msk [vmem:[#allocation3 + $0x30] sm:$0xff] %vm1695, %v1612
      %1703 = vst.msk [vmem:[#allocation3 + $0x38] sm:$0xff] %vm1695, %v1614
      %1704 = vst.msk [vmem:[#allocation3 + $0x40] sm:$0xff] %vm1695, %v1616
      %1705 = vst.msk [vmem:[#allocation3 + $0x48] sm:$0xff] %vm1695, %v1618
      %1706 = vst.msk [vmem:[#allocation3 + $0x50] sm:$0xff] %vm1695, %v1620
      %1707 = vst.msk [vmem:[#allocation3 + $0x58] sm:$0xff] %vm1695, %v1622
      %1708 = vst.msk [vmem:[#allocation3 + $0x60] sm:$0xff] %vm1695, %v1624
      %1709 = vst.msk [vmem:[#allocation3 + $0x68] sm:$0xff] %vm1695, %v1626
      %1710 = vst.msk [vmem:[#allocation3 + $0x70] sm:$0xff] %vm1695, %v1628
      %1711 = vst.msk [vmem:[#allocation3 + $0x78] sm:$0xff] %vm1695, %v1630
      %1712 = vst.msk [vmem:[#allocation3 + $0x80] sm:$0xff] %vm1695, %v1632
      %1713 = vst.msk [vmem:[#allocation3 + $0x88] sm:$0xff] %vm1695, %v1634
      %1714 = vst.msk [vmem:[#allocation3 + $0x90] sm:$0xff] %vm1695, %v1636
      %1715 = vst.msk [vmem:[#allocation3 + $0x98] sm:$0xff] %vm1695, %v1638
      %1716 = vst.msk [vmem:[#allocation3 + $0xa0] sm:$0xff] %vm1695, %v1640
      %1717 = vst.msk [vmem:[#allocation3 + $0xa8] sm:$0xff] %vm1695, %v1642
      %1718 = vst.msk [vmem:[#allocation3 + $0xb0] sm:$0xff] %vm1695, %v1644
      %1719 = vst.msk [vmem:[#allocation3 + $0xb8] sm:$0xff] %vm1695, %v1646
      %1720 = vst.msk [vmem:[#allocation3 + $0xc0] sm:$0xff] %vm1695, %v1648
      %1721 = vst.msk [vmem:[#allocation3 + $0xc8] sm:$0xff] %vm1695, %v1650
      %1722 = vst.msk [vmem:[#allocation3 + $0xd0] sm:$0xff] %vm1695, %v1652
      %1723 = vst.msk [vmem:[#allocation3 + $0xd8] sm:$0xff] %vm1695, %v1654
      %1724 = vst.msk [vmem:[#allocation3 + $0xe0] sm:$0xff] %vm1695, %v1656
      %1725 = vst.msk [vmem:[#allocation3 + $0xe8] sm:$0xff] %vm1695, %v1658
      %1726 = vst.msk [vmem:[#allocation3 + $0xf0] sm:$0xff] %vm1695, %v1660
      %1727 = vst.msk [vmem:[#allocation3 + $0xf8] sm:$0xff] %vm1695, %v1662
      %v1728 = vrot.slane %v559, 2
      %v1729 = vrot.slane %v560, 2
      %v1730 = vsel %vm852, %v1728, %v1729
      %v1731 = vrot.slane %v561, 2
      %v1732 = vsel %vm852, %v1729, %v1731
      %1733 = vrot.lane.b32.xlu0 %v865, 32
      %v1734 = vpop.permute.xlu0 %1733
      %1735 = vrot.lane.b32.xlu0 %v867, 32
      %v1736 = vpop.permute.xlu0 %1735
      %1737 = vrot.lane.b32.xlu0 %v870, 32
      %v1738 = vpop.permute.xlu0 %1737
      %1739 = vrot.lane.b32.xlu0 %v872, 32
      %v1740 = vpop.permute.xlu0 %1739
      %1741 = vrot.lane.b32.xlu0 %v875, 32
      %v1742 = vpop.permute.xlu0 %1741
      %1743 = vrot.lane.b32.xlu0 %v877, 32
      %v1744 = vpop.permute.xlu0 %1743
      %1745 = vrot.lane.b32.xlu0 %v880, 32
      %v1746 = vpop.permute.xlu0 %1745
      %1747 = vrot.lane.b32.xlu0 %v882, 32
      %v1748 = vpop.permute.xlu0 %1747
      %1749 = vrot.lane.b32.xlu0 %v885, 32
      %v1750 = vpop.permute.xlu0 %1749
      %1751 = vrot.lane.b32.xlu0 %v887, 32
      %v1752 = vpop.permute.xlu0 %1751
      %1753 = vrot.lane.b32.xlu0 %v890, 32
      %v1754 = vpop.permute.xlu0 %1753
      %1755 = vrot.lane.b32.xlu0 %v892, 32
      %v1756 = vpop.permute.xlu0 %1755
      %1757 = vrot.lane.b32.xlu0 %v895, 32
      %v1758 = vpop.permute.xlu0 %1757
      %1759 = vrot.lane.b32.xlu0 %v897, 32
      %v1760 = vpop.permute.xlu0 %1759
      %1761 = vrot.lane.b32.xlu0 %v900, 32
      %v1762 = vpop.permute.xlu0 %1761
      %1763 = vrot.lane.b32.xlu0 %v902, 32
      %v1764 = vpop.permute.xlu0 %1763
      %1765 = vrot.lane.b32.xlu0 %v905, 32
      %v1766 = vpop.permute.xlu0 %1765
      %1767 = vrot.lane.b32.xlu0 %v907, 32
      %v1768 = vpop.permute.xlu0 %1767
      %1769 = vrot.lane.b32.xlu0 %v910, 32
      %v1770 = vpop.permute.xlu0 %1769
      %1771 = vrot.lane.b32.xlu0 %v912, 32
      %v1772 = vpop.permute.xlu0 %1771
      %1773 = vrot.lane.b32.xlu0 %v915, 32
      %v1774 = vpop.permute.xlu0 %1773
      %1775 = vrot.lane.b32.xlu0 %v917, 32
      %v1776 = vpop.permute.xlu0 %1775
      %1777 = vrot.lane.b32.xlu0 %v920, 32
      %v1778 = vpop.permute.xlu0 %1777
      %1779 = vrot.lane.b32.xlu0 %v922, 32
      %v1780 = vpop.permute.xlu0 %1779
      %1781 = vrot.lane.b32.xlu0 %v925, 32
      %v1782 = vpop.permute.xlu0 %1781
      %1783 = vrot.lane.b32.xlu0 %v927, 32
      %v1784 = vpop.permute.xlu0 %1783
      %1785 = vrot.lane.b32.xlu0 %v930, 32
      %v1786 = vpop.permute.xlu0 %1785
      %1787 = vrot.lane.b32.xlu0 %v932, 32
      %v1788 = vpop.permute.xlu0 %1787
      %1789 = vrot.lane.b32.xlu0 %v1330, 32
      %v1790 = vpop.permute.xlu0 %1789
      %1791 = vrot.lane.b32.xlu0 %v1332, 32
      %v1792 = vpop.permute.xlu0 %1791
      %1793 = vrot.lane.b32.xlu0 %v1730, 32
      %v1794 = vpop.permute.xlu0 %1793
      %1795 = vrot.lane.b32.xlu0 %v1732, 32
      %v1796 = vpop.permute.xlu0 %1795
      %vm1829 = vcmask 294144
      %1830 = vst.msk [vmem:[#allocation3] sm:$0xff] %vm1829, %v1734
      %1831 = vst.msk [vmem:[#allocation3 + $0x8] sm:$0xff] %vm1829, %v1736
      %1832 = vst.msk [vmem:[#allocation3 + $0x10] sm:$0xff] %vm1829, %v1738
      %1833 = vst.msk [vmem:[#allocation3 + $0x18] sm:$0xff] %vm1829, %v1740
      %1834 = vst.msk [vmem:[#allocation3 + $0x20] sm:$0xff] %vm1829, %v1742
      %1835 = vst.msk [vmem:[#allocation3 + $0x28] sm:$0xff] %vm1829, %v1744
      %1836 = vst.msk [vmem:[#allocation3 + $0x30] sm:$0xff] %vm1829, %v1746
      %1837 = vst.msk [vmem:[#allocation3 + $0x38] sm:$0xff] %vm1829, %v1748
      %1838 = vst.msk [vmem:[#allocation3 + $0x40] sm:$0xff] %vm1829, %v1750
      %1839 = vst.msk [vmem:[#allocation3 + $0x48] sm:$0xff] %vm1829, %v1752
      %1840 = vst.msk [vmem:[#allocation3 + $0x50] sm:$0xff] %vm1829, %v1754
      %1841 = vst.msk [vmem:[#allocation3 + $0x58] sm:$0xff] %vm1829, %v1756
      %1842 = vst.msk [vmem:[#allocation3 + $0x60] sm:$0xff] %vm1829, %v1758
      %1843 = vst.msk [vmem:[#allocation3 + $0x68] sm:$0xff] %vm1829, %v1760
      %1844 = vst.msk [vmem:[#allocation3 + $0x70] sm:$0xff] %vm1829, %v1762
      %1845 = vst.msk [vmem:[#allocation3 + $0x78] sm:$0xff] %vm1829, %v1764
      %1846 = vst.msk [vmem:[#allocation3 + $0x80] sm:$0xff] %vm1829, %v1766
      %1847 = vst.msk [vmem:[#allocation3 + $0x88] sm:$0xff] %vm1829, %v1768
      %1848 = vst.msk [vmem:[#allocation3 + $0x90] sm:$0xff] %vm1829, %v1770
      %1849 = vst.msk [vmem:[#allocation3 + $0x98] sm:$0xff] %vm1829, %v1772
      %1850 = vst.msk [vmem:[#allocation3 + $0xa0] sm:$0xff] %vm1829, %v1774
      %1851 = vst.msk [vmem:[#allocation3 + $0xa8] sm:$0xff] %vm1829, %v1776
      %1852 = vst.msk [vmem:[#allocation3 + $0xb0] sm:$0xff] %vm1829, %v1778
      %1853 = vst.msk [vmem:[#allocation3 + $0xb8] sm:$0xff] %vm1829, %v1780
      %1854 = vst.msk [vmem:[#allocation3 + $0xc0] sm:$0xff] %vm1829, %v1782
      %1855 = vst.msk [vmem:[#allocation3 + $0xc8] sm:$0xff] %vm1829, %v1784
      %1856 = vst.msk [vmem:[#allocation3 + $0xd0] sm:$0xff] %vm1829, %v1786
      %1857 = vst.msk [vmem:[#allocation3 + $0xd8] sm:$0xff] %vm1829, %v1788
      %1858 = vst.msk [vmem:[#allocation3 + $0xe0] sm:$0xff] %vm1829, %v1790
      %1859 = vst.msk [vmem:[#allocation3 + $0xe8] sm:$0xff] %vm1829, %v1792
      %1860 = vst.msk [vmem:[#allocation3 + $0xf0] sm:$0xff] %vm1829, %v1794
      %1861 = vst.msk [vmem:[#allocation3 + $0xf8] sm:$0xff] %vm1829, %v1796
      %v1862 = vld [vmem:[#allocation3] sm:$0xff]
      %v1863 = vld [vmem:[#allocation3 + $0x8] sm:$0xff]
      %v1864 = vld [vmem:[#allocation3 + $0x10] sm:$0xff]
      %v1865 = vld [vmem:[#allocation3 + $0x18] sm:$0xff]
      %v1866 = vld [vmem:[#allocation3 + $0x20] sm:$0xff]
      %v1867 = vld [vmem:[#allocation3 + $0x28] sm:$0xff]
      %v1868 = vld [vmem:[#allocation3 + $0x30] sm:$0xff]
      %v1869 = vld [vmem:[#allocation3 + $0x38] sm:$0xff]
      %v1870 = vld [vmem:[#allocation3 + $0x40] sm:$0xff]
      %v1871 = vld [vmem:[#allocation3 + $0x48] sm:$0xff]
      %v1872 = vld [vmem:[#allocation3 + $0x50] sm:$0xff]
      %v1873 = vld [vmem:[#allocation3 + $0x58] sm:$0xff]
      %v1874 = vld [vmem:[#allocation3 + $0x60] sm:$0xff]
      %v1875 = vld [vmem:[#allocation3 + $0x68] sm:$0xff]
      %v1876 = vld [vmem:[#allocation3 + $0x70] sm:$0xff]
      %v1877 = vld [vmem:[#allocation3 + $0x78] sm:$0xff]
      %v1878 = vld [vmem:[#allocation3 + $0x80] sm:$0xff]
      %v1879 = vld [vmem:[#allocation3 + $0x88] sm:$0xff]
      %v1880 = vld [vmem:[#allocation3 + $0x90] sm:$0xff]
      %v1881 = vld [vmem:[#allocation3 + $0x98] sm:$0xff]
      %v1882 = vld [vmem:[#allocation3 + $0xa0] sm:$0xff]
      %v1883 = vld [vmem:[#allocation3 + $0xa8] sm:$0xff]
      %v1884 = vld [vmem:[#allocation3 + $0xb0] sm:$0xff]
      %v1885 = vld [vmem:[#allocation3 + $0xb8] sm:$0xff]
      %v1886 = vld [vmem:[#allocation3 + $0xc0] sm:$0xff]
      %v1887 = vld [vmem:[#allocation3 + $0xc8] sm:$0xff]
      %v1888 = vld [vmem:[#allocation3 + $0xd0] sm:$0xff]
      %v1889 = vld [vmem:[#allocation3 + $0xd8] sm:$0xff]
      %v1890 = vld [vmem:[#allocation3 + $0xe0] sm:$0xff]
      %v1891 = vld [vmem:[#allocation3 + $0xe8] sm:$0xff]
      %v1892 = vld [vmem:[#allocation3 + $0xf0] sm:$0xff]
      %v1893 = vld [vmem:[#allocation3 + $0xf8] sm:$0xff]
      %v1894 = vld [vmem:[%s1] sm:$0xff]
      %v1895 = vld [vmem:[%s1 + $0x8] sm:$0xff]
      %v1896 = vld [vmem:[%s1 + $0x10] sm:$0xff]
      %v1897 = vld [vmem:[%s1 + $0x18] sm:$0xff]
      %v1898 = vld [vmem:[%s1 + $0x20] sm:$0xf]
      %v1899 = vld [vmem:[%s2] sm:$0x1]
      %v1901 = vlaneseq
      %v1902 = vshrl.u32 %v1901, 7
      %v1903 = vsub.s32 0, %v1902
      %v1904 = vrot.slane %v1899, %v1903
      %vm1906 = vcmask 293888
      %v1908 = vsel %vm1906, %v1862, 0
      %v1911 = vsel %vm1906, %v1863, 0
      %v1914 = vsel %vm1906, %v1864, 0
      %v1917 = vsel %vm1906, %v1865, 0
      %v1920 = vsel %vm1906, %v1866, 0
      %v1923 = vsel %vm1906, %v1867, 0
      %v1926 = vsel %vm1906, %v1868, 0
      %v1929 = vsel %vm1906, %v1869, 0
      %v1932 = vsel %vm1906, %v1870, 0
      %v1935 = vsel %vm1906, %v1871, 0
      %v1938 = vsel %vm1906, %v1872, 0
      %v1941 = vsel %vm1906, %v1873, 0
      %v1944 = vsel %vm1906, %v1874, 0
      %v1947 = vsel %vm1906, %v1875, 0
      %v1950 = vsel %vm1906, %v1876, 0
      %v1953 = vsel %vm1906, %v1877, 0
      %v1956 = vsel %vm1906, %v1878, 0
      %v1959 = vsel %vm1906, %v1879, 0
      %v1962 = vsel %vm1906, %v1880, 0
      %v1965 = vsel %vm1906, %v1881, 0
      %v1968 = vsel %vm1906, %v1882, 0
      %v1971 = vsel %vm1906, %v1883, 0
      %v1974 = vsel %vm1906, %v1884, 0
      %v1977 = vsel %vm1906, %v1885, 0
      %v1980 = vsel %vm1906, %v1886, 0
      %v1983 = vsel %vm1906, %v1887, 0
      %v1986 = vsel %vm1906, %v1888, 0
      %v1989 = vsel %vm1906, %v1889, 0
      %v1992 = vsel %vm1906, %v1890, 0
      %v1995 = vsel %vm1906, %v1891, 0
      %v1998 = vsel %vm1906, %v1892, 0
      %v2001 = vsel %vm1906, %v1893, 0
      %vm2003 = vcmask 1043456
      %v2005 = vsel %vm2003, %v1898, 0
      %2007 = vmatprep.subr.mxu0 0.0
      %2008 = vmatpush1.msra.mxu0 %v1894
      %2009 = vmatprep.subr.mxu0 0.0
      %2010 = vmatpush1.msra.mxu0 %v1895
      %2011 = vmatprep.subr.mxu0 0.0
      %2012 = vmatpush1.msra.mxu0 %v1896
      %2013 = vmatprep.subr.mxu0 0.0
      %2014 = vmatpush1.msra.mxu0 %v1897
      %2015 = vmatprep.subr.mxu0 0.0
      %2016 = vmatpush1.msra.mxu0 %v2005
      %2017 = vmatprep.subr.mxu0 0.0
      %2018 = vmatpush1.msra.mxu0 0.0
      %2019 = vmatprep.subr.mxu0 0.0
      %2020 = vmatpush1.msra.mxu0 0.0
      %2021 = vmatprep.subr.mxu0 0.0
      %2022 = vmatpush1.msra.mxu0 0.0
      %2023 = vmatprep.subr.mxu0 0.0
      %2024 = vmatpush1.msra.mxu0 0.0
      %2025 = vmatprep.subr.mxu0 0.0
      %2026 = vmatpush1.msra.mxu0 0.0
      %2027 = vmatprep.subr.mxu0 0.0
      %2028 = vmatpush1.msra.mxu0 0.0
      %2029 = vmatprep.subr.mxu0 0.0
      %2030 = vmatpush1.msra.mxu0 0.0
      %2031 = vmatprep.subr.mxu0 0.0
      %2032 = vmatpush1.msra.mxu0 0.0
      %2033 = vmatprep.subr.mxu0 0.0
      %2034 = vmatpush1.msra.mxu0 0.0
      %2035 = vmatprep.subr.mxu0 0.0
      %2036 = vmatpush1.msra.mxu0 0.0
      %2037 = vmatprep.subr.mxu0 0.0
      %2038 = vmatpush1.msra.mxu0 0.0
      %2039 = vmatprep.subr.mxu0 0.0
      %2040 = vmatpush1.msra.mxu0 0.0
      %2041 = vmatprep.subr.mxu0 0.0
      %2042 = vmatpush1.msra.mxu0 0.0
      %2043 = vmatprep.subr.mxu0 0.0
      %2044 = vmatpush1.msra.mxu0 0.0
      %2045 = vmatprep.subr.mxu0 0.0
      %2046 = vmatpush1.msra.mxu0 0.0
      %2047 = vmatprep.subr.mxu0 0.0
      %2048 = vmatpush1.msra.mxu0 0.0
      %2049 = vmatprep.subr.mxu0 0.0
      %2050 = vmatpush1.msra.mxu0 0.0
      %2051 = vmatprep.subr.mxu0 0.0
      %2052 = vmatpush1.msra.mxu0 0.0
      %2053 = vmatprep.subr.mxu0 0.0
      %2054 = vmatpush1.msra.mxu0 0.0
      %2055 = vmatprep.subr.mxu0 0.0
      %2056 = vmatpush1.msra.mxu0 0.0
      %2057 = vmatprep.subr.mxu0 0.0
      %2058 = vmatpush1.msra.mxu0 0.0
      %2059 = vmatprep.subr.mxu0 0.0
      %2060 = vmatpush1.msra.mxu0 0.0
      %2061 = vmatprep.subr.mxu0 0.0
      %2062 = vmatpush1.msra.mxu0 0.0
      %2063 = vmatprep.subr.mxu0 0.0
      %2064 = vmatpush1.msra.mxu0 0.0
      %2065 = vmatprep.subr.mxu0 0.0
      %2066 = vmatpush1.msra.mxu0 0.0
      %2067 = vmatprep.subr.mxu0 0.0
      %2068 = vmatpush1.msra.mxu0 0.0
      %2069 = vmatprep.subr.mxu0 0.0
      %2070 = vmatpush1.msra.mxu0 0.0
      %2071 = vmatprep.mubr.f32.mxu0 0.0
      %2072 = vmatmul.mubr.f32.gmra.mrb[0].mxu0 %v1908
      %v2073 = vpop.f32.mrb[0].mxu0
      %v2074 = vadd.f32 %v1904, %v2073
      %v2075 = vpop.f32.mrb[0].mxu0
      %2076 = vmatprep.mubr.f32.mxu0 0.0
      %2077 = vmatmul.mubr.f32.gmra.mrb[0].mxu0 %v1911
      %v2078 = vpop.f32.mrb[0].mxu0
      %v2079 = vadd.f32 %v1904, %v2078
      %v2080 = vpop.f32.mrb[0].mxu0
      %2081 = vmatprep.mubr.f32.mxu0 0.0
      %2082 = vmatmul.mubr.f32.gmra.mrb[0].mxu0 %v1914
      %v2083 = vpop.f32.mrb[0].mxu0
      %v2084 = vadd.f32 %v1904, %v2083
      %v2085 = vpop.f32.mrb[0].mxu0
      %2086 = vmatprep.mubr.f32.mxu0 0.0
      %2087 = vmatmul.mubr.f32.gmra.mrb[0].mxu0 %v1917
      %v2088 = vpop.f32.mrb[0].mxu0
      %v2089 = vadd.f32 %v1904, %v2088
      %v2090 = vpop.f32.mrb[0].mxu0
      %2091 = vmatprep.mubr.f32.mxu0 0.0
      %2092 = vmatmul.mubr.f32.gmra.mrb[0].mxu0 %v1920
      %v2093 = vpop.f32.mrb[0].mxu0
      %v2094 = vadd.f32 %v1904, %v2093
      %v2095 = vpop.f32.mrb[0].mxu0
      %2096 = vmatprep.mubr.f32.mxu0 0.0
      %2097 = vmatmul.mubr.f32.gmra.mrb[0].mxu0 %v1923
      %v2098 = vpop.f32.mrb[0].mxu0
      %v2099 = vadd.f32 %v1904, %v2098
      %v2100 = vpop.f32.mrb[0].mxu0
      %2101 = vmatprep.mubr.f32.mxu0 0.0
      %2102 = vmatmul.mubr.f32.gmra.mrb[0].mxu0 %v1926
      %v2103 = vpop.f32.mrb[0].mxu0
      %v2104 = vadd.f32 %v1904, %v2103
      %v2105 = vpop.f32.mrb[0].mxu0
      %2106 = vmatprep.mubr.f32.mxu0 0.0
      %2107 = vmatmul.mubr.f32.gmra.mrb[0].mxu0 %v1929
      %v2108 = vpop.f32.mrb[0].mxu0
      %v2109 = vadd.f32 %v1904, %v2108
      %v2110 = vpop.f32.mrb[0].mxu0
      %2111 = vmatprep.mubr.f32.mxu0 0.0
      %2112 = vmatmul.mubr.f32.gmra.mrb[0].mxu0 %v1932
      %v2113 = vpop.f32.mrb[0].mxu0
      %v2114 = vadd.f32 %v1904, %v2113
      %v2115 = vpop.f32.mrb[0].mxu0
      %2116 = vmatprep.mubr.f32.mxu0 0.0
      %2117 = vmatmul.mubr.f32.gmra.mrb[0].mxu0 %v1935
      %v2118 = vpop.f32.mrb[0].mxu0
      %v2119 = vadd.f32 %v1904, %v2118
      %v2120 = vpop.f32.mrb[0].mxu0
      %2121 = vmatprep.mubr.f32.mxu0 0.0
      %2122 = vmatmul.mubr.f32.gmra.mrb[0].mxu0 %v1938
      %v2123 = vpop.f32.mrb[0].mxu0
      %v2124 = vadd.f32 %v1904, %v2123
      %v2125 = vpop.f32.mrb[0].mxu0
      %2126 = vmatprep.mubr.f32.mxu0 0.0
      %2127 = vmatmul.mubr.f32.gmra.mrb[0].mxu0 %v1941
      %v2128 = vpop.f32.mrb[0].mxu0
      %v2129 = vadd.f32 %v1904, %v2128
      %v2130 = vpop.f32.mrb[0].mxu0
      %2131 = vmatprep.mubr.f32.mxu0 0.0
      %2132 = vmatmul.mubr.f32.gmra.mrb[0].mxu0 %v1944
      %v2133 = vpop.f32.mrb[0].mxu0
      %v2134 = vadd.f32 %v1904, %v2133
      %v2135 = vpop.f32.mrb[0].mxu0
      %2136 = vmatprep.mubr.f32.mxu0 0.0
      %2137 = vmatmul.mubr.f32.gmra.mrb[0].mxu0 %v1947
      %v2138 = vpop.f32.mrb[0].mxu0
      %v2139 = vadd.f32 %v1904, %v2138
      %v2140 = vpop.f32.mrb[0].mxu0
      %2141 = vmatprep.mubr.f32.mxu0 0.0
      %2142 = vmatmul.mubr.f32.gmra.mrb[0].mxu0 %v1950
      %v2143 = vpop.f32.mrb[0].mxu0
      %v2144 = vadd.f32 %v1904, %v2143
      %v2145 = vpop.f32.mrb[0].mxu0
      %2146 = vmatprep.mubr.f32.mxu0 0.0
      %2147 = vmatmul.mubr.f32.gmra.mrb[0].mxu0 %v1953
      %v2148 = vpop.f32.mrb[0].mxu0
      %v2149 = vadd.f32 %v1904, %v2148
      %v2150 = vpop.f32.mrb[0].mxu0
      %2151 = vmatprep.mubr.f32.mxu0 0.0
      %2152 = vmatmul.mubr.f32.gmra.mrb[0].mxu0 %v1956
      %v2153 = vpop.f32.mrb[0].mxu0
      %v2154 = vadd.f32 %v1904, %v2153
      %v2155 = vpop.f32.mrb[0].mxu0
      %2156 = vmatprep.mubr.f32.mxu0 0.0
      %2157 = vmatmul.mubr.f32.gmra.mrb[0].mxu0 %v1959
      %v2158 = vpop.f32.mrb[0].mxu0
      %v2159 = vadd.f32 %v1904, %v2158
      %v2160 = vpop.f32.mrb[0].mxu0
      %2161 = vmatprep.mubr.f32.mxu0 0.0
      %2162 = vmatmul.mubr.f32.gmra.mrb[0].mxu0 %v1962
      %v2163 = vpop.f32.mrb[0].mxu0
      %v2164 = vadd.f32 %v1904, %v2163
      %v2165 = vpop.f32.mrb[0].mxu0
      %2166 = vmatprep.mubr.f32.mxu0 0.0
      %2167 = vmatmul.mubr.f32.gmra.mrb[0].mxu0 %v1965
      %v2168 = vpop.f32.mrb[0].mxu0
      %v2169 = vadd.f32 %v1904, %v2168
      %v2170 = vpop.f32.mrb[0].mxu0
      %2171 = vmatprep.mubr.f32.mxu0 0.0
      %2172 = vmatmul.mubr.f32.gmra.mrb[0].mxu0 %v1968
      %v2173 = vpop.f32.mrb[0].mxu0
      %v2174 = vadd.f32 %v1904, %v2173
      %v2175 = vpop.f32.mrb[0].mxu0
      %2176 = vmatprep.mubr.f32.mxu0 0.0
      %2177 = vmatmul.mubr.f32.gmra.mrb[0].mxu0 %v1971
      %v2178 = vpop.f32.mrb[0].mxu0
      %v2179 = vadd.f32 %v1904, %v2178
      %v2180 = vpop.f32.mrb[0].mxu0
      %2181 = vmatprep.mubr.f32.mxu0 0.0
      %2182 = vmatmul.mubr.f32.gmra.mrb[0].mxu0 %v1974
      %v2183 = vpop.f32.mrb[0].mxu0
      %v2184 = vadd.f32 %v1904, %v2183
      %v2185 = vpop.f32.mrb[0].mxu0
      %2186 = vmatprep.mubr.f32.mxu0 0.0
      %2187 = vmatmul.mubr.f32.gmra.mrb[0].mxu0 %v1977
      %v2188 = vpop.f32.mrb[0].mxu0
      %v2189 = vadd.f32 %v1904, %v2188
      %v2190 = vpop.f32.mrb[0].mxu0
      %2191 = vmatprep.mubr.f32.mxu0 0.0
      %2192 = vmatmul.mubr.f32.gmra.mrb[0].mxu0 %v1980
      %v2193 = vpop.f32.mrb[0].mxu0
      %v2194 = vadd.f32 %v1904, %v2193
      %v2195 = vpop.f32.mrb[0].mxu0
      %2196 = vmatprep.mubr.f32.mxu0 0.0
      %2197 = vmatmul.mubr.f32.gmra.mrb[0].mxu0 %v1983
      %v2198 = vpop.f32.mrb[0].mxu0
      %v2199 = vadd.f32 %v1904, %v2198
      %v2200 = vpop.f32.mrb[0].mxu0
      %2201 = vmatprep.mubr.f32.mxu0 0.0
      %2202 = vmatmul.mubr.f32.gmra.mrb[0].mxu0 %v1986
      %v2203 = vpop.f32.mrb[0].mxu0
      %v2204 = vadd.f32 %v1904, %v2203
      %v2205 = vpop.f32.mrb[0].mxu0
      %2206 = vmatprep.mubr.f32.mxu0 0.0
      %2207 = vmatmul.mubr.f32.gmra.mrb[0].mxu0 %v1989
      %v2208 = vpop.f32.mrb[0].mxu0
      %v2209 = vadd.f32 %v1904, %v2208
      %v2210 = vpop.f32.mrb[0].mxu0
      %2211 = vmatprep.mubr.f32.mxu0 0.0
      %2212 = vmatmul.mubr.f32.gmra.mrb[0].mxu0 %v1992
      %v2213 = vpop.f32.mrb[0].mxu0
      %v2214 = vadd.f32 %v1904, %v2213
      %v2215 = vpop.f32.mrb[0].mxu0
      %2216 = vmatprep.mubr.f32.mxu0 0.0
      %2217 = vmatmul.mubr.f32.gmra.mrb[0].mxu0 %v1995
      %v2218 = vpop.f32.mrb[0].mxu0
      %v2219 = vadd.f32 %v1904, %v2218
      %v2220 = vpop.f32.mrb[0].mxu0
      %2221 = vmatprep.mubr.f32.mxu0 0.0
      %2222 = vmatmul.mubr.f32.gmra.mrb[0].mxu0 %v1998
      %v2223 = vpop.f32.mrb[0].mxu0
      %v2224 = vadd.f32 %v1904, %v2223
      %v2225 = vpop.f32.mrb[0].mxu0
      %2226 = vmatprep.mubr.f32.mxu0 0.0
      %2227 = vmatmul.mubr.f32.gmra.mrb[0].mxu0 %v2001
      %v2228 = vpop.f32.mrb[0].mxu0
      %v2229 = vadd.f32 %v1904, %v2228
      %v2230 = vpop.f32.mrb[0].mxu0
      %2231 = vdwg.mxu0
      %vm2232 = vcmask 64512
      %2233 = vst.msk [vmem:[#allocation4] sm:$0xff] %vm2232, -inf
      %2234 = vst.msk [vmem:[#allocation4 + $0x8] sm:$0xff] %vm2232, -inf
      %vm2235 = vcmask 58368
      %2236 = vst.msk [vmem:[#allocation4 + $0x10] sm:$0x3] %vm2235, -inf
      %2237 = vst.msk [vmem:[#allocation4 + $0x18] sm:$0xff] %vm2232, -inf
      %2238 = vst.msk [vmem:[#allocation4 + $0x20] sm:$0xff] %vm2232, -inf
      %2239 = vst.msk [vmem:[#allocation4 + $0x28] sm:$0x3] %vm2235, -inf
      %2240 = vst.msk [vmem:[#allocation4 + $0x30] sm:$0xff] %vm2232, -inf
      %2241 = vst.msk [vmem:[#allocation4 + $0x38] sm:$0xff] %vm2232, -inf
      %2242 = vst.msk [vmem:[#allocation4 + $0x40] sm:$0x3] %vm2235, -inf
      %2243 = vst.msk [vmem:[#allocation4 + $0x48] sm:$0xff] %vm2232, -inf
      %2244 = vst.msk [vmem:[#allocation4 + $0x50] sm:$0xff] %vm2232, -inf
      %2245 = vst.msk [vmem:[#allocation4 + $0x58] sm:$0x3] %vm2235, -inf
      %2246 = vst.msk [vmem:[#allocation4 + $0x60] sm:$0xff] %vm2232, -inf
      %2247 = vst.msk [vmem:[#allocation4 + $0x68] sm:$0xff] %vm2232, -inf
      %2248 = vst.msk [vmem:[#allocation4 + $0x70] sm:$0x3] %vm2235, -inf
      %2249 = vst.msk [vmem:[#allocation4 + $0x78] sm:$0xff] %vm2232, -inf
      %2250 = vst.msk [vmem:[#allocation4 + $0x80] sm:$0xff] %vm2232, -inf
      %2251 = vst.msk [vmem:[#allocation4 + $0x88] sm:$0x3] %vm2235, -inf
      %2252 = vst.msk [vmem:[#allocation4 + $0x90] sm:$0xff] %vm2232, -inf
      %2253 = vst.msk [vmem:[#allocation4 + $0x98] sm:$0xff] %vm2232, -inf
      %2254 = vst.msk [vmem:[#allocation4 + $0xa0] sm:$0x3] %vm2235, -inf
      %2255 = vst.msk [vmem:[#allocation4 + $0xa8] sm:$0xff] %vm2232, -inf
      %2256 = vst.msk [vmem:[#allocation4 + $0xb0] sm:$0xff] %vm2232, -inf
      %2257 = vst.msk [vmem:[#allocation4 + $0xb8] sm:$0x3] %vm2235, -inf
      %2258 = vst.msk [vmem:[#allocation4 + $0xc0] sm:$0xff] %vm2232, -inf
      %2259 = vst.msk [vmem:[#allocation4 + $0xc8] sm:$0xff] %vm2232, -inf
      %2260 = vst.msk [vmem:[#allocation4 + $0xd0] sm:$0x3] %vm2235, -inf
      %2261 = vst.msk [vmem:[#allocation4 + $0xd8] sm:$0xff] %vm2232, -inf
      %2262 = vst.msk [vmem:[#allocation4 + $0xe0] sm:$0xff] %vm2232, -inf
      %2263 = vst.msk [vmem:[#allocation4 + $0xe8] sm:$0x3] %vm2235, -inf
      %2264 = vst.msk [vmem:[#allocation4 + $0xf0] sm:$0xff] %vm2232, -inf
      %2265 = vst.msk [vmem:[#allocation4 + $0xf8] sm:$0xff] %vm2232, -inf
      %2266 = vst.msk [vmem:[#allocation4 + $0x100] sm:$0x3] %vm2235, -inf
      %2267 = vst.msk [vmem:[#allocation4 + $0x108] sm:$0xff] %vm2232, -inf
      %2268 = vst.msk [vmem:[#allocation4 + $0x110] sm:$0xff] %vm2232, -inf
      %2269 = vst.msk [vmem:[#allocation4 + $0x118] sm:$0x3] %vm2235, -inf
      %2270 = vst.msk [vmem:[#allocation4 + $0x120] sm:$0xff] %vm2232, -inf
      %2271 = vst.msk [vmem:[#allocation4 + $0x128] sm:$0xff] %vm2232, -inf
      %2272 = vst.msk [vmem:[#allocation4 + $0x130] sm:$0x3] %vm2235, -inf
      %2273 = vst.msk [vmem:[#allocation4 + $0x138] sm:$0xff] %vm2232, -inf
      %2274 = vst.msk [vmem:[#allocation4 + $0x140] sm:$0xff] %vm2232, -inf
      %2275 = vst.msk [vmem:[#allocation4 + $0x148] sm:$0x3] %vm2235, -inf
      %2276 = vst.msk [vmem:[#allocation4 + $0x150] sm:$0xff] %vm2232, -inf
      %2277 = vst.msk [vmem:[#allocation4 + $0x158] sm:$0xff] %vm2232, -inf
      %2278 = vst.msk [vmem:[#allocation4 + $0x160] sm:$0x3] %vm2235, -inf
      %2279 = vst.msk [vmem:[#allocation4 + $0x168] sm:$0xff] %vm2232, -inf
      %2280 = vst.msk [vmem:[#allocation4 + $0x170] sm:$0xff] %vm2232, -inf
      %2281 = vst.msk [vmem:[#allocation4 + $0x178] sm:$0x3] %vm2235, -inf
      %2282 = vst.msk [vmem:[#allocation4 + $0x180] sm:$0xff] %vm2232, -inf
      %2283 = vst.msk [vmem:[#allocation4 + $0x188] sm:$0xff] %vm2232, -inf
      %2284 = vst.msk [vmem:[#allocation4 + $0x190] sm:$0x3] %vm2235, -inf
      %2285 = vst.msk [vmem:[#allocation4 + $0x198] sm:$0xff] %vm2232, -inf
      %2286 = vst.msk [vmem:[#allocation4 + $0x1a0] sm:$0xff] %vm2232, -inf
      %2287 = vst.msk [vmem:[#allocation4 + $0x1a8] sm:$0x3] %vm2235, -inf
      %s2288 = scalar_lea.vmem [#allocation4], 24
      %2289 = vst.msk [vmem:[%s2288 + $0x1] sm:$0xff] %vm2232, %v2074
      %2290 = vst.msk [vmem:[%s2288 + $0x9] sm:$0xff] %vm2232, %v2079
      %2291 = vst.msk [vmem:[%s2288 + $0x19] sm:$0xff] %vm2232, %v2084
      %2292 = vst.msk [vmem:[%s2288 + $0x21] sm:$0xff] %vm2232, %v2089
      %2293 = vst.msk [vmem:[%s2288 + $0x31] sm:$0xff] %vm2232, %v2094
      %2294 = vst.msk [vmem:[%s2288 + $0x39] sm:$0xff] %vm2232, %v2099
      %2295 = vst.msk [vmem:[%s2288 + $0x49] sm:$0xff] %vm2232, %v2104
      %2296 = vst.msk [vmem:[%s2288 + $0x51] sm:$0xff] %vm2232, %v2109
      %2297 = vst.msk [vmem:[%s2288 + $0x61] sm:$0xff] %vm2232, %v2114
      %2298 = vst.msk [vmem:[%s2288 + $0x69] sm:$0xff] %vm2232, %v2119
      %2299 = vst.msk [vmem:[%s2288 + $0x79] sm:$0xff] %vm2232, %v2124
      %2300 = vst.msk [vmem:[%s2288 + $0x81] sm:$0xff] %vm2232, %v2129
      %2301 = vst.msk [vmem:[%s2288 + $0x91] sm:$0xff] %vm2232, %v2134
      %2302 = vst.msk [vmem:[%s2288 + $0x99] sm:$0xff] %vm2232, %v2139
      %2303 = vst.msk [vmem:[%s2288 + $0xa9] sm:$0xff] %vm2232, %v2144
      %2304 = vst.msk [vmem:[%s2288 + $0xb1] sm:$0xff] %vm2232, %v2149
      %2305 = vst.msk [vmem:[%s2288 + $0xc1] sm:$0xff] %vm2232, %v2154
      %2306 = vst.msk [vmem:[%s2288 + $0xc9] sm:$0xff] %vm2232, %v2159
      %2307 = vst.msk [vmem:[%s2288 + $0xd9] sm:$0xff] %vm2232, %v2164
      %2308 = vst.msk [vmem:[%s2288 + $0xe1] sm:$0xff] %vm2232, %v2169
      %2309 = vst.msk [vmem:[%s2288 + $0xf1] sm:$0xff] %vm2232, %v2174
      %2310 = vst.msk [vmem:[%s2288 + $0xf9] sm:$0xff] %vm2232, %v2179
      %2311 = vst.msk [vmem:[%s2288 + $0x109] sm:$0xff] %vm2232, %v2184
      %2312 = vst.msk [vmem:[%s2288 + $0x111] sm:$0xff] %vm2232, %v2189
      %2313 = vst.msk [vmem:[%s2288 + $0x121] sm:$0xff] %vm2232, %v2194
      %2314 = vst.msk [vmem:[%s2288 + $0x129] sm:$0xff] %vm2232, %v2199
      %2315 = vst.msk [vmem:[%s2288 + $0x139] sm:$0xff] %vm2232, %v2204
      %2316 = vst.msk [vmem:[%s2288 + $0x141] sm:$0xff] %vm2232, %v2209
      %2317 = vst.msk [vmem:[%s2288 + $0x151] sm:$0xff] %vm2232, %v2214
      %2318 = vst.msk [vmem:[%s2288 + $0x159] sm:$0xff] %vm2232, %v2219
      %2319 = vst.msk [vmem:[%s2288 + $0x169] sm:$0xff] %vm2232, %v2224
      %2320 = vst.msk [vmem:[%s2288 + $0x171] sm:$0xff] %vm2232, %v2229
      %v2321 = vld [vmem:[#allocation4] sm:$0xff]
      %v2322 = vld [vmem:[#allocation4 + $0x8] sm:$0xff]
      %v2323 = vld [vmem:[#allocation4 + $0x10] sm:$0x3]
      %v2324 = vld [vmem:[#allocation4 + $0x18] sm:$0xff]
      %v2325 = vld [vmem:[#allocation4 + $0x20] sm:$0xff]
      %v2326 = vld [vmem:[#allocation4 + $0x28] sm:$0x3]
      %v2327 = vld [vmem:[#allocation4 + $0x30] sm:$0xff]
      %v2328 = vld [vmem:[#allocation4 + $0x38] sm:$0xff]
      %v2329 = vld [vmem:[#allocation4 + $0x40] sm:$0x3]
      %v2330 = vld [vmem:[#allocation4 + $0x48] sm:$0xff]
      %v2331 = vld [vmem:[#allocation4 + $0x50] sm:$0xff]
      %v2332 = vld [vmem:[#allocation4 + $0x58] sm:$0x3]
      %v2333 = vld [vmem:[#allocation4 + $0x60] sm:$0xff]
      %v2334 = vld [vmem:[#allocation4 + $0x68] sm:$0xff]
      %v2335 = vld [vmem:[#allocation4 + $0x70] sm:$0x3]
      %v2336 = vld [vmem:[#allocation4 + $0x78] sm:$0xff]
      %v2337 = vld [vmem:[#allocation4 + $0x80] sm:$0xff]
      %v2338 = vld [vmem:[#allocation4 + $0x88] sm:$0x3]
      %v2339 = vld [vmem:[#allocation4 + $0x90] sm:$0xff]
      %v2340 = vld [vmem:[#allocation4 + $0x98] sm:$0xff]
      %v2341 = vld [vmem:[#allocation4 + $0xa0] sm:$0x3]
      %v2342 = vld [vmem:[#allocation4 + $0xa8] sm:$0xff]
      %v2343 = vld [vmem:[#allocation4 + $0xb0] sm:$0xff]
      %v2344 = vld [vmem:[#allocation4 + $0xb8] sm:$0x3]
      %v2345 = vld [vmem:[#allocation4 + $0xc0] sm:$0xff]
      %v2346 = vld [vmem:[#allocation4 + $0xc8] sm:$0xff]
      %v2347 = vld [vmem:[#allocation4 + $0xd0] sm:$0x3]
      %v2348 = vld [vmem:[#allocation4 + $0xd8] sm:$0xff]
      %v2349 = vld [vmem:[#allocation4 + $0xe0] sm:$0xff]
      %v2350 = vld [vmem:[#allocation4 + $0xe8] sm:$0x3]
      %v2351 = vld [vmem:[#allocation4 + $0xf0] sm:$0xff]
      %v2352 = vld [vmem:[#allocation4 + $0xf8] sm:$0xff]
      %v2353 = vld [vmem:[#allocation4 + $0x100] sm:$0x3]
      %v2354 = vld [vmem:[#allocation4 + $0x108] sm:$0xff]
      %v2355 = vld [vmem:[#allocation4 + $0x110] sm:$0xff]
      %v2356 = vld [vmem:[#allocation4 + $0x118] sm:$0x3]
      %v2357 = vld [vmem:[#allocation4 + $0x120] sm:$0xff]
      %v2358 = vld [vmem:[#allocation4 + $0x128] sm:$0xff]
      %v2359 = vld [vmem:[#allocation4 + $0x130] sm:$0x3]
      %v2360 = vld [vmem:[#allocation4 + $0x138] sm:$0xff]
      %v2361 = vld [vmem:[#allocation4 + $0x140] sm:$0xff]
      %v2362 = vld [vmem:[#allocation4 + $0x148] sm:$0x3]
      %v2363 = vld [vmem:[#allocation4 + $0x150] sm:$0xff]
      %v2364 = vld [vmem:[#allocation4 + $0x158] sm:$0xff]
      %v2365 = vld [vmem:[#allocation4 + $0x160] sm:$0x3]
      %v2366 = vld [vmem:[#allocation4 + $0x168] sm:$0xff]
      %v2367 = vld [vmem:[#allocation4 + $0x170] sm:$0xff]
      %v2368 = vld [vmem:[#allocation4 + $0x178] sm:$0x3]
      %v2369 = vld [vmem:[#allocation4 + $0x180] sm:$0xff]
      %v2370 = vld [vmem:[#allocation4 + $0x188] sm:$0xff]
      %v2371 = vld [vmem:[#allocation4 + $0x190] sm:$0x3]
      %v2372 = vmax.f32 %v2321, %v2324
      %v2373 = vmax.f32 %v2322, %v2325
      %v2374 = vmax.f32 %v2323, %v2326
      %v2375 = vmax.f32 %v2372, %v2327
      %v2376 = vmax.f32 %v2373, %v2328
      %v2377 = vmax.f32 %v2374, %v2329
      %2378 = vst.msk [vmem:[#allocation5] sm:$0xff] %vm2232, %v2375
      %2379 = vst.msk [vmem:[#allocation5 + $0x8] sm:$0xff] %vm2232, %v2376
      %2380 = vst.msk [vmem:[#allocation5 + $0x10] sm:$0x3] %vm2235, %v2377
      %v2381 = vmax.f32 %v2327, %v2330
      %v2382 = vmax.f32 %v2328, %v2331
      %v2383 = vmax.f32 %v2329, %v2332
      %v2384 = vmax.f32 %v2381, %v2333
      %v2385 = vmax.f32 %v2382, %v2334
      %v2386 = vmax.f32 %v2383, %v2335
      %s2387 = scalar_lea.vmem [#allocation5], 24
      %2388 = vst.msk [vmem:[%s2387] sm:$0xff] %vm2232, %v2384
      %2389 = vst.msk [vmem:[%s2387 + $0x8] sm:$0xff] %vm2232, %v2385
      %2390 = vst.msk [vmem:[%s2387 + $0x10] sm:$0x3] %vm2235, %v2386
      %v2391 = vmax.f32 %v2333, %v2336
      %v2392 = vmax.f32 %v2334, %v2337
      %v2393 = vmax.f32 %v2335, %v2338
      %v2394 = vmax.f32 %v2391, %v2339
      %v2395 = vmax.f32 %v2392, %v2340
      %v2396 = vmax.f32 %v2393, %v2341
      %s2397 = scalar_lea.vmem [#allocation5], 48
      %2398 = vst.msk [vmem:[%s2397] sm:$0xff] %vm2232, %v2394
      %2399 = vst.msk [vmem:[%s2397 + $0x8] sm:$0xff] %vm2232, %v2395
      %2400 = vst.msk [vmem:[%s2397 + $0x10] sm:$0x3] %vm2235, %v2396
      %v2401 = vmax.f32 %v2339, %v2342
      %v2402 = vmax.f32 %v2340, %v2343
      %v2403 = vmax.f32 %v2341, %v2344
      %v2404 = vmax.f32 %v2401, %v2345
      %v2405 = vmax.f32 %v2402, %v2346
      %v2406 = vmax.f32 %v2403, %v2347
      %s2407 = scalar_lea.vmem [#allocation5], 72
      %2408 = vst.msk [vmem:[%s2407] sm:$0xff] %vm2232, %v2404
      %2409 = vst.msk [vmem:[%s2407 + $0x8] sm:$0xff] %vm2232, %v2405
      %2410 = vst.msk [vmem:[%s2407 + $0x10] sm:$0x3] %vm2235, %v2406
      %v2411 = vmax.f32 %v2345, %v2348
      %v2412 = vmax.f32 %v2346, %v2349
      %v2413 = vmax.f32 %v2347, %v2350
      %v2414 = vmax.f32 %v2411, %v2351
      %v2415 = vmax.f32 %v2412, %v2352
      %v2416 = vmax.f32 %v2413, %v2353
      %s2417 = scalar_lea.vmem [#allocation5], 96
      %2418 = vst.msk [vmem:[%s2417] sm:$0xff] %vm2232, %v2414
      %2419 = vst.msk [vmem:[%s2417 + $0x8] sm:$0xff] %vm2232, %v2415
      %2420 = vst.msk [vmem:[%s2417 + $0x10] sm:$0x3] %vm2235, %v2416
      %v2421 = vmax.f32 %v2351, %v2354
      %v2422 = vmax.f32 %v2352, %v2355
      %v2423 = vmax.f32 %v2353, %v2356
      %v2424 = vmax.f32 %v2421, %v2357
      %v2425 = vmax.f32 %v2422, %v2358
      %v2426 = vmax.f32 %v2423, %v2359
      %s2427 = scalar_lea.vmem [#allocation5], 120
      %2428 = vst.msk [vmem:[%s2427] sm:$0xff] %vm2232, %v2424
      %2429 = vst.msk [vmem:[%s2427 + $0x8] sm:$0xff] %vm2232, %v2425
      %2430 = vst.msk [vmem:[%s2427 + $0x10] sm:$0x3] %vm2235, %v2426
      %v2431 = vmax.f32 %v2357, %v2360
      %v2432 = vmax.f32 %v2358, %v2361
      %v2433 = vmax.f32 %v2359, %v2362
      %v2434 = vmax.f32 %v2431, %v2363
      %v2435 = vmax.f32 %v2432, %v2364
      %v2436 = vmax.f32 %v2433, %v2365
      %s2437 = scalar_lea.vmem [#allocation5], 144
      %2438 = vst.msk [vmem:[%s2437] sm:$0xff] %vm2232, %v2434
      %2439 = vst.msk [vmem:[%s2437 + $0x8] sm:$0xff] %vm2232, %v2435
      %2440 = vst.msk [vmem:[%s2437 + $0x10] sm:$0x3] %vm2235, %v2436
      %v2441 = vmax.f32 %v2363, %v2366
      %v2442 = vmax.f32 %v2364, %v2367
      %v2443 = vmax.f32 %v2365, %v2368
      %v2444 = vmax.f32 %v2441, %v2369
      %v2445 = vmax.f32 %v2442, %v2370
      %v2446 = vmax.f32 %v2443, %v2371
      %s2447 = scalar_lea.vmem [#allocation5], 168
      %2448 = vst.msk [vmem:[%s2447] sm:$0xff] %vm2232, %v2444
      %2449 = vst.msk [vmem:[%s2447 + $0x8] sm:$0xff] %vm2232, %v2445
      %2450 = vst.msk [vmem:[%s2447 + $0x10] sm:$0x3] %vm2235, %v2446
      %v2451 = vld [vmem:[#allocation5] sm:$0xff]
      %v2452 = vld [vmem:[#allocation5 + $0x8] sm:$0xff]
      %v2453 = vld [vmem:[#allocation5 + $0x10] sm:$0x3]
      %v2454 = vld [vmem:[#allocation5 + $0x18] sm:$0xff]
      %v2455 = vld [vmem:[#allocation5 + $0x20] sm:$0xff]
      %v2456 = vld [vmem:[#allocation5 + $0x28] sm:$0x3]
      %v2457 = vld [vmem:[#allocation5 + $0x30] sm:$0xff]
      %v2458 = vld [vmem:[#allocation5 + $0x38] sm:$0xff]
      %v2459 = vld [vmem:[#allocation5 + $0x40] sm:$0x3]
      %v2460 = vld [vmem:[#allocation5 + $0x48] sm:$0xff]
      %v2461 = vld [vmem:[#allocation5 + $0x50] sm:$0xff]
      %v2462 = vld [vmem:[#allocation5 + $0x58] sm:$0x3]
      %v2463 = vld [vmem:[#allocation5 + $0x60] sm:$0xff]
      %v2464 = vld [vmem:[#allocation5 + $0x68] sm:$0xff]
      %v2465 = vld [vmem:[#allocation5 + $0x70] sm:$0x3]
      %v2466 = vld [vmem:[#allocation5 + $0x78] sm:$0xff]
      %v2467 = vld [vmem:[#allocation5 + $0x80] sm:$0xff]
      %v2468 = vld [vmem:[#allocation5 + $0x88] sm:$0x3]
      %v2469 = vld [vmem:[#allocation5 + $0x90] sm:$0xff]
      %v2470 = vld [vmem:[#allocation5 + $0x98] sm:$0xff]
      %v2471 = vld [vmem:[#allocation5 + $0xa0] sm:$0x3]
      %v2472 = vld [vmem:[#allocation5 + $0xa8] sm:$0xff]
      %v2473 = vld [vmem:[#allocation5 + $0xb0] sm:$0xff]
      %v2474 = vld [vmem:[#allocation5 + $0xb8] sm:$0x3]
      %v2483 = vrot.slane %v2451, 1
      %v2484 = vrot.slane %v2454, 1
      %v2485 = vrot.slane %v2457, 1
      %v2486 = vrot.slane %v2460, 1
      %v2487 = vrot.slane %v2463, 1
      %v2488 = vrot.slane %v2466, 1
      %v2489 = vrot.slane %v2469, 1
      %v2490 = vrot.slane %v2472, 1
      %v2499 = vmax.f32 %v2451, %v2483
      %v2500 = vmax.f32 %v2454, %v2484
      %v2501 = vmax.f32 %v2457, %v2485
      %v2502 = vmax.f32 %v2460, %v2486
      %v2503 = vmax.f32 %v2463, %v2487
      %v2504 = vmax.f32 %v2466, %v2488
      %v2505 = vmax.f32 %v2469, %v2489
      %v2506 = vmax.f32 %v2472, %v2490
      %v2507 = vrot.slane %v2451, 2
      %v2508 = vrot.slane %v2454, 2
      %v2509 = vrot.slane %v2457, 2
      %v2510 = vrot.slane %v2460, 2
      %v2511 = vrot.slane %v2463, 2
      %v2512 = vrot.slane %v2466, 2
      %v2513 = vrot.slane %v2469, 2
      %v2514 = vrot.slane %v2472, 2
      %v2523 = vmax.f32 %v2499, %v2507
      %v2524 = vmax.f32 %v2500, %v2508
      %v2525 = vmax.f32 %v2501, %v2509
      %v2526 = vmax.f32 %v2502, %v2510
      %v2527 = vmax.f32 %v2503, %v2511
      %v2528 = vmax.f32 %v2504, %v2512
      %v2529 = vmax.f32 %v2505, %v2513
      %v2530 = vmax.f32 %v2506, %v2514
      %vm2531 = vcmask 57344
      %2532 = vst.msk [vmem:[#allocation6] sm:$0x1] %vm2531, %v2523
      %2533 = vst.msk [vmem:[#allocation6 + $0x8] sm:$0x1] %vm2531, %v2524
      %2534 = vst.msk [vmem:[#allocation6 + $0x10] sm:$0x1] %vm2531, %v2525
      %2535 = vst.msk [vmem:[#allocation6 + $0x18] sm:$0x1] %vm2531, %v2526
      %2536 = vst.msk [vmem:[#allocation6 + $0x20] sm:$0x1] %vm2531, %v2527
      %2537 = vst.msk [vmem:[#allocation6 + $0x28] sm:$0x1] %vm2531, %v2528
      %2538 = vst.msk [vmem:[#allocation6 + $0x30] sm:$0x1] %vm2531, %v2529
      %2539 = vst.msk [vmem:[#allocation6 + $0x38] sm:$0x1] %vm2531, %v2530
      %vm2540 = vcmask 59394
      %2541 = vst.msk [vmem:[#allocation6 - $0x1] sm:$0x4] %vm2540, %v2523
      %2542 = vst.msk [vmem:[#allocation6 + $0x7] sm:$0x4] %vm2540, %v2524
      %2543 = vst.msk [vmem:[#allocation6 + $0xf] sm:$0x4] %vm2540, %v2525
      %2544 = vst.msk [vmem:[#allocation6 + $0x17] sm:$0x4] %vm2540, %v2526
      %2545 = vst.msk [vmem:[#allocation6 + $0x1f] sm:$0x4] %vm2540, %v2527
      %2546 = vst.msk [vmem:[#allocation6 + $0x27] sm:$0x4] %vm2540, %v2528
      %2547 = vst.msk [vmem:[#allocation6 + $0x2f] sm:$0x4] %vm2540, %v2529
      %2548 = vst.msk [vmem:[#allocation6 + $0x37] sm:$0x4] %vm2540, %v2530
      %vm2549 = vcmask 61444
      %2550 = vst.msk [vmem:[#allocation6 - $0x2] sm:$0x10] %vm2549, %v2523
      %2551 = vst.msk [vmem:[#allocation6 + $0x6] sm:$0x10] %vm2549, %v2524
      %2552 = vst.msk [vmem:[#allocation6 + $0xe] sm:$0x10] %vm2549, %v2525
      %2553 = vst.msk [vmem:[#allocation6 + $0x16] sm:$0x10] %vm2549, %v2526
      %2554 = vst.msk [vmem:[#allocation6 + $0x1e] sm:$0x10] %vm2549, %v2527
      %2555 = vst.msk [vmem:[#allocation6 + $0x26] sm:$0x10] %vm2549, %v2528
      %2556 = vst.msk [vmem:[#allocation6 + $0x2e] sm:$0x10] %vm2549, %v2529
      %2557 = vst.msk [vmem:[#allocation6 + $0x36] sm:$0x10] %vm2549, %v2530
      %v2566 = vrot.slane %v2452, 2
      %v2567 = vrot.slane %v2455, 2
      %v2568 = vrot.slane %v2458, 2
      %v2569 = vrot.slane %v2461, 2
      %v2570 = vrot.slane %v2464, 2
      %v2571 = vrot.slane %v2467, 2
      %v2572 = vrot.slane %v2470, 2
      %v2573 = vrot.slane %v2473, 2
      %v2582 = vmax.f32 %v2499, %v2566
      %v2583 = vmax.f32 %v2500, %v2567
      %v2584 = vmax.f32 %v2501, %v2568
      %v2585 = vmax.f32 %v2502, %v2569
      %v2586 = vmax.f32 %v2503, %v2570
      %v2587 = vmax.f32 %v2504, %v2571
      %v2588 = vmax.f32 %v2505, %v2572
      %v2589 = vmax.f32 %v2506, %v2573
      %vm2590 = vcmask 63494
      %2591 = vst.msk [vmem:[#allocation6 - $0x3] sm:$0x40] %vm2590, %v2582
      %2592 = vst.msk [vmem:[#allocation6 + $0x5] sm:$0x40] %vm2590, %v2583
      %2593 = vst.msk [vmem:[#allocation6 + $0xd] sm:$0x40] %vm2590, %v2584
      %2594 = vst.msk [vmem:[#allocation6 + $0x15] sm:$0x40] %vm2590, %v2585
      %2595 = vst.msk [vmem:[#allocation6 + $0x1d] sm:$0x40] %vm2590, %v2586
      %2596 = vst.msk [vmem:[#allocation6 + $0x25] sm:$0x40] %vm2590, %v2587
      %2597 = vst.msk [vmem:[#allocation6 + $0x2d] sm:$0x40] %vm2590, %v2588
      %2598 = vst.msk [vmem:[#allocation6 + $0x35] sm:$0x40] %vm2590, %v2589
      %v2599 = vrot.slane %v2452, 1
      %v2600 = vrot.slane %v2455, 1
      %v2601 = vrot.slane %v2458, 1
      %v2602 = vrot.slane %v2461, 1
      %v2603 = vrot.slane %v2464, 1
      %v2604 = vrot.slane %v2467, 1
      %v2605 = vrot.slane %v2470, 1
      %v2606 = vrot.slane %v2473, 1
      %v2615 = vmax.f32 %v2452, %v2599
      %v2616 = vmax.f32 %v2455, %v2600
      %v2617 = vmax.f32 %v2458, %v2601
      %v2618 = vmax.f32 %v2461, %v2602
      %v2619 = vmax.f32 %v2464, %v2603
      %v2620 = vmax.f32 %v2467, %v2604
      %v2621 = vmax.f32 %v2470, %v2605
      %v2622 = vmax.f32 %v2473, %v2606
      %v2623 = vmax.f32 %v2615, %v2566
      %v2624 = vmax.f32 %v2616, %v2567
      %v2625 = vmax.f32 %v2617, %v2568
      %v2626 = vmax.f32 %v2618, %v2569
      %v2627 = vmax.f32 %v2619, %v2570
      %v2628 = vmax.f32 %v2620, %v2571
      %v2629 = vmax.f32 %v2621, %v2572
      %v2630 = vmax.f32 %v2622, %v2573
      %2631 = vst.msk [vmem:[#allocation6 + $0x4] sm:$0x1] %vm2531, %v2623
      %2632 = vst.msk [vmem:[#allocation6 + $0xc] sm:$0x1] %vm2531, %v2624
      %2633 = vst.msk [vmem:[#allocation6 + $0x14] sm:$0x1] %vm2531, %v2625
      %2634 = vst.msk [vmem:[#allocation6 + $0x1c] sm:$0x1] %vm2531, %v2626
      %2635 = vst.msk [vmem:[#allocation6 + $0x24] sm:$0x1] %vm2531, %v2627
      %2636 = vst.msk [vmem:[#allocation6 + $0x2c] sm:$0x1] %vm2531, %v2628
      %2637 = vst.msk [vmem:[#allocation6 + $0x34] sm:$0x1] %vm2531, %v2629
      %2638 = vst.msk [vmem:[#allocation6 + $0x3c] sm:$0x1] %vm2531, %v2630
      %2639 = vst.msk [vmem:[#allocation6 + $0x3] sm:$0x4] %vm2540, %v2623
      %2640 = vst.msk [vmem:[#allocation6 + $0xb] sm:$0x4] %vm2540, %v2624
      %2641 = vst.msk [vmem:[#allocation6 + $0x13] sm:$0x4] %vm2540, %v2625
      %2642 = vst.msk [vmem:[#allocation6 + $0x1b] sm:$0x4] %vm2540, %v2626
      %2643 = vst.msk [vmem:[#allocation6 + $0x23] sm:$0x4] %vm2540, %v2627
      %2644 = vst.msk [vmem:[#allocation6 + $0x2b] sm:$0x4] %vm2540, %v2628
      %2645 = vst.msk [vmem:[#allocation6 + $0x33] sm:$0x4] %vm2540, %v2629
      %2646 = vst.msk [vmem:[#allocation6 + $0x3b] sm:$0x4] %vm2540, %v2630
      %2647 = vst.msk [vmem:[#allocation6 + $0x2] sm:$0x10] %vm2549, %v2623
      %2648 = vst.msk [vmem:[#allocation6 + $0xa] sm:$0x10] %vm2549, %v2624
      %2649 = vst.msk [vmem:[#allocation6 + $0x12] sm:$0x10] %vm2549, %v2625
      %2650 = vst.msk [vmem:[#allocation6 + $0x1a] sm:$0x10] %vm2549, %v2626
      %2651 = vst.msk [vmem:[#allocation6 + $0x22] sm:$0x10] %vm2549, %v2627
      %2652 = vst.msk [vmem:[#allocation6 + $0x2a] sm:$0x10] %vm2549, %v2628
      %2653 = vst.msk [vmem:[#allocation6 + $0x32] sm:$0x10] %vm2549, %v2629
      %2654 = vst.msk [vmem:[#allocation6 + $0x3a] sm:$0x10] %vm2549, %v2630
      %v2663 = vrot.slane %v2453, 2
      %v2664 = vrot.slane %v2456, 2
      %v2665 = vrot.slane %v2459, 2
      %v2666 = vrot.slane %v2462, 2
      %v2667 = vrot.slane %v2465, 2
      %v2668 = vrot.slane %v2468, 2
      %v2669 = vrot.slane %v2471, 2
      %v2670 = vrot.slane %v2474, 2
      %v2679 = vmax.f32 %v2615, %v2663
      %v2680 = vmax.f32 %v2616, %v2664
      %v2681 = vmax.f32 %v2617, %v2665
      %v2682 = vmax.f32 %v2618, %v2666
      %v2683 = vmax.f32 %v2619, %v2667
      %v2684 = vmax.f32 %v2620, %v2668
      %v2685 = vmax.f32 %v2621, %v2669
      %v2686 = vmax.f32 %v2622, %v2670
      %2687 = vst.msk [vmem:[#allocation6 + $0x1] sm:$0x40] %vm2590, %v2679
      %2688 = vst.msk [vmem:[#allocation6 + $0x9] sm:$0x40] %vm2590, %v2680
      %2689 = vst.msk [vmem:[#allocation6 + $0x11] sm:$0x40] %vm2590, %v2681
      %2690 = vst.msk [vmem:[#allocation6 + $0x19] sm:$0x40] %vm2590, %v2682
      %2691 = vst.msk [vmem:[#allocation6 + $0x21] sm:$0x40] %vm2590, %v2683
      %2692 = vst.msk [vmem:[#allocation6 + $0x29] sm:$0x40] %vm2590, %v2684
      %2693 = vst.msk [vmem:[#allocation6 + $0x31] sm:$0x40] %vm2590, %v2685
      %2694 = vst.msk [vmem:[#allocation6 + $0x39] sm:$0x40] %vm2590, %v2686
      %v2695 = vld [vmem:[#allocation6] sm:$0xff]
      %v2696 = vld [vmem:[#allocation6 + $0x8] sm:$0xff]
      %v2697 = vld [vmem:[#allocation6 + $0x10] sm:$0xff]
      %v2698 = vld [vmem:[#allocation6 + $0x18] sm:$0xff]
      %v2699 = vld [vmem:[#allocation6 + $0x20] sm:$0xff]
      %v2700 = vld [vmem:[#allocation6 + $0x28] sm:$0xff]
      %v2701 = vld [vmem:[#allocation6 + $0x30] sm:$0xff]
      %v2702 = vld [vmem:[#allocation6 + $0x38] sm:$0xff]
      %2703 = vst.msk [vmem:[#allocation7] sm:$0xff] %vm2232, 0.0
      %2704 = vst.msk [vmem:[#allocation7 + $0x8] sm:$0x3] %vm2235, 0.0
      %2705 = vst.msk [vmem:[#allocation7 + $0x10] sm:$0xff] %vm2232, 0.0
      %2706 = vst.msk [vmem:[#allocation7 + $0x18] sm:$0x3] %vm2235, 0.0
      %2707 = vst.msk [vmem:[#allocation7 + $0x20] sm:$0xff] %vm2232, 0.0
      %2708 = vst.msk [vmem:[#allocation7 + $0x28] sm:$0x3] %vm2235, 0.0
      %2709 = vst.msk [vmem:[#allocation7 + $0x30] sm:$0xff] %vm2232, 0.0
      %2710 = vst.msk [vmem:[#allocation7 + $0x38] sm:$0x3] %vm2235, 0.0
      %2711 = vst.msk [vmem:[#allocation7 + $0x40] sm:$0xff] %vm2232, 0.0
      %2712 = vst.msk [vmem:[#allocation7 + $0x48] sm:$0x3] %vm2235, 0.0
      %2713 = vst.msk [vmem:[#allocation7 + $0x50] sm:$0xff] %vm2232, 0.0
      %2714 = vst.msk [vmem:[#allocation7 + $0x58] sm:$0x3] %vm2235, 0.0
      %2715 = vst.msk [vmem:[#allocation7 + $0x60] sm:$0xff] %vm2232, 0.0
      %2716 = vst.msk [vmem:[#allocation7 + $0x68] sm:$0x3] %vm2235, 0.0
      %2717 = vst.msk [vmem:[#allocation7 + $0x70] sm:$0xff] %vm2232, 0.0
      %2718 = vst.msk [vmem:[#allocation7 + $0x78] sm:$0x3] %vm2235, 0.0
      %2719 = vst.msk [vmem:[#allocation7 + $0x80] sm:$0xff] %vm2232, 0.0
      %2720 = vst.msk [vmem:[#allocation7 + $0x88] sm:$0x3] %vm2235, 0.0
      %2721 = vst.msk [vmem:[#allocation7 + $0x90] sm:$0xff] %vm2232, 0.0
      %2722 = vst.msk [vmem:[#allocation7 + $0x98] sm:$0x3] %vm2235, 0.0
      %v2723 = vmax.f32 %v2695, 0.0
      %v2724 = vmax.f32 %v2696, 0.0
      %v2725 = vmax.f32 %v2697, 0.0
      %v2726 = vmax.f32 %v2698, 0.0
      %v2727 = vmax.f32 %v2699, 0.0
      %v2728 = vmax.f32 %v2700, 0.0
      %v2729 = vmax.f32 %v2701, 0.0
      %v2730 = vmax.f32 %v2702, 0.0
      %s2731 = scalar_lea.vmem [#allocation7], 16
      %2732 = vst.msk [vmem:[%s2731 + $0x1] sm:$0xff] %vm2232, %v2723
      %2733 = vst.msk [vmem:[%s2731 + $0x11] sm:$0xff] %vm2232, %v2724
      %2734 = vst.msk [vmem:[%s2731 + $0x21] sm:$0xff] %vm2232, %v2725
      %2735 = vst.msk [vmem:[%s2731 + $0x31] sm:$0xff] %vm2232, %v2726
      %2736 = vst.msk [vmem:[%s2731 + $0x41] sm:$0xff] %vm2232, %v2727
      %2737 = vst.msk [vmem:[%s2731 + $0x51] sm:$0xff] %vm2232, %v2728
      %2738 = vst.msk [vmem:[%s2731 + $0x61] sm:$0xff] %vm2232, %v2729
      %2739 = vst.msk [vmem:[%s2731 + $0x71] sm:$0xff] %vm2232, %v2730
      %v2740 = vld [vmem:[#allocation7] sm:$0xff]
      %v2741 = vld [vmem:[#allocation7 + $0x8] sm:$0x3]
      %v2742 = vld [vmem:[#allocation7 + $0x10] sm:$0xff]
      %v2743 = vld [vmem:[#allocation7 + $0x18] sm:$0x3]
      %v2744 = vld [vmem:[#allocation7 + $0x20] sm:$0xff]
      %v2745 = vld [vmem:[#allocation7 + $0x28] sm:$0x3]
      %v2746 = vld [vmem:[#allocation7 + $0x30] sm:$0xff]
      %v2747 = vld [vmem:[#allocation7 + $0x38] sm:$0x3]
      %v2748 = vld [vmem:[#allocation7 + $0x40] sm:$0xff]
      %v2749 = vld [vmem:[#allocation7 + $0x48] sm:$0x3]
      %v2750 = vld [vmem:[#allocation7 + $0x50] sm:$0xff]
      %v2751 = vld [vmem:[#allocation7 + $0x58] sm:$0x3]
      %v2752 = vld [vmem:[#allocation7 + $0x60] sm:$0xff]
      %v2753 = vld [vmem:[#allocation7 + $0x68] sm:$0x3]
      %v2754 = vld [vmem:[#allocation7 + $0x70] sm:$0xff]
      %v2755 = vld [vmem:[#allocation7 + $0x78] sm:$0x3]
      %v2756 = vld [vmem:[#allocation7 + $0x80] sm:$0xff]
      %v2757 = vld [vmem:[#allocation7 + $0x88] sm:$0x3]
      %v2758 = vld [vmem:[#allocation7 + $0x90] sm:$0xff]
      %v2759 = vld [vmem:[#allocation7 + $0x98] sm:$0x3]
      %2760 = vst.msk [vmem:[#allocation8] sm:$0xff] %vm2232, %v2740
      %2761 = vst.msk [vmem:[#allocation8 + $0x8] sm:$0xff] %vm2232, %v2742
      %2762 = vst.msk [vmem:[#allocation8 + $0x10] sm:$0xff] %vm2232, %v2744
      %2763 = vst.msk [vmem:[#allocation8 + $0x18] sm:$0xff] %vm2232, %v2746
      %2764 = vst.msk [vmem:[#allocation8 + $0x20] sm:$0xff] %vm2232, %v2748
      %2765 = vst.msk [vmem:[#allocation8 + $0x28] sm:$0xff] %vm2232, %v2750
      %2766 = vst.msk [vmem:[#allocation8 + $0x30] sm:$0xff] %vm2232, %v2752
      %2767 = vst.msk [vmem:[#allocation8 + $0x38] sm:$0xff] %vm2232, %v2754
      %v2784 = vrot.slane %v2740, 1
      %v2785 = vrot.slane %v2741, 1
      %v2786 = vsel %vm642, %v2784, %v2785
      %v2787 = vrot.slane %v2742, 1
      %v2788 = vrot.slane %v2743, 1
      %v2789 = vsel %vm642, %v2787, %v2788
      %v2790 = vrot.slane %v2744, 1
      %v2791 = vrot.slane %v2745, 1
      %v2792 = vsel %vm642, %v2790, %v2791
      %v2793 = vrot.slane %v2746, 1
      %v2794 = vrot.slane %v2747, 1
      %v2795 = vsel %vm642, %v2793, %v2794
      %v2796 = vrot.slane %v2748, 1
      %v2797 = vrot.slane %v2749, 1
      %v2798 = vsel %vm642, %v2796, %v2797
      %v2799 = vrot.slane %v2750, 1
      %v2800 = vrot.slane %v2751, 1
      %v2801 = vsel %vm642, %v2799, %v2800
      %v2802 = vrot.slane %v2752, 1
      %v2803 = vrot.slane %v2753, 1
      %v2804 = vsel %vm642, %v2802, %v2803
      %v2805 = vrot.slane %v2754, 1
      %v2806 = vrot.slane %v2755, 1
      %v2807 = vsel %vm642, %v2805, %v2806
      %2808 = vrot.lane.b32.xlu0 %v2786, 8
      %v2809 = vpop.permute.xlu0 %2808
      %2810 = vrot.lane.b32.xlu0 %v2789, 8
      %v2811 = vpop.permute.xlu0 %2810
      %2812 = vrot.lane.b32.xlu0 %v2792, 8
      %v2813 = vpop.permute.xlu0 %2812
      %2814 = vrot.lane.b32.xlu0 %v2795, 8
      %v2815 = vpop.permute.xlu0 %2814
      %2816 = vrot.lane.b32.xlu0 %v2798, 8
      %v2817 = vpop.permute.xlu0 %2816
      %2818 = vrot.lane.b32.xlu0 %v2801, 8
      %v2819 = vpop.permute.xlu0 %2818
      %2820 = vrot.lane.b32.xlu0 %v2804, 8
      %v2821 = vpop.permute.xlu0 %2820
      %2822 = vrot.lane.b32.xlu0 %v2807, 8
      %v2823 = vpop.permute.xlu0 %2822
      %vm2832 = vcmask 130112
      %2833 = vst.msk [vmem:[#allocation8] sm:$0xff] %vm2832, %v2809
      %2834 = vst.msk [vmem:[#allocation8 + $0x8] sm:$0xff] %vm2832, %v2811
      %2835 = vst.msk [vmem:[#allocation8 + $0x10] sm:$0xff] %vm2832, %v2813
      %2836 = vst.msk [vmem:[#allocation8 + $0x18] sm:$0xff] %vm2832, %v2815
      %2837 = vst.msk [vmem:[#allocation8 + $0x20] sm:$0xff] %vm2832, %v2817
      %2838 = vst.msk [vmem:[#allocation8 + $0x28] sm:$0xff] %vm2832, %v2819
      %2839 = vst.msk [vmem:[#allocation8 + $0x30] sm:$0xff] %vm2832, %v2821
      %2840 = vst.msk [vmem:[#allocation8 + $0x38] sm:$0xff] %vm2832, %v2823
      %v2841 = vrot.slane %v2740, 2
      %v2842 = vrot.slane %v2741, 2
      %v2843 = vsel %vm852, %v2841, %v2842
      %v2844 = vrot.slane %v2742, 2
      %v2845 = vrot.slane %v2743, 2
      %v2846 = vsel %vm852, %v2844, %v2845
      %v2847 = vrot.slane %v2744, 2
      %v2848 = vrot.slane %v2745, 2
      %v2849 = vsel %vm852, %v2847, %v2848
      %v2850 = vrot.slane %v2746, 2
      %v2851 = vrot.slane %v2747, 2
      %v2852 = vsel %vm852, %v2850, %v2851
      %v2853 = vrot.slane %v2748, 2
      %v2854 = vrot.slane %v2749, 2
      %v2855 = vsel %vm852, %v2853, %v2854
      %v2856 = vrot.slane %v2750, 2
      %v2857 = vrot.slane %v2751, 2
      %v2858 = vsel %vm852, %v2856, %v2857
      %v2859 = vrot.slane %v2752, 2
      %v2860 = vrot.slane %v2753, 2
      %v2861 = vsel %vm852, %v2859, %v2860
      %v2862 = vrot.slane %v2754, 2
      %v2863 = vrot.slane %v2755, 2
      %v2864 = vsel %vm852, %v2862, %v2863
      %2865 = vrot.lane.b32.xlu0 %v2843, 16
      %v2866 = vpop.permute.xlu0 %2865
      %2867 = vrot.lane.b32.xlu0 %v2846, 16
      %v2868 = vpop.permute.xlu0 %2867
      %2869 = vrot.lane.b32.xlu0 %v2849, 16
      %v2870 = vpop.permute.xlu0 %2869
      %2871 = vrot.lane.b32.xlu0 %v2852, 16
      %v2872 = vpop.permute.xlu0 %2871
      %2873 = vrot.lane.b32.xlu0 %v2855, 16
      %v2874 = vpop.permute.xlu0 %2873
      %2875 = vrot.lane.b32.xlu0 %v2858, 16
      %v2876 = vpop.permute.xlu0 %2875
      %2877 = vrot.lane.b32.xlu0 %v2861, 16
      %v2878 = vpop.permute.xlu0 %2877
      %2879 = vrot.lane.b32.xlu0 %v2864, 16
      %v2880 = vpop.permute.xlu0 %2879
      %vm2889 = vcmask 195712
      %2890 = vst.msk [vmem:[#allocation8] sm:$0xff] %vm2889, %v2866
      %2891 = vst.msk [vmem:[#allocation8 + $0x8] sm:$0xff] %vm2889, %v2868
      %2892 = vst.msk [vmem:[#allocation8 + $0x10] sm:$0xff] %vm2889, %v2870
      %2893 = vst.msk [vmem:[#allocation8 + $0x18] sm:$0xff] %vm2889, %v2872
      %2894 = vst.msk [vmem:[#allocation8 + $0x20] sm:$0xff] %vm2889, %v2874
      %2895 = vst.msk [vmem:[#allocation8 + $0x28] sm:$0xff] %vm2889, %v2876
      %2896 = vst.msk [vmem:[#allocation8 + $0x30] sm:$0xff] %vm2889, %v2878
      %2897 = vst.msk [vmem:[#allocation8 + $0x38] sm:$0xff] %vm2889, %v2880
      %2899 = vrot.lane.b32.xlu0 %v2742, 24
      %v2900 = vpop.permute.xlu0 %2899
      %2901 = vrot.lane.b32.xlu0 %v2744, 24
      %v2902 = vpop.permute.xlu0 %2901
      %2903 = vrot.lane.b32.xlu0 %v2746, 24
      %v2904 = vpop.permute.xlu0 %2903
      %2905 = vrot.lane.b32.xlu0 %v2748, 24
      %v2906 = vpop.permute.xlu0 %2905
      %2907 = vrot.lane.b32.xlu0 %v2750, 24
      %v2908 = vpop.permute.xlu0 %2907
      %2909 = vrot.lane.b32.xlu0 %v2752, 24
      %v2910 = vpop.permute.xlu0 %2909
      %2911 = vrot.lane.b32.xlu0 %v2754, 24
      %v2912 = vpop.permute.xlu0 %2911
      %2913 = vrot.lane.b32.xlu0 %v2756, 24
      %v2914 = vpop.permute.xlu0 %2913
      %vm2923 = vcmask 261312
      %2924 = vst.msk [vmem:[#allocation8] sm:$0xff] %vm2923, %v2900
      %2925 = vst.msk [vmem:[#allocation8 + $0x8] sm:$0xff] %vm2923, %v2902
      %2926 = vst.msk [vmem:[#allocation8 + $0x10] sm:$0xff] %vm2923, %v2904
      %2927 = vst.msk [vmem:[#allocation8 + $0x18] sm:$0xff] %vm2923, %v2906
      %2928 = vst.msk [vmem:[#allocation8 + $0x20] sm:$0xff] %vm2923, %v2908
      %2929 = vst.msk [vmem:[#allocation8 + $0x28] sm:$0xff] %vm2923, %v2910
      %2930 = vst.msk [vmem:[#allocation8 + $0x30] sm:$0xff] %vm2923, %v2912
      %2931 = vst.msk [vmem:[#allocation8 + $0x38] sm:$0xff] %vm2923, %v2914
      %v2933 = vrot.slane %v2756, 1
      %v2934 = vrot.slane %v2757, 1
      %v2935 = vsel %vm642, %v2933, %v2934
      %2936 = vrot.lane.b32.xlu0 %v2789, 32
      %v2937 = vpop.permute.xlu0 %2936
      %2938 = vrot.lane.b32.xlu0 %v2792, 32
      %v2939 = vpop.permute.xlu0 %2938
      %2940 = vrot.lane.b32.xlu0 %v2795, 32
      %v2941 = vpop.permute.xlu0 %2940
      %2942 = vrot.lane.b32.xlu0 %v2798, 32
      %v2943 = vpop.permute.xlu0 %2942
      %2944 = vrot.lane.b32.xlu0 %v2801, 32
      %v2945 = vpop.permute.xlu0 %2944
      %2946 = vrot.lane.b32.xlu0 %v2804, 32
      %v2947 = vpop.permute.xlu0 %2946
      %2948 = vrot.lane.b32.xlu0 %v2807, 32
      %v2949 = vpop.permute.xlu0 %2948
      %2950 = vrot.lane.b32.xlu0 %v2935, 32
      %v2951 = vpop.permute.xlu0 %2950
      %vm2960 = vcmask 326912
      %2961 = vst.msk [vmem:[#allocation8] sm:$0xff] %vm2960, %v2937
      %2962 = vst.msk [vmem:[#allocation8 + $0x8] sm:$0xff] %vm2960, %v2939
      %2963 = vst.msk [vmem:[#allocation8 + $0x10] sm:$0xff] %vm2960, %v2941
      %2964 = vst.msk [vmem:[#allocation8 + $0x18] sm:$0xff] %vm2960, %v2943
      %2965 = vst.msk [vmem:[#allocation8 + $0x20] sm:$0xff] %vm2960, %v2945
      %2966 = vst.msk [vmem:[#allocation8 + $0x28] sm:$0xff] %vm2960, %v2947
      %2967 = vst.msk [vmem:[#allocation8 + $0x30] sm:$0xff] %vm2960, %v2949
      %2968 = vst.msk [vmem:[#allocation8 + $0x38] sm:$0xff] %vm2960, %v2951
      %v2969 = vrot.slane %v2756, 2
      %v2970 = vrot.slane %v2757, 2
      %v2971 = vsel %vm852, %v2969, %v2970
      %2972 = vrot.lane.b32.xlu0 %v2846, 40
      %v2973 = vpop.permute.xlu0 %2972
      %2974 = vrot.lane.b32.xlu0 %v2849, 40
      %v2975 = vpop.permute.xlu0 %2974
      %2976 = vrot.lane.b32.xlu0 %v2852, 40
      %v2977 = vpop.permute.xlu0 %2976
      %2978 = vrot.lane.b32.xlu0 %v2855, 40
      %v2979 = vpop.permute.xlu0 %2978
      %2980 = vrot.lane.b32.xlu0 %v2858, 40
      %v2981 = vpop.permute.xlu0 %2980
      %2982 = vrot.lane.b32.xlu0 %v2861, 40
      %v2983 = vpop.permute.xlu0 %2982
      %2984 = vrot.lane.b32.xlu0 %v2864, 40
      %v2985 = vpop.permute.xlu0 %2984
      %2986 = vrot.lane.b32.xlu0 %v2971, 40
      %v2987 = vpop.permute.xlu0 %2986
      %vm2996 = vcmask 392512
      %2997 = vst.msk [vmem:[#allocation8] sm:$0xff] %vm2996, %v2973
      %2998 = vst.msk [vmem:[#allocation8 + $0x8] sm:$0xff] %vm2996, %v2975
      %2999 = vst.msk [vmem:[#allocation8 + $0x10] sm:$0xff] %vm2996, %v2977
      %3000 = vst.msk [vmem:[#allocation8 + $0x18] sm:$0xff] %vm2996, %v2979
      %3001 = vst.msk [vmem:[#allocation8 + $0x20] sm:$0xff] %vm2996, %v2981
      %3002 = vst.msk [vmem:[#allocation8 + $0x28] sm:$0xff] %vm2996, %v2983
      %3003 = vst.msk [vmem:[#allocation8 + $0x30] sm:$0xff] %vm2996, %v2985
      %3004 = vst.msk [vmem:[#allocation8 + $0x38] sm:$0xff] %vm2996, %v2987
      %3006 = vrot.lane.b32.xlu0 %v2744, 48
      %v3007 = vpop.permute.xlu0 %3006
      %3008 = vrot.lane.b32.xlu0 %v2746, 48
      %v3009 = vpop.permute.xlu0 %3008
      %3010 = vrot.lane.b32.xlu0 %v2748, 48
      %v3011 = vpop.permute.xlu0 %3010
      %3012 = vrot.lane.b32.xlu0 %v2750, 48
      %v3013 = vpop.permute.xlu0 %3012
      %3014 = vrot.lane.b32.xlu0 %v2752, 48
      %v3015 = vpop.permute.xlu0 %3014
      %3016 = vrot.lane.b32.xlu0 %v2754, 48
      %v3017 = vpop.permute.xlu0 %3016
      %3018 = vrot.lane.b32.xlu0 %v2756, 48
      %v3019 = vpop.permute.xlu0 %3018
      %3020 = vrot.lane.b32.xlu0 %v2758, 48
      %v3021 = vpop.permute.xlu0 %3020
      %vm3030 = vcmask 458112
      %3031 = vst.msk [vmem:[#allocation8] sm:$0xff] %vm3030, %v3007
      %3032 = vst.msk [vmem:[#allocation8 + $0x8] sm:$0xff] %vm3030, %v3009
      %3033 = vst.msk [vmem:[#allocation8 + $0x10] sm:$0xff] %vm3030, %v3011
      %3034 = vst.msk [vmem:[#allocation8 + $0x18] sm:$0xff] %vm3030, %v3013
      %3035 = vst.msk [vmem:[#allocation8 + $0x20] sm:$0xff] %vm3030, %v3015
      %3036 = vst.msk [vmem:[#allocation8 + $0x28] sm:$0xff] %vm3030, %v3017
      %3037 = vst.msk [vmem:[#allocation8 + $0x30] sm:$0xff] %vm3030, %v3019
      %3038 = vst.msk [vmem:[#allocation8 + $0x38] sm:$0xff] %vm3030, %v3021
      %v3040 = vrot.slane %v2758, 1
      %v3041 = vrot.slane %v2759, 1
      %v3042 = vsel %vm642, %v3040, %v3041
      %3043 = vrot.lane.b32.xlu0 %v2792, 56
      %v3044 = vpop.permute.xlu0 %3043
      %3045 = vrot.lane.b32.xlu0 %v2795, 56
      %v3046 = vpop.permute.xlu0 %3045
      %3047 = vrot.lane.b32.xlu0 %v2798, 56
      %v3048 = vpop.permute.xlu0 %3047
      %3049 = vrot.lane.b32.xlu0 %v2801, 56
      %v3050 = vpop.permute.xlu0 %3049
      %3051 = vrot.lane.b32.xlu0 %v2804, 56
      %v3052 = vpop.permute.xlu0 %3051
      %3053 = vrot.lane.b32.xlu0 %v2807, 56
      %v3054 = vpop.permute.xlu0 %3053
      %3055 = vrot.lane.b32.xlu0 %v2935, 56
      %v3056 = vpop.permute.xlu0 %3055
      %3057 = vrot.lane.b32.xlu0 %v3042, 56
      %v3058 = vpop.permute.xlu0 %3057
      %vm3067 = vcmask 523712
      %3068 = vst.msk [vmem:[#allocation8] sm:$0xff] %vm3067, %v3044
      %3069 = vst.msk [vmem:[#allocation8 + $0x8] sm:$0xff] %vm3067, %v3046
      %3070 = vst.msk [vmem:[#allocation8 + $0x10] sm:$0xff] %vm3067, %v3048
      %3071 = vst.msk [vmem:[#allocation8 + $0x18] sm:$0xff] %vm3067, %v3050
      %3072 = vst.msk [vmem:[#allocation8 + $0x20] sm:$0xff] %vm3067, %v3052
      %3073 = vst.msk [vmem:[#allocation8 + $0x28] sm:$0xff] %vm3067, %v3054
      %3074 = vst.msk [vmem:[#allocation8 + $0x30] sm:$0xff] %vm3067, %v3056
      %3075 = vst.msk [vmem:[#allocation8 + $0x38] sm:$0xff] %vm3067, %v3058
      %v3076 = vrot.slane %v2758, 2
      %v3077 = vrot.slane %v2759, 2
      %v3078 = vsel %vm852, %v3076, %v3077
      %3079 = vrot.lane.b32.xlu0 %v2849, 64
      %v3080 = vpop.permute.xlu0 %3079
      %3081 = vrot.lane.b32.xlu0 %v2852, 64
      %v3082 = vpop.permute.xlu0 %3081
      %3083 = vrot.lane.b32.xlu0 %v2855, 64
      %v3084 = vpop.permute.xlu0 %3083
      %3085 = vrot.lane.b32.xlu0 %v2858, 64
      %v3086 = vpop.permute.xlu0 %3085
      %3087 = vrot.lane.b32.xlu0 %v2861, 64
      %v3088 = vpop.permute.xlu0 %3087
      %3089 = vrot.lane.b32.xlu0 %v2864, 64
      %v3090 = vpop.permute.xlu0 %3089
      %3091 = vrot.lane.b32.xlu0 %v2971, 64
      %v3092 = vpop.permute.xlu0 %3091
      %3093 = vrot.lane.b32.xlu0 %v3078, 64
      %v3094 = vpop.permute.xlu0 %3093
      %vm3103 = vcmask 589312
      %3104 = vst.msk [vmem:[#allocation8] sm:$0xff] %vm3103, %v3080
      %3105 = vst.msk [vmem:[#allocation8 + $0x8] sm:$0xff] %vm3103, %v3082
      %3106 = vst.msk [vmem:[#allocation8 + $0x10] sm:$0xff] %vm3103, %v3084
      %3107 = vst.msk [vmem:[#allocation8 + $0x18] sm:$0xff] %vm3103, %v3086
      %3108 = vst.msk [vmem:[#allocation8 + $0x20] sm:$0xff] %vm3103, %v3088
      %3109 = vst.msk [vmem:[#allocation8 + $0x28] sm:$0xff] %vm3103, %v3090
      %3110 = vst.msk [vmem:[#allocation8 + $0x30] sm:$0xff] %vm3103, %v3092
      %3111 = vst.msk [vmem:[#allocation8 + $0x38] sm:$0xff] %vm3103, %v3094
      %v3112 = vld [vmem:[#allocation8] sm:$0xff]
      %v3113 = vld [vmem:[#allocation8 + $0x8] sm:$0xff]
      %v3114 = vld [vmem:[#allocation8 + $0x10] sm:$0xff]
      %v3115 = vld [vmem:[#allocation8 + $0x18] sm:$0xff]
      %v3116 = vld [vmem:[#allocation8 + $0x20] sm:$0xff]
      %v3117 = vld [vmem:[#allocation8 + $0x28] sm:$0xff]
      %v3118 = vld [vmem:[#allocation8 + $0x30] sm:$0xff]
      %v3119 = vld [vmem:[#allocation8 + $0x38] sm:$0xff]
      %v3120 = vld [vmem:[%s3] sm:$0xff]
      %v3121 = vld [vmem:[%s3 + $0x8] sm:$0xff]
      %v3122 = vld [vmem:[%s3 + $0x10] sm:$0xff]
      %v3123 = vld [vmem:[%s3 + $0x18] sm:$0xff]
      %v3124 = vld [vmem:[%s3 + $0x20] sm:$0xff]
      %v3125 = vld [vmem:[%s3 + $0x28] sm:$0xff]
      %v3126 = vld [vmem:[%s3 + $0x30] sm:$0xff]
      %v3127 = vld [vmem:[%s3 + $0x38] sm:$0xff]
      %v3128 = vld [vmem:[%s3 + $0x40] sm:$0xff]
      %v3129 = vld [vmem:[%s4] sm:$0x1]
      %v3131 = vlaneseq
      %v3132 = vshrl.u32 %v3131, 7
      %v3133 = vsub.s32 0, %v3132
      %v3134 = vrot.slane %v3129, %v3133
      %vm3136 = vcmask 588800
      %v3138 = vsel %vm3136, %v3112, 0
      %v3141 = vsel %vm3136, %v3113, 0
      %v3144 = vsel %vm3136, %v3114, 0
      %v3147 = vsel %vm3136, %v3115, 0
      %v3150 = vsel %vm3136, %v3116, 0
      %v3153 = vsel %vm3136, %v3117, 0
      %v3156 = vsel %vm3136, %v3118, 0
      %v3159 = vsel %vm3136, %v3119, 0
      %3161 = vmatprep.subr.mxu0 0.0
      %3162 = vmatpush1.msra.mxu0 %v3120
      %3163 = vmatprep.subr.mxu0 0.0
      %3164 = vmatpush1.msra.mxu0 %v3121
      %3165 = vmatprep.subr.mxu0 0.0
      %3166 = vmatpush1.msra.mxu0 %v3122
      %3167 = vmatprep.subr.mxu0 0.0
      %3168 = vmatpush1.msra.mxu0 %v3123
      %3169 = vmatprep.subr.mxu0 0.0
      %3170 = vmatpush1.msra.mxu0 %v3124
      %3171 = vmatprep.subr.mxu0 0.0
      %3172 = vmatpush1.msra.mxu0 %v3125
      %3173 = vmatprep.subr.mxu0 0.0
      %3174 = vmatpush1.msra.mxu0 %v3126
      %3175 = vmatprep.subr.mxu0 0.0
      %3176 = vmatpush1.msra.mxu0 %v3127
      %3177 = vmatprep.subr.mxu0 0.0
      %3178 = vmatpush1.msra.mxu0 %v3128
      %3179 = vmatprep.subr.mxu0 0.0
      %3180 = vmatpush1.msra.mxu0 0.0
      %3181 = vmatprep.subr.mxu0 0.0
      %3182 = vmatpush1.msra.mxu0 0.0
      %3183 = vmatprep.subr.mxu0 0.0
      %3184 = vmatpush1.msra.mxu0 0.0
      %3185 = vmatprep.subr.mxu0 0.0
      %3186 = vmatpush1.msra.mxu0 0.0
      %3187 = vmatprep.subr.mxu0 0.0
      %3188 = vmatpush1.msra.mxu0 0.0
      %3189 = vmatprep.subr.mxu0 0.0
      %3190 = vmatpush1.msra.mxu0 0.0
      %3191 = vmatprep.subr.mxu0 0.0
      %3192 = vmatpush1.msra.mxu0 0.0
      %3193 = vmatprep.subr.mxu0 0.0
      %3194 = vmatpush1.msra.mxu0 0.0
      %3195 = vmatprep.subr.mxu0 0.0
      %3196 = vmatpush1.msra.mxu0 0.0
      %3197 = vmatprep.subr.mxu0 0.0
      %3198 = vmatpush1.msra.mxu0 0.0
      %3199 = vmatprep.subr.mxu0 0.0
      %3200 = vmatpush1.msra.mxu0 0.0
      %3201 = vmatprep.subr.mxu0 0.0
      %3202 = vmatpush1.msra.mxu0 0.0
      %3203 = vmatprep.subr.mxu0 0.0
      %3204 = vmatpush1.msra.mxu0 0.0
      %3205 = vmatprep.subr.mxu0 0.0
      %3206 = vmatpush1.msra.mxu0 0.0
      %3207 = vmatprep.subr.mxu0 0.0
      %3208 = vmatpush1.msra.mxu0 0.0
      %3209 = vmatprep.subr.mxu0 0.0
      %3210 = vmatpush1.msra.mxu0 0.0
      %3211 = vmatprep.subr.mxu0 0.0
      %3212 = vmatpush1.msra.mxu0 0.0
      %3213 = vmatprep.subr.mxu0 0.0
      %3214 = vmatpush1.msra.mxu0 0.0
      %3215 = vmatprep.subr.mxu0 0.0
      %3216 = vmatpush1.msra.mxu0 0.0
      %3217 = vmatprep.subr.mxu0 0.0
      %3218 = vmatpush1.msra.mxu0 0.0
      %3219 = vmatprep.subr.mxu0 0.0
      %3220 = vmatpush1.msra.mxu0 0.0
      %3221 = vmatprep.subr.mxu0 0.0
      %3222 = vmatpush1.msra.mxu0 0.0
      %3223 = vmatprep.subr.mxu0 0.0
      %3224 = vmatpush1.msra.mxu0 0.0
      %3225 = vmatprep.mubr.f32.mxu0 0.0
      %3226 = vmatmul.mubr.f32.gmra.mrb[0].mxu0 %v3138
      %v3227 = vpop.f32.mrb[0].mxu0
      %v3228 = vadd.f32 %v3134, %v3227
      %v3229 = vpop.f32.mrb[0].mxu0
      %3230 = vmatprep.mubr.f32.mxu0 0.0
      %3231 = vmatmul.mubr.f32.gmra.mrb[0].mxu0 %v3141
      %v3232 = vpop.f32.mrb[0].mxu0
      %v3233 = vadd.f32 %v3134, %v3232
      %v3234 = vpop.f32.mrb[0].mxu0
      %3235 = vmatprep.mubr.f32.mxu0 0.0
      %3236 = vmatmul.mubr.f32.gmra.mrb[0].mxu0 %v3144
      %v3237 = vpop.f32.mrb[0].mxu0
      %v3238 = vadd.f32 %v3134, %v3237
      %v3239 = vpop.f32.mrb[0].mxu0
      %3240 = vmatprep.mubr.f32.mxu0 0.0
      %3241 = vmatmul.mubr.f32.gmra.mrb[0].mxu0 %v3147
      %v3242 = vpop.f32.mrb[0].mxu0
      %v3243 = vadd.f32 %v3134, %v3242
      %v3244 = vpop.f32.mrb[0].mxu0
      %3245 = vmatprep.mubr.f32.mxu0 0.0
      %3246 = vmatmul.mubr.f32.gmra.mrb[0].mxu0 %v3150
      %v3247 = vpop.f32.mrb[0].mxu0
      %v3248 = vadd.f32 %v3134, %v3247
      %v3249 = vpop.f32.mrb[0].mxu0
      %3250 = vmatprep.mubr.f32.mxu0 0.0
      %3251 = vmatmul.mubr.f32.gmra.mrb[0].mxu0 %v3153
      %v3252 = vpop.f32.mrb[0].mxu0
      %v3253 = vadd.f32 %v3134, %v3252
      %v3254 = vpop.f32.mrb[0].mxu0
      %3255 = vmatprep.mubr.f32.mxu0 0.0
      %3256 = vmatmul.mubr.f32.gmra.mrb[0].mxu0 %v3156
      %v3257 = vpop.f32.mrb[0].mxu0
      %v3258 = vadd.f32 %v3134, %v3257
      %v3259 = vpop.f32.mrb[0].mxu0
      %3260 = vmatprep.mubr.f32.mxu0 0.0
      %3261 = vmatmul.mubr.f32.gmra.mrb[0].mxu0 %v3159
      %v3262 = vpop.f32.mrb[0].mxu0
      %v3263 = vadd.f32 %v3134, %v3262
      %v3264 = vpop.f32.mrb[0].mxu0
      %3265 = vdwg.mxu0
      %v3266 = vmax.f32 %v3228, 0.0
      %v3267 = vmax.f32 %v3233, 0.0
      %v3268 = vmax.f32 %v3238, 0.0
      %v3269 = vmax.f32 %v3243, 0.0
      %v3270 = vmax.f32 %v3248, 0.0
      %v3271 = vmax.f32 %v3253, 0.0
      %v3272 = vmax.f32 %v3258, 0.0
      %v3273 = vmax.f32 %v3263, 0.0
      %3274 = vst.msk [vmem:[%s2731 + $0x1] sm:$0xff] %vm2232, %v3266
      %3275 = vst.msk [vmem:[%s2731 + $0x11] sm:$0xff] %vm2232, %v3267
      %3276 = vst.msk [vmem:[%s2731 + $0x21] sm:$0xff] %vm2232, %v3268
      %3277 = vst.msk [vmem:[%s2731 + $0x31] sm:$0xff] %vm2232, %v3269
      %3278 = vst.msk [vmem:[%s2731 + $0x41] sm:$0xff] %vm2232, %v3270
      %3279 = vst.msk [vmem:[%s2731 + $0x51] sm:$0xff] %vm2232, %v3271
      %3280 = vst.msk [vmem:[%s2731 + $0x61] sm:$0xff] %vm2232, %v3272
      %3281 = vst.msk [vmem:[%s2731 + $0x71] sm:$0xff] %vm2232, %v3273
      %v3282 = vld [vmem:[#allocation7] sm:$0xff]
      %v3283 = vld [vmem:[#allocation7 + $0x8] sm:$0x3]
      %v3284 = vld [vmem:[#allocation7 + $0x10] sm:$0xff]
      %v3285 = vld [vmem:[#allocation7 + $0x18] sm:$0x3]
      %v3286 = vld [vmem:[#allocation7 + $0x20] sm:$0xff]
      %v3287 = vld [vmem:[#allocation7 + $0x28] sm:$0x3]
      %v3288 = vld [vmem:[#allocation7 + $0x30] sm:$0xff]
      %v3289 = vld [vmem:[#allocation7 + $0x38] sm:$0x3]
      %v3290 = vld [vmem:[#allocation7 + $0x40] sm:$0xff]
      %v3291 = vld [vmem:[#allocation7 + $0x48] sm:$0x3]
      %v3292 = vld [vmem:[#allocation7 + $0x50] sm:$0xff]
      %v3293 = vld [vmem:[#allocation7 + $0x58] sm:$0x3]
      %v3294 = vld [vmem:[#allocation7 + $0x60] sm:$0xff]
      %v3295 = vld [vmem:[#allocation7 + $0x68] sm:$0x3]
      %v3296 = vld [vmem:[#allocation7 + $0x70] sm:$0xff]
      %v3297 = vld [vmem:[#allocation7 + $0x78] sm:$0x3]
      %v3298 = vld [vmem:[#allocation7 + $0x80] sm:$0xff]
      %v3299 = vld [vmem:[#allocation7 + $0x88] sm:$0x3]
      %v3300 = vld [vmem:[#allocation7 + $0x90] sm:$0xff]
      %v3301 = vld [vmem:[#allocation7 + $0x98] sm:$0x3]
      %3302 = vst.msk [vmem:[#allocation8] sm:$0xff] %vm2232, %v3282
      %3303 = vst.msk [vmem:[#allocation8 + $0x8] sm:$0xff] %vm2232, %v3284
      %3304 = vst.msk [vmem:[#allocation8 + $0x10] sm:$0xff] %vm2232, %v3286
      %3305 = vst.msk [vmem:[#allocation8 + $0x18] sm:$0xff] %vm2232, %v3288
      %3306 = vst.msk [vmem:[#allocation8 + $0x20] sm:$0xff] %vm2232, %v3290
      %3307 = vst.msk [vmem:[#allocation8 + $0x28] sm:$0xff] %vm2232, %v3292
      %3308 = vst.msk [vmem:[#allocation8 + $0x30] sm:$0xff] %vm2232, %v3294
      %3309 = vst.msk [vmem:[#allocation8 + $0x38] sm:$0xff] %vm2232, %v3296
      %v3326 = vrot.slane %v3282, 1
      %v3327 = vrot.slane %v3283, 1
      %v3328 = vsel %vm642, %v3326, %v3327
      %v3329 = vrot.slane %v3284, 1
      %v3330 = vrot.slane %v3285, 1
      %v3331 = vsel %vm642, %v3329, %v3330
      %v3332 = vrot.slane %v3286, 1
      %v3333 = vrot.slane %v3287, 1
      %v3334 = vsel %vm642, %v3332, %v3333
      %v3335 = vrot.slane %v3288, 1
      %v3336 = vrot.slane %v3289, 1
      %v3337 = vsel %vm642, %v3335, %v3336
      %v3338 = vrot.slane %v3290, 1
      %v3339 = vrot.slane %v3291, 1
      %v3340 = vsel %vm642, %v3338, %v3339
      %v3341 = vrot.slane %v3292, 1
      %v3342 = vrot.slane %v3293, 1
      %v3343 = vsel %vm642, %v3341, %v3342
      %v3344 = vrot.slane %v3294, 1
      %v3345 = vrot.slane %v3295, 1
      %v3346 = vsel %vm642, %v3344, %v3345
      %v3347 = vrot.slane %v3296, 1
      %v3348 = vrot.slane %v3297, 1
      %v3349 = vsel %vm642, %v3347, %v3348
      %3350 = vrot.lane.b32.xlu0 %v3328, 8
      %v3351 = vpop.permute.xlu0 %3350
      %3352 = vrot.lane.b32.xlu0 %v3331, 8
      %v3353 = vpop.permute.xlu0 %3352
      %3354 = vrot.lane.b32.xlu0 %v3334, 8
      %v3355 = vpop.permute.xlu0 %3354
      %3356 = vrot.lane.b32.xlu0 %v3337, 8
      %v3357 = vpop.permute.xlu0 %3356
      %3358 = vrot.lane.b32.xlu0 %v3340, 8
      %v3359 = vpop.permute.xlu0 %3358
      %3360 = vrot.lane.b32.xlu0 %v3343, 8
      %v3361 = vpop.permute.xlu0 %3360
      %3362 = vrot.lane.b32.xlu0 %v3346, 8
      %v3363 = vpop.permute.xlu0 %3362
      %3364 = vrot.lane.b32.xlu0 %v3349, 8
      %v3365 = vpop.permute.xlu0 %3364
      %3374 = vst.msk [vmem:[#allocation8] sm:$0xff] %vm2832, %v3351
      %3375 = vst.msk [vmem:[#allocation8 + $0x8] sm:$0xff] %vm2832, %v3353
      %3376 = vst.msk [vmem:[#allocation8 + $0x10] sm:$0xff] %vm2832, %v3355
      %3377 = vst.msk [vmem:[#allocation8 + $0x18] sm:$0xff] %vm2832, %v3357
      %3378 = vst.msk [vmem:[#allocation8 + $0x20] sm:$0xff] %vm2832, %v3359
      %3379 = vst.msk [vmem:[#allocation8 + $0x28] sm:$0xff] %vm2832, %v3361
      %3380 = vst.msk [vmem:[#allocation8 + $0x30] sm:$0xff] %vm2832, %v3363
      %3381 = vst.msk [vmem:[#allocation8 + $0x38] sm:$0xff] %vm2832, %v3365
      %v3382 = vrot.slane %v3282, 2
      %v3383 = vrot.slane %v3283, 2
      %v3384 = vsel %vm852, %v3382, %v3383
      %v3385 = vrot.slane %v3284, 2
      %v3386 = vrot.slane %v3285, 2
      %v3387 = vsel %vm852, %v3385, %v3386
      %v3388 = vrot.slane %v3286, 2
      %v3389 = vrot.slane %v3287, 2
      %v3390 = vsel %vm852, %v3388, %v3389
      %v3391 = vrot.slane %v3288, 2
      %v3392 = vrot.slane %v3289, 2
      %v3393 = vsel %vm852, %v3391, %v3392
      %v3394 = vrot.slane %v3290, 2
      %v3395 = vrot.slane %v3291, 2
      %v3396 = vsel %vm852, %v3394, %v3395
      %v3397 = vrot.slane %v3292, 2
      %v3398 = vrot.slane %v3293, 2
      %v3399 = vsel %vm852, %v3397, %v3398
      %v3400 = vrot.slane %v3294, 2
      %v3401 = vrot.slane %v3295, 2
      %v3402 = vsel %vm852, %v3400, %v3401
      %v3403 = vrot.slane %v3296, 2
      %v3404 = vrot.slane %v3297, 2
      %v3405 = vsel %vm852, %v3403, %v3404
      %3406 = vrot.lane.b32.xlu0 %v3384, 16
      %v3407 = vpop.permute.xlu0 %3406
      %3408 = vrot.lane.b32.xlu0 %v3387, 16
      %v3409 = vpop.permute.xlu0 %3408
      %3410 = vrot.lane.b32.xlu0 %v3390, 16
      %v3411 = vpop.permute.xlu0 %3410
      %3412 = vrot.lane.b32.xlu0 %v3393, 16
      %v3413 = vpop.permute.xlu0 %3412
      %3414 = vrot.lane.b32.xlu0 %v3396, 16
      %v3415 = vpop.permute.xlu0 %3414
      %3416 = vrot.lane.b32.xlu0 %v3399, 16
      %v3417 = vpop.permute.xlu0 %3416
      %3418 = vrot.lane.b32.xlu0 %v3402, 16
      %v3419 = vpop.permute.xlu0 %3418
      %3420 = vrot.lane.b32.xlu0 %v3405, 16
      %v3421 = vpop.permute.xlu0 %3420
      %3430 = vst.msk [vmem:[#allocation8] sm:$0xff] %vm2889, %v3407
      %3431 = vst.msk [vmem:[#allocation8 + $0x8] sm:$0xff] %vm2889, %v3409
      %3432 = vst.msk [vmem:[#allocation8 + $0x10] sm:$0xff] %vm2889, %v3411
      %3433 = vst.msk [vmem:[#allocation8 + $0x18] sm:$0xff] %vm2889, %v3413
      %3434 = vst.msk [vmem:[#allocation8 + $0x20] sm:$0xff] %vm2889, %v3415
      %3435 = vst.msk [vmem:[#allocation8 + $0x28] sm:$0xff] %vm2889, %v3417
      %3436 = vst.msk [vmem:[#allocation8 + $0x30] sm:$0xff] %vm2889, %v3419
      %3437 = vst.msk [vmem:[#allocation8 + $0x38] sm:$0xff] %vm2889, %v3421
      %3439 = vrot.lane.b32.xlu0 %v3284, 24
      %v3440 = vpop.permute.xlu0 %3439
      %3441 = vrot.lane.b32.xlu0 %v3286, 24
      %v3442 = vpop.permute.xlu0 %3441
      %3443 = vrot.lane.b32.xlu0 %v3288, 24
      %v3444 = vpop.permute.xlu0 %3443
      %3445 = vrot.lane.b32.xlu0 %v3290, 24
      %v3446 = vpop.permute.xlu0 %3445
      %3447 = vrot.lane.b32.xlu0 %v3292, 24
      %v3448 = vpop.permute.xlu0 %3447
      %3449 = vrot.lane.b32.xlu0 %v3294, 24
      %v3450 = vpop.permute.xlu0 %3449
      %3451 = vrot.lane.b32.xlu0 %v3296, 24
      %v3452 = vpop.permute.xlu0 %3451
      %3453 = vrot.lane.b32.xlu0 %v3298, 24
      %v3454 = vpop.permute.xlu0 %3453
      %3463 = vst.msk [vmem:[#allocation8] sm:$0xff] %vm2923, %v3440
      %3464 = vst.msk [vmem:[#allocation8 + $0x8] sm:$0xff] %vm2923, %v3442
      %3465 = vst.msk [vmem:[#allocation8 + $0x10] sm:$0xff] %vm2923, %v3444
      %3466 = vst.msk [vmem:[#allocation8 + $0x18] sm:$0xff] %vm2923, %v3446
      %3467 = vst.msk [vmem:[#allocation8 + $0x20] sm:$0xff] %vm2923, %v3448
      %3468 = vst.msk [vmem:[#allocation8 + $0x28] sm:$0xff] %vm2923, %v3450
      %3469 = vst.msk [vmem:[#allocation8 + $0x30] sm:$0xff] %vm2923, %v3452
      %3470 = vst.msk [vmem:[#allocation8 + $0x38] sm:$0xff] %vm2923, %v3454
      %v3472 = vrot.slane %v3298, 1
      %v3473 = vrot.slane %v3299, 1
      %v3474 = vsel %vm642, %v3472, %v3473
      %3475 = vrot.lane.b32.xlu0 %v3331, 32
      %v3476 = vpop.permute.xlu0 %3475
      %3477 = vrot.lane.b32.xlu0 %v3334, 32
      %v3478 = vpop.permute.xlu0 %3477
      %3479 = vrot.lane.b32.xlu0 %v3337, 32
      %v3480 = vpop.permute.xlu0 %3479
      %3481 = vrot.lane.b32.xlu0 %v3340, 32
      %v3482 = vpop.permute.xlu0 %3481
      %3483 = vrot.lane.b32.xlu0 %v3343, 32
      %v3484 = vpop.permute.xlu0 %3483
      %3485 = vrot.lane.b32.xlu0 %v3346, 32
      %v3486 = vpop.permute.xlu0 %3485
      %3487 = vrot.lane.b32.xlu0 %v3349, 32
      %v3488 = vpop.permute.xlu0 %3487
      %3489 = vrot.lane.b32.xlu0 %v3474, 32
      %v3490 = vpop.permute.xlu0 %3489
      %3499 = vst.msk [vmem:[#allocation8] sm:$0xff] %vm2960, %v3476
      %3500 = vst.msk [vmem:[#allocation8 + $0x8] sm:$0xff] %vm2960, %v3478
      %3501 = vst.msk [vmem:[#allocation8 + $0x10] sm:$0xff] %vm2960, %v3480
      %3502 = vst.msk [vmem:[#allocation8 + $0x18] sm:$0xff] %vm2960, %v3482
      %3503 = vst.msk [vmem:[#allocation8 + $0x20] sm:$0xff] %vm2960, %v3484
      %3504 = vst.msk [vmem:[#allocation8 + $0x28] sm:$0xff] %vm2960, %v3486
      %3505 = vst.msk [vmem:[#allocation8 + $0x30] sm:$0xff] %vm2960, %v3488
      %3506 = vst.msk [vmem:[#allocation8 + $0x38] sm:$0xff] %vm2960, %v3490
      %v3507 = vrot.slane %v3298, 2
      %v3508 = vrot.slane %v3299, 2
      %v3509 = vsel %vm852, %v3507, %v3508
      %3510 = vrot.lane.b32.xlu0 %v3387, 40
      %v3511 = vpop.permute.xlu0 %3510
      %3512 = vrot.lane.b32.xlu0 %v3390, 40
      %v3513 = vpop.permute.xlu0 %3512
      %3514 = vrot.lane.b32.xlu0 %v3393, 40
      %v3515 = vpop.permute.xlu0 %3514
      %3516 = vrot.lane.b32.xlu0 %v3396, 40
      %v3517 = vpop.permute.xlu0 %3516
      %3518 = vrot.lane.b32.xlu0 %v3399, 40
      %v3519 = vpop.permute.xlu0 %3518
      %3520 = vrot.lane.b32.xlu0 %v3402, 40
      %v3521 = vpop.permute.xlu0 %3520
      %3522 = vrot.lane.b32.xlu0 %v3405, 40
      %v3523 = vpop.permute.xlu0 %3522
      %3524 = vrot.lane.b32.xlu0 %v3509, 40
      %v3525 = vpop.permute.xlu0 %3524
      %3534 = vst.msk [vmem:[#allocation8] sm:$0xff] %vm2996, %v3511
      %3535 = vst.msk [vmem:[#allocation8 + $0x8] sm:$0xff] %vm2996, %v3513
      %3536 = vst.msk [vmem:[#allocation8 + $0x10] sm:$0xff] %vm2996, %v3515
      %3537 = vst.msk [vmem:[#allocation8 + $0x18] sm:$0xff] %vm2996, %v3517
      %3538 = vst.msk [vmem:[#allocation8 + $0x20] sm:$0xff] %vm2996, %v3519
      %3539 = vst.msk [vmem:[#allocation8 + $0x28] sm:$0xff] %vm2996, %v3521
      %3540 = vst.msk [vmem:[#allocation8 + $0x30] sm:$0xff] %vm2996, %v3523
      %3541 = vst.msk [vmem:[#allocation8 + $0x38] sm:$0xff] %vm2996, %v3525
      %3543 = vrot.lane.b32.xlu0 %v3286, 48
      %v3544 = vpop.permute.xlu0 %3543
      %3545 = vrot.lane.b32.xlu0 %v3288, 48
      %v3546 = vpop.permute.xlu0 %3545
      %3547 = vrot.lane.b32.xlu0 %v3290, 48
      %v3548 = vpop.permute.xlu0 %3547
      %3549 = vrot.lane.b32.xlu0 %v3292, 48
      %v3550 = vpop.permute.xlu0 %3549
      %3551 = vrot.lane.b32.xlu0 %v3294, 48
      %v3552 = vpop.permute.xlu0 %3551
      %3553 = vrot.lane.b32.xlu0 %v3296, 48
      %v3554 = vpop.permute.xlu0 %3553
      %3555 = vrot.lane.b32.xlu0 %v3298, 48
      %v3556 = vpop.permute.xlu0 %3555
      %3557 = vrot.lane.b32.xlu0 %v3300, 48
      %v3558 = vpop.permute.xlu0 %3557
      %3567 = vst.msk [vmem:[#allocation8] sm:$0xff] %vm3030, %v3544
      %3568 = vst.msk [vmem:[#allocation8 + $0x8] sm:$0xff] %vm3030, %v3546
      %3569 = vst.msk [vmem:[#allocation8 + $0x10] sm:$0xff] %vm3030, %v3548
      %3570 = vst.msk [vmem:[#allocation8 + $0x18] sm:$0xff] %vm3030, %v3550
      %3571 = vst.msk [vmem:[#allocation8 + $0x20] sm:$0xff] %vm3030, %v3552
      %3572 = vst.msk [vmem:[#allocation8 + $0x28] sm:$0xff] %vm3030, %v3554
      %3573 = vst.msk [vmem:[#allocation8 + $0x30] sm:$0xff] %vm3030, %v3556
      %3574 = vst.msk [vmem:[#allocation8 + $0x38] sm:$0xff] %vm3030, %v3558
      %v3576 = vrot.slane %v3300, 1
      %v3577 = vrot.slane %v3301, 1
      %v3578 = vsel %vm642, %v3576, %v3577
      %3579 = vrot.lane.b32.xlu0 %v3334, 56
      %v3580 = vpop.permute.xlu0 %3579
      %3581 = vrot.lane.b32.xlu0 %v3337, 56
      %v3582 = vpop.permute.xlu0 %3581
      %3583 = vrot.lane.b32.xlu0 %v3340, 56
      %v3584 = vpop.permute.xlu0 %3583
      %3585 = vrot.lane.b32.xlu0 %v3343, 56
      %v3586 = vpop.permute.xlu0 %3585
      %3587 = vrot.lane.b32.xlu0 %v3346, 56
      %v3588 = vpop.permute.xlu0 %3587
      %3589 = vrot.lane.b32.xlu0 %v3349, 56
      %v3590 = vpop.permute.xlu0 %3589
      %3591 = vrot.lane.b32.xlu0 %v3474, 56
      %v3592 = vpop.permute.xlu0 %3591
      %3593 = vrot.lane.b32.xlu0 %v3578, 56
      %v3594 = vpop.permute.xlu0 %3593
      %3603 = vst.msk [vmem:[#allocation8] sm:$0xff] %vm3067, %v3580
      %3604 = vst.msk [vmem:[#allocation8 + $0x8] sm:$0xff] %vm3067, %v3582
      %3605 = vst.msk [vmem:[#allocation8 + $0x10] sm:$0xff] %vm3067, %v3584
      %3606 = vst.msk [vmem:[#allocation8 + $0x18] sm:$0xff] %vm3067, %v3586
      %3607 = vst.msk [vmem:[#allocation8 + $0x20] sm:$0xff] %vm3067, %v3588
      %3608 = vst.msk [vmem:[#allocation8 + $0x28] sm:$0xff] %vm3067, %v3590
      %3609 = vst.msk [vmem:[#allocation8 + $0x30] sm:$0xff] %vm3067, %v3592
      %3610 = vst.msk [vmem:[#allocation8 + $0x38] sm:$0xff] %vm3067, %v3594
      %v3611 = vrot.slane %v3300, 2
      %v3612 = vrot.slane %v3301, 2
      %v3613 = vsel %vm852, %v3611, %v3612
      %3614 = vrot.lane.b32.xlu0 %v3390, 64
      %v3615 = vpop.permute.xlu0 %3614
      %3616 = vrot.lane.b32.xlu0 %v3393, 64
      %v3617 = vpop.permute.xlu0 %3616
      %3618 = vrot.lane.b32.xlu0 %v3396, 64
      %v3619 = vpop.permute.xlu0 %3618
      %3620 = vrot.lane.b32.xlu0 %v3399, 64
      %v3621 = vpop.permute.xlu0 %3620
      %3622 = vrot.lane.b32.xlu0 %v3402, 64
      %v3623 = vpop.permute.xlu0 %3622
      %3624 = vrot.lane.b32.xlu0 %v3405, 64
      %v3625 = vpop.permute.xlu0 %3624
      %3626 = vrot.lane.b32.xlu0 %v3509, 64
      %v3627 = vpop.permute.xlu0 %3626
      %3628 = vrot.lane.b32.xlu0 %v3613, 64
      %v3629 = vpop.permute.xlu0 %3628
      %3638 = vst.msk [vmem:[#allocation8] sm:$0xff] %vm3103, %v3615
      %3639 = vst.msk [vmem:[#allocation8 + $0x8] sm:$0xff] %vm3103, %v3617
      %3640 = vst.msk [vmem:[#allocation8 + $0x10] sm:$0xff] %vm3103, %v3619
      %3641 = vst.msk [vmem:[#allocation8 + $0x18] sm:$0xff] %vm3103, %v3621
      %3642 = vst.msk [vmem:[#allocation8 + $0x20] sm:$0xff] %vm3103, %v3623
      %3643 = vst.msk [vmem:[#allocation8 + $0x28] sm:$0xff] %vm3103, %v3625
      %3644 = vst.msk [vmem:[#allocation8 + $0x30] sm:$0xff] %vm3103, %v3627
      %3645 = vst.msk [vmem:[#allocation8 + $0x38] sm:$0xff] %vm3103, %v3629
      %v3646 = vld [vmem:[#allocation8] sm:$0xff]
      %v3647 = vld [vmem:[#allocation8 + $0x8] sm:$0xff]
      %v3648 = vld [vmem:[#allocation8 + $0x10] sm:$0xff]
      %v3649 = vld [vmem:[#allocation8 + $0x18] sm:$0xff]
      %v3650 = vld [vmem:[#allocation8 + $0x20] sm:$0xff]
      %v3651 = vld [vmem:[#allocation8 + $0x28] sm:$0xff]
      %v3652 = vld [vmem:[#allocation8 + $0x30] sm:$0xff]
      %v3653 = vld [vmem:[#allocation8 + $0x38] sm:$0xff]
      %v3654 = vld [vmem:[%s5] sm:$0xff]
      %v3655 = vld [vmem:[%s5 + $0x8] sm:$0xff]
      %v3656 = vld [vmem:[%s5 + $0x10] sm:$0xff]
      %v3657 = vld [vmem:[%s5 + $0x18] sm:$0xff]
      %v3658 = vld [vmem:[%s5 + $0x20] sm:$0xff]
      %v3659 = vld [vmem:[%s5 + $0x28] sm:$0xff]
      %v3660 = vld [vmem:[%s5 + $0x30] sm:$0xff]
      %v3661 = vld [vmem:[%s5 + $0x38] sm:$0xff]
      %v3662 = vld [vmem:[%s5 + $0x40] sm:$0xff]
      %v3663 = vld [vmem:[%s6] sm:$0x1]
      %v3665 = vlaneseq
      %v3666 = vshrl.u32 %v3665, 7
      %v3667 = vsub.s32 0, %v3666
      %v3668 = vrot.slane %v3663, %v3667
      %v3671 = vsel %vm3136, %v3646, 0
      %v3674 = vsel %vm3136, %v3647, 0
      %v3677 = vsel %vm3136, %v3648, 0
      %v3680 = vsel %vm3136, %v3649, 0
      %v3683 = vsel %vm3136, %v3650, 0
      %v3686 = vsel %vm3136, %v3651, 0
      %v3689 = vsel %vm3136, %v3652, 0
      %v3692 = vsel %vm3136, %v3653, 0
      %3694 = vmatprep.subr.mxu0 0.0
      %3695 = vmatpush1.msra.mxu0 %v3654
      %3696 = vmatprep.subr.mxu0 0.0
      %3697 = vmatpush1.msra.mxu0 %v3655
      %3698 = vmatprep.subr.mxu0 0.0
      %3699 = vmatpush1.msra.mxu0 %v3656
      %3700 = vmatprep.subr.mxu0 0.0
      %3701 = vmatpush1.msra.mxu0 %v3657
      %3702 = vmatprep.subr.mxu0 0.0
      %3703 = vmatpush1.msra.mxu0 %v3658
      %3704 = vmatprep.subr.mxu0 0.0
      %3705 = vmatpush1.msra.mxu0 %v3659
      %3706 = vmatprep.subr.mxu0 0.0
      %3707 = vmatpush1.msra.mxu0 %v3660
      %3708 = vmatprep.subr.mxu0 0.0
      %3709 = vmatpush1.msra.mxu0 %v3661
      %3710 = vmatprep.subr.mxu0 0.0
      %3711 = vmatpush1.msra.mxu0 %v3662
      %3712 = vmatprep.subr.mxu0 0.0
      %3713 = vmatpush1.msra.mxu0 0.0
      %3714 = vmatprep.subr.mxu0 0.0
      %3715 = vmatpush1.msra.mxu0 0.0
      %3716 = vmatprep.subr.mxu0 0.0
      %3717 = vmatpush1.msra.mxu0 0.0
      %3718 = vmatprep.subr.mxu0 0.0
      %3719 = vmatpush1.msra.mxu0 0.0
      %3720 = vmatprep.subr.mxu0 0.0
      %3721 = vmatpush1.msra.mxu0 0.0
      %3722 = vmatprep.subr.mxu0 0.0
      %3723 = vmatpush1.msra.mxu0 0.0
      %3724 = vmatprep.subr.mxu0 0.0
      %3725 = vmatpush1.msra.mxu0 0.0
      %3726 = vmatprep.subr.mxu0 0.0
      %3727 = vmatpush1.msra.mxu0 0.0
      %3728 = vmatprep.subr.mxu0 0.0
      %3729 = vmatpush1.msra.mxu0 0.0
      %3730 = vmatprep.subr.mxu0 0.0
      %3731 = vmatpush1.msra.mxu0 0.0
      %3732 = vmatprep.subr.mxu0 0.0
      %3733 = vmatpush1.msra.mxu0 0.0
      %3734 = vmatprep.subr.mxu0 0.0
      %3735 = vmatpush1.msra.mxu0 0.0
      %3736 = vmatprep.subr.mxu0 0.0
      %3737 = vmatpush1.msra.mxu0 0.0
      %3738 = vmatprep.subr.mxu0 0.0
      %3739 = vmatpush1.msra.mxu0 0.0
      %3740 = vmatprep.subr.mxu0 0.0
      %3741 = vmatpush1.msra.mxu0 0.0
      %3742 = vmatprep.subr.mxu0 0.0
      %3743 = vmatpush1.msra.mxu0 0.0
      %3744 = vmatprep.subr.mxu0 0.0
      %3745 = vmatpush1.msra.mxu0 0.0
      %3746 = vmatprep.subr.mxu0 0.0
      %3747 = vmatpush1.msra.mxu0 0.0
      %3748 = vmatprep.subr.mxu0 0.0
      %3749 = vmatpush1.msra.mxu0 0.0
      %3750 = vmatprep.subr.mxu0 0.0
      %3751 = vmatpush1.msra.mxu0 0.0
      %3752 = vmatprep.subr.mxu0 0.0
      %3753 = vmatpush1.msra.mxu0 0.0
      %3754 = vmatprep.subr.mxu0 0.0
      %3755 = vmatpush1.msra.mxu0 0.0
      %3756 = vmatprep.subr.mxu0 0.0
      %3757 = vmatpush1.msra.mxu0 0.0
      %3758 = vmatprep.mubr.f32.mxu0 0.0
      %3759 = vmatmul.mubr.f32.gmra.mrb[0].mxu0 %v3671
      %v3760 = vpop.f32.mrb[0].mxu0
      %v3761 = vadd.f32 %v3668, %v3760
      %v3762 = vpop.f32.mrb[0].mxu0
      %3763 = vmatprep.mubr.f32.mxu0 0.0
      %3764 = vmatmul.mubr.f32.gmra.mrb[0].mxu0 %v3674
      %v3765 = vpop.f32.mrb[0].mxu0
      %v3766 = vadd.f32 %v3668, %v3765
      %v3767 = vpop.f32.mrb[0].mxu0
      %3768 = vmatprep.mubr.f32.mxu0 0.0
      %3769 = vmatmul.mubr.f32.gmra.mrb[0].mxu0 %v3677
      %v3770 = vpop.f32.mrb[0].mxu0
      %v3771 = vadd.f32 %v3668, %v3770
      %v3772 = vpop.f32.mrb[0].mxu0
      %3773 = vmatprep.mubr.f32.mxu0 0.0
      %3774 = vmatmul.mubr.f32.gmra.mrb[0].mxu0 %v3680
      %v3775 = vpop.f32.mrb[0].mxu0
      %v3776 = vadd.f32 %v3668, %v3775
      %v3777 = vpop.f32.mrb[0].mxu0
      %3778 = vmatprep.mubr.f32.mxu0 0.0
      %3779 = vmatmul.mubr.f32.gmra.mrb[0].mxu0 %v3683
      %v3780 = vpop.f32.mrb[0].mxu0
      %v3781 = vadd.f32 %v3668, %v3780
      %v3782 = vpop.f32.mrb[0].mxu0
      %3783 = vmatprep.mubr.f32.mxu0 0.0
      %3784 = vmatmul.mubr.f32.gmra.mrb[0].mxu0 %v3686
      %v3785 = vpop.f32.mrb[0].mxu0
      %v3786 = vadd.f32 %v3668, %v3785
      %v3787 = vpop.f32.mrb[0].mxu0
      %3788 = vmatprep.mubr.f32.mxu0 0.0
      %3789 = vmatmul.mubr.f32.gmra.mrb[0].mxu0 %v3689
      %v3790 = vpop.f32.mrb[0].mxu0
      %v3791 = vadd.f32 %v3668, %v3790
      %v3792 = vpop.f32.mrb[0].mxu0
      %3793 = vmatprep.mubr.f32.mxu0 0.0
      %3794 = vmatmul.mubr.f32.gmra.mrb[0].mxu0 %v3692
      %v3795 = vpop.f32.mrb[0].mxu0
      %v3796 = vadd.f32 %v3668, %v3795
      %v3797 = vpop.f32.mrb[0].mxu0
      %3798 = vdwg.mxu0
      %v3799 = vadd.f32 %v2695, %v3761
      %v3800 = vadd.f32 %v2696, %v3766
      %v3801 = vadd.f32 %v2697, %v3771
      %v3802 = vadd.f32 %v2698, %v3776
      %v3803 = vadd.f32 %v2699, %v3781
      %v3804 = vadd.f32 %v2700, %v3786
      %v3805 = vadd.f32 %v2701, %v3791
      %v3806 = vadd.f32 %v2702, %v3796
      %3807 = vst.msk [vmem:[#allocation7] sm:$0xff] %vm2232, 0.0
      %3808 = vst.msk [vmem:[#allocation7 + $0x8] sm:$0x3] %vm2235, 0.0
      %3809 = vst.msk [vmem:[#allocation7 + $0x10] sm:$0xff] %vm2232, 0.0
      %3810 = vst.msk [vmem:[#allocation7 + $0x18] sm:$0x3] %vm2235, 0.0
      %3811 = vst.msk [vmem:[#allocation7 + $0x20] sm:$0xff] %vm2232, 0.0
      %3812 = vst.msk [vmem:[#allocation7 + $0x28] sm:$0x3] %vm2235, 0.0
      %3813 = vst.msk [vmem:[#allocation7 + $0x30] sm:$0xff] %vm2232, 0.0
      %3814 = vst.msk [vmem:[#allocation7 + $0x38] sm:$0x3] %vm2235, 0.0
      %3815 = vst.msk [vmem:[#allocation7 + $0x40] sm:$0xff] %vm2232, 0.0
      %3816 = vst.msk [vmem:[#allocation7 + $0x48] sm:$0x3] %vm2235, 0.0
      %3817 = vst.msk [vmem:[#allocation7 + $0x50] sm:$0xff] %vm2232, 0.0
      %3818 = vst.msk [vmem:[#allocation7 + $0x58] sm:$0x3] %vm2235, 0.0
      %3819 = vst.msk [vmem:[#allocation7 + $0x60] sm:$0xff] %vm2232, 0.0
      %3820 = vst.msk [vmem:[#allocation7 + $0x68] sm:$0x3] %vm2235, 0.0
      %3821 = vst.msk [vmem:[#allocation7 + $0x70] sm:$0xff] %vm2232, 0.0
      %3822 = vst.msk [vmem:[#allocation7 + $0x78] sm:$0x3] %vm2235, 0.0
      %3823 = vst.msk [vmem:[#allocation7 + $0x80] sm:$0xff] %vm2232, 0.0
      %3824 = vst.msk [vmem:[#allocation7 + $0x88] sm:$0x3] %vm2235, 0.0
      %3825 = vst.msk [vmem:[#allocation7 + $0x90] sm:$0xff] %vm2232, 0.0
      %3826 = vst.msk [vmem:[#allocation7 + $0x98] sm:$0x3] %vm2235, 0.0
      %v3827 = vmax.f32 %v3799, 0.0
      %v3828 = vmax.f32 %v3800, 0.0
      %v3829 = vmax.f32 %v3801, 0.0
      %v3830 = vmax.f32 %v3802, 0.0
      %v3831 = vmax.f32 %v3803, 0.0
      %v3832 = vmax.f32 %v3804, 0.0
      %v3833 = vmax.f32 %v3805, 0.0
      %v3834 = vmax.f32 %v3806, 0.0
      %3835 = vst.msk [vmem:[%s2731 + $0x1] sm:$0xff] %vm2232, %v3827
      %3836 = vst.msk [vmem:[%s2731 + $0x11] sm:$0xff] %vm2232, %v3828
      %3837 = vst.msk [vmem:[%s2731 + $0x21] sm:$0xff] %vm2232, %v3829
      %3838 = vst.msk [vmem:[%s2731 + $0x31] sm:$0xff] %vm2232, %v3830
      %3839 = vst.msk [vmem:[%s2731 + $0x41] sm:$0xff] %vm2232, %v3831
      %3840 = vst.msk [vmem:[%s2731 + $0x51] sm:$0xff] %vm2232, %v3832
      %3841 = vst.msk [vmem:[%s2731 + $0x61] sm:$0xff] %vm2232, %v3833
      %3842 = vst.msk [vmem:[%s2731 + $0x71] sm:$0xff] %vm2232, %v3834
      %v3843 = vld [vmem:[#allocation7] sm:$0xff]
      %v3844 = vld [vmem:[#allocation7 + $0x8] sm:$0x3]
      %v3845 = vld [vmem:[#allocation7 + $0x10] sm:$0xff]
      %v3846 = vld [vmem:[#allocation7 + $0x18] sm:$0x3]
      %v3847 = vld [vmem:[#allocation7 + $0x20] sm:$0xff]
      %v3848 = vld [vmem:[#allocation7 + $0x28] sm:$0x3]
      %v3849 = vld [vmem:[#allocation7 + $0x30] sm:$0xff]
      %v3850 = vld [vmem:[#allocation7 + $0x38] sm:$0x3]
      %v3851 = vld [vmem:[#allocation7 + $0x40] sm:$0xff]
      %v3852 = vld [vmem:[#allocation7 + $0x48] sm:$0x3]
      %v3853 = vld [vmem:[#allocation7 + $0x50] sm:$0xff]
      %v3854 = vld [vmem:[#allocation7 + $0x58] sm:$0x3]
      %v3855 = vld [vmem:[#allocation7 + $0x60] sm:$0xff]
      %v3856 = vld [vmem:[#allocation7 + $0x68] sm:$0x3]
      %v3857 = vld [vmem:[#allocation7 + $0x70] sm:$0xff]
      %v3858 = vld [vmem:[#allocation7 + $0x78] sm:$0x3]
      %v3859 = vld [vmem:[#allocation7 + $0x80] sm:$0xff]
      %v3860 = vld [vmem:[#allocation7 + $0x88] sm:$0x3]
      %v3861 = vld [vmem:[#allocation7 + $0x90] sm:$0xff]
      %v3862 = vld [vmem:[#allocation7 + $0x98] sm:$0x3]
      %3863 = vst.msk [vmem:[#allocation8] sm:$0xff] %vm2232, %v3843
      %3864 = vst.msk [vmem:[#allocation8 + $0x8] sm:$0xff] %vm2232, %v3845
      %3865 = vst.msk [vmem:[#allocation8 + $0x10] sm:$0xff] %vm2232, %v3847
      %3866 = vst.msk [vmem:[#allocation8 + $0x18] sm:$0xff] %vm2232, %v3849
      %3867 = vst.msk [vmem:[#allocation8 + $0x20] sm:$0xff] %vm2232, %v3851
      %3868 = vst.msk [vmem:[#allocation8 + $0x28] sm:$0xff] %vm2232, %v3853
      %3869 = vst.msk [vmem:[#allocation8 + $0x30] sm:$0xff] %vm2232, %v3855
      %3870 = vst.msk [vmem:[#allocation8 + $0x38] sm:$0xff] %vm2232, %v3857
      %v3887 = vrot.slane %v3843, 1
      %v3888 = vrot.slane %v3844, 1
      %v3889 = vsel %vm642, %v3887, %v3888
      %v3890 = vrot.slane %v3845, 1
      %v3891 = vrot.slane %v3846, 1
      %v3892 = vsel %vm642, %v3890, %v3891
      %v3893 = vrot.slane %v3847, 1
      %v3894 = vrot.slane %v3848, 1
      %v3895 = vsel %vm642, %v3893, %v3894
      %v3896 = vrot.slane %v3849, 1
      %v3897 = vrot.slane %v3850, 1
      %v3898 = vsel %vm642, %v3896, %v3897
      %v3899 = vrot.slane %v3851, 1
      %v3900 = vrot.slane %v3852, 1
      %v3901 = vsel %vm642, %v3899, %v3900
      %v3902 = vrot.slane %v3853, 1
      %v3903 = vrot.slane %v3854, 1
      %v3904 = vsel %vm642, %v3902, %v3903
      %v3905 = vrot.slane %v3855, 1
      %v3906 = vrot.slane %v3856, 1
      %v3907 = vsel %vm642, %v3905, %v3906
      %v3908 = vrot.slane %v3857, 1
      %v3909 = vrot.slane %v3858, 1
      %v3910 = vsel %vm642, %v3908, %v3909
      %3911 = vrot.lane.b32.xlu0 %v3889, 8
      %v3912 = vpop.permute.xlu0 %3911
      %3913 = vrot.lane.b32.xlu0 %v3892, 8
      %v3914 = vpop.permute.xlu0 %3913
      %3915 = vrot.lane.b32.xlu0 %v3895, 8
      %v3916 = vpop.permute.xlu0 %3915
      %3917 = vrot.lane.b32.xlu0 %v3898, 8
      %v3918 = vpop.permute.xlu0 %3917
      %3919 = vrot.lane.b32.xlu0 %v3901, 8
      %v3920 = vpop.permute.xlu0 %3919
      %3921 = vrot.lane.b32.xlu0 %v3904, 8
      %v3922 = vpop.permute.xlu0 %3921
      %3923 = vrot.lane.b32.xlu0 %v3907, 8
      %v3924 = vpop.permute.xlu0 %3923
      %3925 = vrot.lane.b32.xlu0 %v3910, 8
      %v3926 = vpop.permute.xlu0 %3925
      %3935 = vst.msk [vmem:[#allocation8] sm:$0xff] %vm2832, %v3912
      %3936 = vst.msk [vmem:[#allocation8 + $0x8] sm:$0xff] %vm2832, %v3914
      %3937 = vst.msk [vmem:[#allocation8 + $0x10] sm:$0xff] %vm2832, %v3916
      %3938 = vst.msk [vmem:[#allocation8 + $0x18] sm:$0xff] %vm2832, %v3918
      %3939 = vst.msk [vmem:[#allocation8 + $0x20] sm:$0xff] %vm2832, %v3920
      %3940 = vst.msk [vmem:[#allocation8 + $0x28] sm:$0xff] %vm2832, %v3922
      %3941 = vst.msk [vmem:[#allocation8 + $0x30] sm:$0xff] %vm2832, %v3924
      %3942 = vst.msk [vmem:[#allocation8 + $0x38] sm:$0xff] %vm2832, %v3926
      %v3943 = vrot.slane %v3843, 2
      %v3944 = vrot.slane %v3844, 2
      %v3945 = vsel %vm852, %v3943, %v3944
      %v3946 = vrot.slane %v3845, 2
      %v3947 = vrot.slane %v3846, 2
      %v3948 = vsel %vm852, %v3946, %v3947
      %v3949 = vrot.slane %v3847, 2
      %v3950 = vrot.slane %v3848, 2
      %v3951 = vsel %vm852, %v3949, %v3950
      %v3952 = vrot.slane %v3849, 2
      %v3953 = vrot.slane %v3850, 2
      %v3954 = vsel %vm852, %v3952, %v3953
      %v3955 = vrot.slane %v3851, 2
      %v3956 = vrot.slane %v3852, 2
      %v3957 = vsel %vm852, %v3955, %v3956
      %v3958 = vrot.slane %v3853, 2
      %v3959 = vrot.slane %v3854, 2
      %v3960 = vsel %vm852, %v3958, %v3959
      %v3961 = vrot.slane %v3855, 2
      %v3962 = vrot.slane %v3856, 2
      %v3963 = vsel %vm852, %v3961, %v3962
      %v3964 = vrot.slane %v3857, 2
      %v3965 = vrot.slane %v3858, 2
      %v3966 = vsel %vm852, %v3964, %v3965
      %3967 = vrot.lane.b32.xlu0 %v3945, 16
      %v3968 = vpop.permute.xlu0 %3967
      %3969 = vrot.lane.b32.xlu0 %v3948, 16
      %v3970 = vpop.permute.xlu0 %3969
      %3971 = vrot.lane.b32.xlu0 %v3951, 16
      %v3972 = vpop.permute.xlu0 %3971
      %3973 = vrot.lane.b32.xlu0 %v3954, 16
      %v3974 = vpop.permute.xlu0 %3973
      %3975 = vrot.lane.b32.xlu0 %v3957, 16
      %v3976 = vpop.permute.xlu0 %3975
      %3977 = vrot.lane.b32.xlu0 %v3960, 16
      %v3978 = vpop.permute.xlu0 %3977
      %3979 = vrot.lane.b32.xlu0 %v3963, 16
      %v3980 = vpop.permute.xlu0 %3979
      %3981 = vrot.lane.b32.xlu0 %v3966, 16
      %v3982 = vpop.permute.xlu0 %3981
      %3991 = vst.msk [vmem:[#allocation8] sm:$0xff] %vm2889, %v3968
      %3992 = vst.msk [vmem:[#allocation8 + $0x8] sm:$0xff] %vm2889, %v3970
      %3993 = vst.msk [vmem:[#allocation8 + $0x10] sm:$0xff] %vm2889, %v3972
      %3994 = vst.msk [vmem:[#allocation8 + $0x18] sm:$0xff] %vm2889, %v3974
      %3995 = vst.msk [vmem:[#allocation8 + $0x20] sm:$0xff] %vm2889, %v3976
      %3996 = vst.msk [vmem:[#allocation8 + $0x28] sm:$0xff] %vm2889, %v3978
      %3997 = vst.msk [vmem:[#allocation8 + $0x30] sm:$0xff] %vm2889, %v3980
      %3998 = vst.msk [vmem:[#allocation8 + $0x38] sm:$0xff] %vm2889, %v3982
      %4000 = vrot.lane.b32.xlu0 %v3845, 24
      %v4001 = vpop.permute.xlu0 %4000
      %4002 = vrot.lane.b32.xlu0 %v3847, 24
      %v4003 = vpop.permute.xlu0 %4002
      %4004 = vrot.lane.b32.xlu0 %v3849, 24
      %v4005 = vpop.permute.xlu0 %4004
      %4006 = vrot.lane.b32.xlu0 %v3851, 24
      %v4007 = vpop.permute.xlu0 %4006
      %4008 = vrot.lane.b32.xlu0 %v3853, 24
      %v4009 = vpop.permute.xlu0 %4008
      %4010 = vrot.lane.b32.xlu0 %v3855, 24
      %v4011 = vpop.permute.xlu0 %4010
      %4012 = vrot.lane.b32.xlu0 %v3857, 24
      %v4013 = vpop.permute.xlu0 %4012
      %4014 = vrot.lane.b32.xlu0 %v3859, 24
      %v4015 = vpop.permute.xlu0 %4014
      %4024 = vst.msk [vmem:[#allocation8] sm:$0xff] %vm2923, %v4001
      %4025 = vst.msk [vmem:[#allocation8 + $0x8] sm:$0xff] %vm2923, %v4003
      %4026 = vst.msk [vmem:[#allocation8 + $0x10] sm:$0xff] %vm2923, %v4005
      %4027 = vst.msk [vmem:[#allocation8 + $0x18] sm:$0xff] %vm2923, %v4007
      %4028 = vst.msk [vmem:[#allocation8 + $0x20] sm:$0xff] %vm2923, %v4009
      %4029 = vst.msk [vmem:[#allocation8 + $0x28] sm:$0xff] %vm2923, %v4011
      %4030 = vst.msk [vmem:[#allocation8 + $0x30] sm:$0xff] %vm2923, %v4013
      %4031 = vst.msk [vmem:[#allocation8 + $0x38] sm:$0xff] %vm2923, %v4015
      %v4033 = vrot.slane %v3859, 1
      %v4034 = vrot.slane %v3860, 1
      %v4035 = vsel %vm642, %v4033, %v4034
      %4036 = vrot.lane.b32.xlu0 %v3892, 32
      %v4037 = vpop.permute.xlu0 %4036
      %4038 = vrot.lane.b32.xlu0 %v3895, 32
      %v4039 = vpop.permute.xlu0 %4038
      %4040 = vrot.lane.b32.xlu0 %v3898, 32
      %v4041 = vpop.permute.xlu0 %4040
      %4042 = vrot.lane.b32.xlu0 %v3901, 32
      %v4043 = vpop.permute.xlu0 %4042
      %4044 = vrot.lane.b32.xlu0 %v3904, 32
      %v4045 = vpop.permute.xlu0 %4044
      %4046 = vrot.lane.b32.xlu0 %v3907, 32
      %v4047 = vpop.permute.xlu0 %4046
      %4048 = vrot.lane.b32.xlu0 %v3910, 32
      %v4049 = vpop.permute.xlu0 %4048
      %4050 = vrot.lane.b32.xlu0 %v4035, 32
      %v4051 = vpop.permute.xlu0 %4050
      %4060 = vst.msk [vmem:[#allocation8] sm:$0xff] %vm2960, %v4037
      %4061 = vst.msk [vmem:[#allocation8 + $0x8] sm:$0xff] %vm2960, %v4039
      %4062 = vst.msk [vmem:[#allocation8 + $0x10] sm:$0xff] %vm2960, %v4041
      %4063 = vst.msk [vmem:[#allocation8 + $0x18] sm:$0xff] %vm2960, %v4043
      %4064 = vst.msk [vmem:[#allocation8 + $0x20] sm:$0xff] %vm2960, %v4045
      %4065 = vst.msk [vmem:[#allocation8 + $0x28] sm:$0xff] %vm2960, %v4047
      %4066 = vst.msk [vmem:[#allocation8 + $0x30] sm:$0xff] %vm2960, %v4049
      %4067 = vst.msk [vmem:[#allocation8 + $0x38] sm:$0xff] %vm2960, %v4051
      %v4068 = vrot.slane %v3859, 2
      %v4069 = vrot.slane %v3860, 2
      %v4070 = vsel %vm852, %v4068, %v4069
      %4071 = vrot.lane.b32.xlu0 %v3948, 40
      %v4072 = vpop.permute.xlu0 %4071
      %4073 = vrot.lane.b32.xlu0 %v3951, 40
      %v4074 = vpop.permute.xlu0 %4073
      %4075 = vrot.lane.b32.xlu0 %v3954, 40
      %v4076 = vpop.permute.xlu0 %4075
      %4077 = vrot.lane.b32.xlu0 %v3957, 40
      %v4078 = vpop.permute.xlu0 %4077
      %4079 = vrot.lane.b32.xlu0 %v3960, 40
      %v4080 = vpop.permute.xlu0 %4079
      %4081 = vrot.lane.b32.xlu0 %v3963, 40
      %v4082 = vpop.permute.xlu0 %4081
      %4083 = vrot.lane.b32.xlu0 %v3966, 40
      %v4084 = vpop.permute.xlu0 %4083
      %4085 = vrot.lane.b32.xlu0 %v4070, 40
      %v4086 = vpop.permute.xlu0 %4085
      %4095 = vst.msk [vmem:[#allocation8] sm:$0xff] %vm2996, %v4072
      %4096 = vst.msk [vmem:[#allocation8 + $0x8] sm:$0xff] %vm2996, %v4074
      %4097 = vst.msk [vmem:[#allocation8 + $0x10] sm:$0xff] %vm2996, %v4076
      %4098 = vst.msk [vmem:[#allocation8 + $0x18] sm:$0xff] %vm2996, %v4078
      %4099 = vst.msk [vmem:[#allocation8 + $0x20] sm:$0xff] %vm2996, %v4080
      %4100 = vst.msk [vmem:[#allocation8 + $0x28] sm:$0xff] %vm2996, %v4082
      %4101 = vst.msk [vmem:[#allocation8 + $0x30] sm:$0xff] %vm2996, %v4084
      %4102 = vst.msk [vmem:[#allocation8 + $0x38] sm:$0xff] %vm2996, %v4086
      %4104 = vrot.lane.b32.xlu0 %v3847, 48
      %v4105 = vpop.permute.xlu0 %4104
      %4106 = vrot.lane.b32.xlu0 %v3849, 48
      %v4107 = vpop.permute.xlu0 %4106
      %4108 = vrot.lane.b32.xlu0 %v3851, 48
      %v4109 = vpop.permute.xlu0 %4108
      %4110 = vrot.lane.b32.xlu0 %v3853, 48
      %v4111 = vpop.permute.xlu0 %4110
      %4112 = vrot.lane.b32.xlu0 %v3855, 48
      %v4113 = vpop.permute.xlu0 %4112
      %4114 = vrot.lane.b32.xlu0 %v3857, 48
      %v4115 = vpop.permute.xlu0 %4114
      %4116 = vrot.lane.b32.xlu0 %v3859, 48
      %v4117 = vpop.permute.xlu0 %4116
      %4118 = vrot.lane.b32.xlu0 %v3861, 48
      %v4119 = vpop.permute.xlu0 %4118
      %4128 = vst.msk [vmem:[#allocation8] sm:$0xff] %vm3030, %v4105
      %4129 = vst.msk [vmem:[#allocation8 + $0x8] sm:$0xff] %vm3030, %v4107
      %4130 = vst.msk [vmem:[#allocation8 + $0x10] sm:$0xff] %vm3030, %v4109
      %4131 = vst.msk [vmem:[#allocation8 + $0x18] sm:$0xff] %vm3030, %v4111
      %4132 = vst.msk [vmem:[#allocation8 + $0x20] sm:$0xff] %vm3030, %v4113
      %4133 = vst.msk [vmem:[#allocation8 + $0x28] sm:$0xff] %vm3030, %v4115
      %4134 = vst.msk [vmem:[#allocation8 + $0x30] sm:$0xff] %vm3030, %v4117
      %4135 = vst.msk [vmem:[#allocation8 + $0x38] sm:$0xff] %vm3030, %v4119
      %v4137 = vrot.slane %v3861, 1
      %v4138 = vrot.slane %v3862, 1
      %v4139 = vsel %vm642, %v4137, %v4138
      %4140 = vrot.lane.b32.xlu0 %v3895, 56
      %v4141 = vpop.permute.xlu0 %4140
      %4142 = vrot.lane.b32.xlu0 %v3898, 56
      %v4143 = vpop.permute.xlu0 %4142
      %4144 = vrot.lane.b32.xlu0 %v3901, 56
      %v4145 = vpop.permute.xlu0 %4144
      %4146 = vrot.lane.b32.xlu0 %v3904, 56
      %v4147 = vpop.permute.xlu0 %4146
      %4148 = vrot.lane.b32.xlu0 %v3907, 56
      %v4149 = vpop.permute.xlu0 %4148
      %4150 = vrot.lane.b32.xlu0 %v3910, 56
      %v4151 = vpop.permute.xlu0 %4150
      %4152 = vrot.lane.b32.xlu0 %v4035, 56
      %v4153 = vpop.permute.xlu0 %4152
      %4154 = vrot.lane.b32.xlu0 %v4139, 56
      %v4155 = vpop.permute.xlu0 %4154
      %4164 = vst.msk [vmem:[#allocation8] sm:$0xff] %vm3067, %v4141
      %4165 = vst.msk [vmem:[#allocation8 + $0x8] sm:$0xff] %vm3067, %v4143
      %4166 = vst.msk [vmem:[#allocation8 + $0x10] sm:$0xff] %vm3067, %v4145
      %4167 = vst.msk [vmem:[#allocation8 + $0x18] sm:$0xff] %vm3067, %v4147
      %4168 = vst.msk [vmem:[#allocation8 + $0x20] sm:$0xff] %vm3067, %v4149
      %4169 = vst.msk [vmem:[#allocation8 + $0x28] sm:$0xff] %vm3067, %v4151
      %4170 = vst.msk [vmem:[#allocation8 + $0x30] sm:$0xff] %vm3067, %v4153
      %4171 = vst.msk [vmem:[#allocation8 + $0x38] sm:$0xff] %vm3067, %v4155
      %v4172 = vrot.slane %v3861, 2
      %v4173 = vrot.slane %v3862, 2
      %v4174 = vsel %vm852, %v4172, %v4173
      %4175 = vrot.lane.b32.xlu0 %v3951, 64
      %v4176 = vpop.permute.xlu0 %4175
      %4177 = vrot.lane.b32.xlu0 %v3954, 64
      %v4178 = vpop.permute.xlu0 %4177
      %4179 = vrot.lane.b32.xlu0 %v3957, 64
      %v4180 = vpop.permute.xlu0 %4179
      %4181 = vrot.lane.b32.xlu0 %v3960, 64
      %v4182 = vpop.permute.xlu0 %4181
      %4183 = vrot.lane.b32.xlu0 %v3963, 64
      %v4184 = vpop.permute.xlu0 %4183
      %4185 = vrot.lane.b32.xlu0 %v3966, 64
      %v4186 = vpop.permute.xlu0 %4185
      %4187 = vrot.lane.b32.xlu0 %v4070, 64
      %v4188 = vpop.permute.xlu0 %4187
      %4189 = vrot.lane.b32.xlu0 %v4174, 64
      %v4190 = vpop.permute.xlu0 %4189
      %4199 = vst.msk [vmem:[#allocation8] sm:$0xff] %vm3103, %v4176
      %4200 = vst.msk [vmem:[#allocation8 + $0x8] sm:$0xff] %vm3103, %v4178
      %4201 = vst.msk [vmem:[#allocation8 + $0x10] sm:$0xff] %vm3103, %v4180
      %4202 = vst.msk [vmem:[#allocation8 + $0x18] sm:$0xff] %vm3103, %v4182
      %4203 = vst.msk [vmem:[#allocation8 + $0x20] sm:$0xff] %vm3103, %v4184
      %4204 = vst.msk [vmem:[#allocation8 + $0x28] sm:$0xff] %vm3103, %v4186
      %4205 = vst.msk [vmem:[#allocation8 + $0x30] sm:$0xff] %vm3103, %v4188
      %4206 = vst.msk [vmem:[#allocation8 + $0x38] sm:$0xff] %vm3103, %v4190
      %v4207 = vld [vmem:[#allocation8] sm:$0xff]
      %v4208 = vld [vmem:[#allocation8 + $0x8] sm:$0xff]
      %v4209 = vld [vmem:[#allocation8 + $0x10] sm:$0xff]
      %v4210 = vld [vmem:[#allocation8 + $0x18] sm:$0xff]
      %v4211 = vld [vmem:[#allocation8 + $0x20] sm:$0xff]
      %v4212 = vld [vmem:[#allocation8 + $0x28] sm:$0xff]
      %v4213 = vld [vmem:[#allocation8 + $0x30] sm:$0xff]
      %v4214 = vld [vmem:[#allocation8 + $0x38] sm:$0xff]
      %v4215 = vld [vmem:[%s7] sm:$0xff]
      %v4216 = vld [vmem:[%s7 + $0x8] sm:$0xff]
      %v4217 = vld [vmem:[%s7 + $0x10] sm:$0xff]
      %v4218 = vld [vmem:[%s7 + $0x18] sm:$0xff]
      %v4219 = vld [vmem:[%s7 + $0x20] sm:$0xff]
      %v4220 = vld [vmem:[%s7 + $0x28] sm:$0xff]
      %v4221 = vld [vmem:[%s7 + $0x30] sm:$0xff]
      %v4222 = vld [vmem:[%s7 + $0x38] sm:$0xff]
      %v4223 = vld [vmem:[%s7 + $0x40] sm:$0xff]
      %v4224 = vld [vmem:[%s8] sm:$0x1]
      %v4226 = vlaneseq
      %v4227 = vshrl.u32 %v4226, 7
      %v4228 = vsub.s32 0, %v4227
      %v4229 = vrot.slane %v4224, %v4228
      %v4232 = vsel %vm3136, %v4207, 0
      %v4235 = vsel %vm3136, %v4208, 0
      %v4238 = vsel %vm3136, %v4209, 0
      %v4241 = vsel %vm3136, %v4210, 0
      %v4244 = vsel %vm3136, %v4211, 0
      %v4247 = vsel %vm3136, %v4212, 0
      %v4250 = vsel %vm3136, %v4213, 0
      %v4253 = vsel %vm3136, %v4214, 0
      %4255 = vmatprep.subr.mxu0 0.0
      %4256 = vmatpush1.msra.mxu0 %v4215
      %4257 = vmatprep.subr.mxu0 0.0
      %4258 = vmatpush1.msra.mxu0 %v4216
      %4259 = vmatprep.subr.mxu0 0.0
      %4260 = vmatpush1.msra.mxu0 %v4217
      %4261 = vmatprep.subr.mxu0 0.0
      %4262 = vmatpush1.msra.mxu0 %v4218
      %4263 = vmatprep.subr.mxu0 0.0
      %4264 = vmatpush1.msra.mxu0 %v4219
      %4265 = vmatprep.subr.mxu0 0.0
      %4266 = vmatpush1.msra.mxu0 %v4220
      %4267 = vmatprep.subr.mxu0 0.0
      %4268 = vmatpush1.msra.mxu0 %v4221
      %4269 = vmatprep.subr.mxu0 0.0
      %4270 = vmatpush1.msra.mxu0 %v4222
      %4271 = vmatprep.subr.mxu0 0.0
      %4272 = vmatpush1.msra.mxu0 %v4223
      %4273 = vmatprep.subr.mxu0 0.0
      %4274 = vmatpush1.msra.mxu0 0.0
      %4275 = vmatprep.subr.mxu0 0.0
      %4276 = vmatpush1.msra.mxu0 0.0
      %4277 = vmatprep.subr.mxu0 0.0
      %4278 = vmatpush1.msra.mxu0 0.0
      %4279 = vmatprep.subr.mxu0 0.0
      %4280 = vmatpush1.msra.mxu0 0.0
      %4281 = vmatprep.subr.mxu0 0.0
      %4282 = vmatpush1.msra.mxu0 0.0
      %4283 = vmatprep.subr.mxu0 0.0
      %4284 = vmatpush1.msra.mxu0 0.0
      %4285 = vmatprep.subr.mxu0 0.0
      %4286 = vmatpush1.msra.mxu0 0.0
      %4287 = vmatprep.subr.mxu0 0.0
      %4288 = vmatpush1.msra.mxu0 0.0
      %4289 = vmatprep.subr.mxu0 0.0
      %4290 = vmatpush1.msra.mxu0 0.0
      %4291 = vmatprep.subr.mxu0 0.0
      %4292 = vmatpush1.msra.mxu0 0.0
      %4293 = vmatprep.subr.mxu0 0.0
      %4294 = vmatpush1.msra.mxu0 0.0
      %4295 = vmatprep.subr.mxu0 0.0
      %4296 = vmatpush1.msra.mxu0 0.0
      %4297 = vmatprep.subr.mxu0 0.0
      %4298 = vmatpush1.msra.mxu0 0.0
      %4299 = vmatprep.subr.mxu0 0.0
      %4300 = vmatpush1.msra.mxu0 0.0
      %4301 = vmatprep.subr.mxu0 0.0
      %4302 = vmatpush1.msra.mxu0 0.0
      %4303 = vmatprep.subr.mxu0 0.0
      %4304 = vmatpush1.msra.mxu0 0.0
      %4305 = vmatprep.subr.mxu0 0.0
      %4306 = vmatpush1.msra.mxu0 0.0
      %4307 = vmatprep.subr.mxu0 0.0
      %4308 = vmatpush1.msra.mxu0 0.0
      %4309 = vmatprep.subr.mxu0 0.0
      %4310 = vmatpush1.msra.mxu0 0.0
      %4311 = vmatprep.subr.mxu0 0.0
      %4312 = vmatpush1.msra.mxu0 0.0
      %4313 = vmatprep.subr.mxu0 0.0
      %4314 = vmatpush1.msra.mxu0 0.0
      %4315 = vmatprep.subr.mxu0 0.0
      %4316 = vmatpush1.msra.mxu0 0.0
      %4317 = vmatprep.subr.mxu0 0.0
      %4318 = vmatpush1.msra.mxu0 0.0
      %4319 = vmatprep.mubr.f32.mxu0 0.0
      %4320 = vmatmul.mubr.f32.gmra.mrb[0].mxu0 %v4232
      %v4321 = vpop.f32.mrb[0].mxu0
      %v4322 = vadd.f32 %v4229, %v4321
      %v4323 = vpop.f32.mrb[0].mxu0
      %4324 = vmatprep.mubr.f32.mxu0 0.0
      %4325 = vmatmul.mubr.f32.gmra.mrb[0].mxu0 %v4235
      %v4326 = vpop.f32.mrb[0].mxu0
      %v4327 = vadd.f32 %v4229, %v4326
      %v4328 = vpop.f32.mrb[0].mxu0
      %4329 = vmatprep.mubr.f32.mxu0 0.0
      %4330 = vmatmul.mubr.f32.gmra.mrb[0].mxu0 %v4238
      %v4331 = vpop.f32.mrb[0].mxu0
      %v4332 = vadd.f32 %v4229, %v4331
      %v4333 = vpop.f32.mrb[0].mxu0
      %4334 = vmatprep.mubr.f32.mxu0 0.0
      %4335 = vmatmul.mubr.f32.gmra.mrb[0].mxu0 %v4241
      %v4336 = vpop.f32.mrb[0].mxu0
      %v4337 = vadd.f32 %v4229, %v4336
      %v4338 = vpop.f32.mrb[0].mxu0
      %4339 = vmatprep.mubr.f32.mxu0 0.0
      %4340 = vmatmul.mubr.f32.gmra.mrb[0].mxu0 %v4244
      %v4341 = vpop.f32.mrb[0].mxu0
      %v4342 = vadd.f32 %v4229, %v4341
      %v4343 = vpop.f32.mrb[0].mxu0
      %4344 = vmatprep.mubr.f32.mxu0 0.0
      %4345 = vmatmul.mubr.f32.gmra.mrb[0].mxu0 %v4247
      %v4346 = vpop.f32.mrb[0].mxu0
      %v4347 = vadd.f32 %v4229, %v4346
      %v4348 = vpop.f32.mrb[0].mxu0
      %4349 = vmatprep.mubr.f32.mxu0 0.0
      %4350 = vmatmul.mubr.f32.gmra.mrb[0].mxu0 %v4250
      %v4351 = vpop.f32.mrb[0].mxu0
      %v4352 = vadd.f32 %v4229, %v4351
      %v4353 = vpop.f32.mrb[0].mxu0
      %4354 = vmatprep.mubr.f32.mxu0 0.0
      %4355 = vmatmul.mubr.f32.gmra.mrb[0].mxu0 %v4253
      %v4356 = vpop.f32.mrb[0].mxu0
      %v4357 = vadd.f32 %v4229, %v4356
      %v4358 = vpop.f32.mrb[0].mxu0
      %4359 = vdwg.mxu0
      %v4360 = vmax.f32 %v4322, 0.0
      %v4361 = vmax.f32 %v4327, 0.0
      %v4362 = vmax.f32 %v4332, 0.0
      %v4363 = vmax.f32 %v4337, 0.0
      %v4364 = vmax.f32 %v4342, 0.0
      %v4365 = vmax.f32 %v4347, 0.0
      %v4366 = vmax.f32 %v4352, 0.0
      %v4367 = vmax.f32 %v4357, 0.0
      %4368 = vst.msk [vmem:[%s2731 + $0x1] sm:$0xff] %vm2232, %v4360
      %4369 = vst.msk [vmem:[%s2731 + $0x11] sm:$0xff] %vm2232, %v4361
      %4370 = vst.msk [vmem:[%s2731 + $0x21] sm:$0xff] %vm2232, %v4362
      %4371 = vst.msk [vmem:[%s2731 + $0x31] sm:$0xff] %vm2232, %v4363
      %4372 = vst.msk [vmem:[%s2731 + $0x41] sm:$0xff] %vm2232, %v4364
      %4373 = vst.msk [vmem:[%s2731 + $0x51] sm:$0xff] %vm2232, %v4365
      %4374 = vst.msk [vmem:[%s2731 + $0x61] sm:$0xff] %vm2232, %v4366
      %4375 = vst.msk [vmem:[%s2731 + $0x71] sm:$0xff] %vm2232, %v4367
      %v4376 = vld [vmem:[#allocation7] sm:$0xff]
      %v4377 = vld [vmem:[#allocation7 + $0x8] sm:$0x3]
      %v4378 = vld [vmem:[#allocation7 + $0x10] sm:$0xff]
      %v4379 = vld [vmem:[#allocation7 + $0x18] sm:$0x3]
      %v4380 = vld [vmem:[#allocation7 + $0x20] sm:$0xff]
      %v4381 = vld [vmem:[#allocation7 + $0x28] sm:$0x3]
      %v4382 = vld [vmem:[#allocation7 + $0x30] sm:$0xff]
      %v4383 = vld [vmem:[#allocation7 + $0x38] sm:$0x3]
      %v4384 = vld [vmem:[#allocation7 + $0x40] sm:$0xff]
      %v4385 = vld [vmem:[#allocation7 + $0x48] sm:$0x3]
      %v4386 = vld [vmem:[#allocation7 + $0x50] sm:$0xff]
      %v4387 = vld [vmem:[#allocation7 + $0x58] sm:$0x3]
      %v4388 = vld [vmem:[#allocation7 + $0x60] sm:$0xff]
      %v4389 = vld [vmem:[#allocation7 + $0x68] sm:$0x3]
      %v4390 = vld [vmem:[#allocation7 + $0x70] sm:$0xff]
      %v4391 = vld [vmem:[#allocation7 + $0x78] sm:$0x3]
      %v4392 = vld [vmem:[#allocation7 + $0x80] sm:$0xff]
      %v4393 = vld [vmem:[#allocation7 + $0x88] sm:$0x3]
      %v4394 = vld [vmem:[#allocation7 + $0x90] sm:$0xff]
      %v4395 = vld [vmem:[#allocation7 + $0x98] sm:$0x3]
      %4396 = vst.msk [vmem:[#allocation8] sm:$0xff] %vm2232, %v4376
      %4397 = vst.msk [vmem:[#allocation8 + $0x8] sm:$0xff] %vm2232, %v4378
      %4398 = vst.msk [vmem:[#allocation8 + $0x10] sm:$0xff] %vm2232, %v4380
      %4399 = vst.msk [vmem:[#allocation8 + $0x18] sm:$0xff] %vm2232, %v4382
      %4400 = vst.msk [vmem:[#allocation8 + $0x20] sm:$0xff] %vm2232, %v4384
      %4401 = vst.msk [vmem:[#allocation8 + $0x28] sm:$0xff] %vm2232, %v4386
      %4402 = vst.msk [vmem:[#allocation8 + $0x30] sm:$0xff] %vm2232, %v4388
      %4403 = vst.msk [vmem:[#allocation8 + $0x38] sm:$0xff] %vm2232, %v4390
      %v4420 = vrot.slane %v4376, 1
      %v4421 = vrot.slane %v4377, 1
      %v4422 = vsel %vm642, %v4420, %v4421
      %v4423 = vrot.slane %v4378, 1
      %v4424 = vrot.slane %v4379, 1
      %v4425 = vsel %vm642, %v4423, %v4424
      %v4426 = vrot.slane %v4380, 1
      %v4427 = vrot.slane %v4381, 1
      %v4428 = vsel %vm642, %v4426, %v4427
      %v4429 = vrot.slane %v4382, 1
      %v4430 = vrot.slane %v4383, 1
      %v4431 = vsel %vm642, %v4429, %v4430
      %v4432 = vrot.slane %v4384, 1
      %v4433 = vrot.slane %v4385, 1
      %v4434 = vsel %vm642, %v4432, %v4433
      %v4435 = vrot.slane %v4386, 1
      %v4436 = vrot.slane %v4387, 1
      %v4437 = vsel %vm642, %v4435, %v4436
      %v4438 = vrot.slane %v4388, 1
      %v4439 = vrot.slane %v4389, 1
      %v4440 = vsel %vm642, %v4438, %v4439
      %v4441 = vrot.slane %v4390, 1
      %v4442 = vrot.slane %v4391, 1
      %v4443 = vsel %vm642, %v4441, %v4442
      %4444 = vrot.lane.b32.xlu0 %v4422, 8
      %v4445 = vpop.permute.xlu0 %4444
      %4446 = vrot.lane.b32.xlu0 %v4425, 8
      %v4447 = vpop.permute.xlu0 %4446
      %4448 = vrot.lane.b32.xlu0 %v4428, 8
      %v4449 = vpop.permute.xlu0 %4448
      %4450 = vrot.lane.b32.xlu0 %v4431, 8
      %v4451 = vpop.permute.xlu0 %4450
      %4452 = vrot.lane.b32.xlu0 %v4434, 8
      %v4453 = vpop.permute.xlu0 %4452
      %4454 = vrot.lane.b32.xlu0 %v4437, 8
      %v4455 = vpop.permute.xlu0 %4454
      %4456 = vrot.lane.b32.xlu0 %v4440, 8
      %v4457 = vpop.permute.xlu0 %4456
      %4458 = vrot.lane.b32.xlu0 %v4443, 8
      %v4459 = vpop.permute.xlu0 %4458
      %4468 = vst.msk [vmem:[#allocation8] sm:$0xff] %vm2832, %v4445
      %4469 = vst.msk [vmem:[#allocation8 + $0x8] sm:$0xff] %vm2832, %v4447
      %4470 = vst.msk [vmem:[#allocation8 + $0x10] sm:$0xff] %vm2832, %v4449
      %4471 = vst.msk [vmem:[#allocation8 + $0x18] sm:$0xff] %vm2832, %v4451
      %4472 = vst.msk [vmem:[#allocation8 + $0x20] sm:$0xff] %vm2832, %v4453
      %4473 = vst.msk [vmem:[#allocation8 + $0x28] sm:$0xff] %vm2832, %v4455
      %4474 = vst.msk [vmem:[#allocation8 + $0x30] sm:$0xff] %vm2832, %v4457
      %4475 = vst.msk [vmem:[#allocation8 + $0x38] sm:$0xff] %vm2832, %v4459
      %v4476 = vrot.slane %v4376, 2
      %v4477 = vrot.slane %v4377, 2
      %v4478 = vsel %vm852, %v4476, %v4477
      %v4479 = vrot.slane %v4378, 2
      %v4480 = vrot.slane %v4379, 2
      %v4481 = vsel %vm852, %v4479, %v4480
      %v4482 = vrot.slane %v4380, 2
      %v4483 = vrot.slane %v4381, 2
      %v4484 = vsel %vm852, %v4482, %v4483
      %v4485 = vrot.slane %v4382, 2
      %v4486 = vrot.slane %v4383, 2
      %v4487 = vsel %vm852, %v4485, %v4486
      %v4488 = vrot.slane %v4384, 2
      %v4489 = vrot.slane %v4385, 2
      %v4490 = vsel %vm852, %v4488, %v4489
      %v4491 = vrot.slane %v4386, 2
      %v4492 = vrot.slane %v4387, 2
      %v4493 = vsel %vm852, %v4491, %v4492
      %v4494 = vrot.slane %v4388, 2
      %v4495 = vrot.slane %v4389, 2
      %v4496 = vsel %vm852, %v4494, %v4495
      %v4497 = vrot.slane %v4390, 2
      %v4498 = vrot.slane %v4391, 2
      %v4499 = vsel %vm852, %v4497, %v4498
      %4500 = vrot.lane.b32.xlu0 %v4478, 16
      %v4501 = vpop.permute.xlu0 %4500
      %4502 = vrot.lane.b32.xlu0 %v4481, 16
      %v4503 = vpop.permute.xlu0 %4502
      %4504 = vrot.lane.b32.xlu0 %v4484, 16
      %v4505 = vpop.permute.xlu0 %4504
      %4506 = vrot.lane.b32.xlu0 %v4487, 16
      %v4507 = vpop.permute.xlu0 %4506
      %4508 = vrot.lane.b32.xlu0 %v4490, 16
      %v4509 = vpop.permute.xlu0 %4508
      %4510 = vrot.lane.b32.xlu0 %v4493, 16
      %v4511 = vpop.permute.xlu0 %4510
      %4512 = vrot.lane.b32.xlu0 %v4496, 16
      %v4513 = vpop.permute.xlu0 %4512
      %4514 = vrot.lane.b32.xlu0 %v4499, 16
      %v4515 = vpop.permute.xlu0 %4514
      %4524 = vst.msk [vmem:[#allocation8] sm:$0xff] %vm2889, %v4501
      %4525 = vst.msk [vmem:[#allocation8 + $0x8] sm:$0xff] %vm2889, %v4503
      %4526 = vst.msk [vmem:[#allocation8 + $0x10] sm:$0xff] %vm2889, %v4505
      %4527 = vst.msk [vmem:[#allocation8 + $0x18] sm:$0xff] %vm2889, %v4507
      %4528 = vst.msk [vmem:[#allocation8 + $0x20] sm:$0xff] %vm2889, %v4509
      %4529 = vst.msk [vmem:[#allocation8 + $0x28] sm:$0xff] %vm2889, %v4511
      %4530 = vst.msk [vmem:[#allocation8 + $0x30] sm:$0xff] %vm2889, %v4513
      %4531 = vst.msk [vmem:[#allocation8 + $0x38] sm:$0xff] %vm2889, %v4515
      %4533 = vrot.lane.b32.xlu0 %v4378, 24
      %v4534 = vpop.permute.xlu0 %4533
      %4535 = vrot.lane.b32.xlu0 %v4380, 24
      %v4536 = vpop.permute.xlu0 %4535
      %4537 = vrot.lane.b32.xlu0 %v4382, 24
      %v4538 = vpop.permute.xlu0 %4537
      %4539 = vrot.lane.b32.xlu0 %v4384, 24
      %v4540 = vpop.permute.xlu0 %4539
      %4541 = vrot.lane.b32.xlu0 %v4386, 24
      %v4542 = vpop.permute.xlu0 %4541
      %4543 = vrot.lane.b32.xlu0 %v4388, 24
      %v4544 = vpop.permute.xlu0 %4543
      %4545 = vrot.lane.b32.xlu0 %v4390, 24
      %v4546 = vpop.permute.xlu0 %4545
      %4547 = vrot.lane.b32.xlu0 %v4392, 24
      %v4548 = vpop.permute.xlu0 %4547
      %4557 = vst.msk [vmem:[#allocation8] sm:$0xff] %vm2923, %v4534
      %4558 = vst.msk [vmem:[#allocation8 + $0x8] sm:$0xff] %vm2923, %v4536
      %4559 = vst.msk [vmem:[#allocation8 + $0x10] sm:$0xff] %vm2923, %v4538
      %4560 = vst.msk [vmem:[#allocation8 + $0x18] sm:$0xff] %vm2923, %v4540
      %4561 = vst.msk [vmem:[#allocation8 + $0x20] sm:$0xff] %vm2923, %v4542
      %4562 = vst.msk [vmem:[#allocation8 + $0x28] sm:$0xff] %vm2923, %v4544
      %4563 = vst.msk [vmem:[#allocation8 + $0x30] sm:$0xff] %vm2923, %v4546
      %4564 = vst.msk [vmem:[#allocation8 + $0x38] sm:$0xff] %vm2923, %v4548
      %v4566 = vrot.slane %v4392, 1
      %v4567 = vrot.slane %v4393, 1
      %v4568 = vsel %vm642, %v4566, %v4567
      %4569 = vrot.lane.b32.xlu0 %v4425, 32
      %v4570 = vpop.permute.xlu0 %4569
      %4571 = vrot.lane.b32.xlu0 %v4428, 32
      %v4572 = vpop.permute.xlu0 %4571
      %4573 = vrot.lane.b32.xlu0 %v4431, 32
      %v4574 = vpop.permute.xlu0 %4573
      %4575 = vrot.lane.b32.xlu0 %v4434, 32
      %v4576 = vpop.permute.xlu0 %4575
      %4577 = vrot.lane.b32.xlu0 %v4437, 32
      %v4578 = vpop.permute.xlu0 %4577
      %4579 = vrot.lane.b32.xlu0 %v4440, 32
      %v4580 = vpop.permute.xlu0 %4579
      %4581 = vrot.lane.b32.xlu0 %v4443, 32
      %v4582 = vpop.permute.xlu0 %4581
      %4583 = vrot.lane.b32.xlu0 %v4568, 32
      %v4584 = vpop.permute.xlu0 %4583
      %4593 = vst.msk [vmem:[#allocation8] sm:$0xff] %vm2960, %v4570
      %4594 = vst.msk [vmem:[#allocation8 + $0x8] sm:$0xff] %vm2960, %v4572
      %4595 = vst.msk [vmem:[#allocation8 + $0x10] sm:$0xff] %vm2960, %v4574
      %4596 = vst.msk [vmem:[#allocation8 + $0x18] sm:$0xff] %vm2960, %v4576
      %4597 = vst.msk [vmem:[#allocation8 + $0x20] sm:$0xff] %vm2960, %v4578
      %4598 = vst.msk [vmem:[#allocation8 + $0x28] sm:$0xff] %vm2960, %v4580
      %4599 = vst.msk [vmem:[#allocation8 + $0x30] sm:$0xff] %vm2960, %v4582
      %4600 = vst.msk [vmem:[#allocation8 + $0x38] sm:$0xff] %vm2960, %v4584
      %v4601 = vrot.slane %v4392, 2
      %v4602 = vrot.slane %v4393, 2
      %v4603 = vsel %vm852, %v4601, %v4602
      %4604 = vrot.lane.b32.xlu0 %v4481, 40
      %v4605 = vpop.permute.xlu0 %4604
      %4606 = vrot.lane.b32.xlu0 %v4484, 40
      %v4607 = vpop.permute.xlu0 %4606
      %4608 = vrot.lane.b32.xlu0 %v4487, 40
      %v4609 = vpop.permute.xlu0 %4608
      %4610 = vrot.lane.b32.xlu0 %v4490, 40
      %v4611 = vpop.permute.xlu0 %4610
      %4612 = vrot.lane.b32.xlu0 %v4493, 40
      %v4613 = vpop.permute.xlu0 %4612
      %4614 = vrot.lane.b32.xlu0 %v4496, 40
      %v4615 = vpop.permute.xlu0 %4614
      %4616 = vrot.lane.b32.xlu0 %v4499, 40
      %v4617 = vpop.permute.xlu0 %4616
      %4618 = vrot.lane.b32.xlu0 %v4603, 40
      %v4619 = vpop.permute.xlu0 %4618
      %4628 = vst.msk [vmem:[#allocation8] sm:$0xff] %vm2996, %v4605
      %4629 = vst.msk [vmem:[#allocation8 + $0x8] sm:$0xff] %vm2996, %v4607
      %4630 = vst.msk [vmem:[#allocation8 + $0x10] sm:$0xff] %vm2996, %v4609
      %4631 = vst.msk [vmem:[#allocation8 + $0x18] sm:$0xff] %vm2996, %v4611
      %4632 = vst.msk [vmem:[#allocation8 + $0x20] sm:$0xff] %vm2996, %v4613
      %4633 = vst.msk [vmem:[#allocation8 + $0x28] sm:$0xff] %vm2996, %v4615
      %4634 = vst.msk [vmem:[#allocation8 + $0x30] sm:$0xff] %vm2996, %v4617
      %4635 = vst.msk [vmem:[#allocation8 + $0x38] sm:$0xff] %vm2996, %v4619
      %4637 = vrot.lane.b32.xlu0 %v4380, 48
      %v4638 = vpop.permute.xlu0 %4637
      %4639 = vrot.lane.b32.xlu0 %v4382, 48
      %v4640 = vpop.permute.xlu0 %4639
      %4641 = vrot.lane.b32.xlu0 %v4384, 48
      %v4642 = vpop.permute.xlu0 %4641
      %4643 = vrot.lane.b32.xlu0 %v4386, 48
      %v4644 = vpop.permute.xlu0 %4643
      %4645 = vrot.lane.b32.xlu0 %v4388, 48
      %v4646 = vpop.permute.xlu0 %4645
      %4647 = vrot.lane.b32.xlu0 %v4390, 48
      %v4648 = vpop.permute.xlu0 %4647
      %4649 = vrot.lane.b32.xlu0 %v4392, 48
      %v4650 = vpop.permute.xlu0 %4649
      %4651 = vrot.lane.b32.xlu0 %v4394, 48
      %v4652 = vpop.permute.xlu0 %4651
      %4661 = vst.msk [vmem:[#allocation8] sm:$0xff] %vm3030, %v4638
      %4662 = vst.msk [vmem:[#allocation8 + $0x8] sm:$0xff] %vm3030, %v4640
      %4663 = vst.msk [vmem:[#allocation8 + $0x10] sm:$0xff] %vm3030, %v4642
      %4664 = vst.msk [vmem:[#allocation8 + $0x18] sm:$0xff] %vm3030, %v4644
      %4665 = vst.msk [vmem:[#allocation8 + $0x20] sm:$0xff] %vm3030, %v4646
      %4666 = vst.msk [vmem:[#allocation8 + $0x28] sm:$0xff] %vm3030, %v4648
      %4667 = vst.msk [vmem:[#allocation8 + $0x30] sm:$0xff] %vm3030, %v4650
      %4668 = vst.msk [vmem:[#allocation8 + $0x38] sm:$0xff] %vm3030, %v4652
      %v4670 = vrot.slane %v4394, 1
      %v4671 = vrot.slane %v4395, 1
      %v4672 = vsel %vm642, %v4670, %v4671
      %4673 = vrot.lane.b32.xlu0 %v4428, 56
      %v4674 = vpop.permute.xlu0 %4673
      %4675 = vrot.lane.b32.xlu0 %v4431, 56
      %v4676 = vpop.permute.xlu0 %4675
      %4677 = vrot.lane.b32.xlu0 %v4434, 56
      %v4678 = vpop.permute.xlu0 %4677
      %4679 = vrot.lane.b32.xlu0 %v4437, 56
      %v4680 = vpop.permute.xlu0 %4679
      %4681 = vrot.lane.b32.xlu0 %v4440, 56
      %v4682 = vpop.permute.xlu0 %4681
      %4683 = vrot.lane.b32.xlu0 %v4443, 56
      %v4684 = vpop.permute.xlu0 %4683
      %4685 = vrot.lane.b32.xlu0 %v4568, 56
      %v4686 = vpop.permute.xlu0 %4685
      %4687 = vrot.lane.b32.xlu0 %v4672, 56
      %v4688 = vpop.permute.xlu0 %4687
      %4697 = vst.msk [vmem:[#allocation8] sm:$0xff] %vm3067, %v4674
      %4698 = vst.msk [vmem:[#allocation8 + $0x8] sm:$0xff] %vm3067, %v4676
      %4699 = vst.msk [vmem:[#allocation8 + $0x10] sm:$0xff] %vm3067, %v4678
      %4700 = vst.msk [vmem:[#allocation8 + $0x18] sm:$0xff] %vm3067, %v4680
      %4701 = vst.msk [vmem:[#allocation8 + $0x20] sm:$0xff] %vm3067, %v4682
      %4702 = vst.msk [vmem:[#allocation8 + $0x28] sm:$0xff] %vm3067, %v4684
      %4703 = vst.msk [vmem:[#allocation8 + $0x30] sm:$0xff] %vm3067, %v4686
      %4704 = vst.msk [vmem:[#allocation8 + $0x38] sm:$0xff] %vm3067, %v4688
      %v4705 = vrot.slane %v4394, 2
      %v4706 = vrot.slane %v4395, 2
      %v4707 = vsel %vm852, %v4705, %v4706
      %4708 = vrot.lane.b32.xlu0 %v4484, 64
      %v4709 = vpop.permute.xlu0 %4708
      %4710 = vrot.lane.b32.xlu0 %v4487, 64
      %v4711 = vpop.permute.xlu0 %4710
      %4712 = vrot.lane.b32.xlu0 %v4490, 64
      %v4713 = vpop.permute.xlu0 %4712
      %4714 = vrot.lane.b32.xlu0 %v4493, 64
      %v4715 = vpop.permute.xlu0 %4714
      %4716 = vrot.lane.b32.xlu0 %v4496, 64
      %v4717 = vpop.permute.xlu0 %4716
      %4718 = vrot.lane.b32.xlu0 %v4499, 64
      %v4719 = vpop.permute.xlu0 %4718
      %4720 = vrot.lane.b32.xlu0 %v4603, 64
      %v4721 = vpop.permute.xlu0 %4720
      %4722 = vrot.lane.b32.xlu0 %v4707, 64
      %v4723 = vpop.permute.xlu0 %4722
      %4732 = vst.msk [vmem:[#allocation8] sm:$0xff] %vm3103, %v4709
      %4733 = vst.msk [vmem:[#allocation8 + $0x8] sm:$0xff] %vm3103, %v4711
      %4734 = vst.msk [vmem:[#allocation8 + $0x10] sm:$0xff] %vm3103, %v4713
      %4735 = vst.msk [vmem:[#allocation8 + $0x18] sm:$0xff] %vm3103, %v4715
      %4736 = vst.msk [vmem:[#allocation8 + $0x20] sm:$0xff] %vm3103, %v4717
      %4737 = vst.msk [vmem:[#allocation8 + $0x28] sm:$0xff] %vm3103, %v4719
      %4738 = vst.msk [vmem:[#allocation8 + $0x30] sm:$0xff] %vm3103, %v4721
      %4739 = vst.msk [vmem:[#allocation8 + $0x38] sm:$0xff] %vm3103, %v4723
      %v4740 = vld [vmem:[#allocation8] sm:$0xff]
      %v4741 = vld [vmem:[#allocation8 + $0x8] sm:$0xff]
      %v4742 = vld [vmem:[#allocation8 + $0x10] sm:$0xff]
      %v4743 = vld [vmem:[#allocation8 + $0x18] sm:$0xff]
      %v4744 = vld [vmem:[#allocation8 + $0x20] sm:$0xff]
      %v4745 = vld [vmem:[#allocation8 + $0x28] sm:$0xff]
      %v4746 = vld [vmem:[#allocation8 + $0x30] sm:$0xff]
      %v4747 = vld [vmem:[#allocation8 + $0x38] sm:$0xff]
      %v4748 = vld [vmem:[%s9] sm:$0xff]
      %v4749 = vld [vmem:[%s9 + $0x8] sm:$0xff]
      %v4750 = vld [vmem:[%s9 + $0x10] sm:$0xff]
      %v4751 = vld [vmem:[%s9 + $0x18] sm:$0xff]
      %v4752 = vld [vmem:[%s9 + $0x20] sm:$0xff]
      %v4753 = vld [vmem:[%s9 + $0x28] sm:$0xff]
      %v4754 = vld [vmem:[%s9 + $0x30] sm:$0xff]
      %v4755 = vld [vmem:[%s9 + $0x38] sm:$0xff]
      %v4756 = vld [vmem:[%s9 + $0x40] sm:$0xff]
      %v4757 = vld [vmem:[%s10] sm:$0x1]
      %v4759 = vlaneseq
      %v4760 = vshrl.u32 %v4759, 7
      %v4761 = vsub.s32 0, %v4760
      %v4762 = vrot.slane %v4757, %v4761
      %v4765 = vsel %vm3136, %v4740, 0
      %v4768 = vsel %vm3136, %v4741, 0
      %v4771 = vsel %vm3136, %v4742, 0
      %v4774 = vsel %vm3136, %v4743, 0
      %v4777 = vsel %vm3136, %v4744, 0
      %v4780 = vsel %vm3136, %v4745, 0
      %v4783 = vsel %vm3136, %v4746, 0
      %v4786 = vsel %vm3136, %v4747, 0
      %4788 = vmatprep.subr.mxu0 0.0
      %4789 = vmatpush1.msra.mxu0 %v4748
      %4790 = vmatprep.subr.mxu0 0.0
      %4791 = vmatpush1.msra.mxu0 %v4749
      %4792 = vmatprep.subr.mxu0 0.0
      %4793 = vmatpush1.msra.mxu0 %v4750
      %4794 = vmatprep.subr.mxu0 0.0
      %4795 = vmatpush1.msra.mxu0 %v4751
      %4796 = vmatprep.subr.mxu0 0.0
      %4797 = vmatpush1.msra.mxu0 %v4752
      %4798 = vmatprep.subr.mxu0 0.0
      %4799 = vmatpush1.msra.mxu0 %v4753
      %4800 = vmatprep.subr.mxu0 0.0
      %4801 = vmatpush1.msra.mxu0 %v4754
      %4802 = vmatprep.subr.mxu0 0.0
      %4803 = vmatpush1.msra.mxu0 %v4755
      %4804 = vmatprep.subr.mxu0 0.0
      %4805 = vmatpush1.msra.mxu0 %v4756
      %4806 = vmatprep.subr.mxu0 0.0
      %4807 = vmatpush1.msra.mxu0 0.0
      %4808 = vmatprep.subr.mxu0 0.0
      %4809 = vmatpush1.msra.mxu0 0.0
      %4810 = vmatprep.subr.mxu0 0.0
      %4811 = vmatpush1.msra.mxu0 0.0
      %4812 = vmatprep.subr.mxu0 0.0
      %4813 = vmatpush1.msra.mxu0 0.0
      %4814 = vmatprep.subr.mxu0 0.0
      %4815 = vmatpush1.msra.mxu0 0.0
      %4816 = vmatprep.subr.mxu0 0.0
      %4817 = vmatpush1.msra.mxu0 0.0
      %4818 = vmatprep.subr.mxu0 0.0
      %4819 = vmatpush1.msra.mxu0 0.0
      %4820 = vmatprep.subr.mxu0 0.0
      %4821 = vmatpush1.msra.mxu0 0.0
      %4822 = vmatprep.subr.mxu0 0.0
      %4823 = vmatpush1.msra.mxu0 0.0
      %4824 = vmatprep.subr.mxu0 0.0
      %4825 = vmatpush1.msra.mxu0 0.0
      %4826 = vmatprep.subr.mxu0 0.0
      %4827 = vmatpush1.msra.mxu0 0.0
      %4828 = vmatprep.subr.mxu0 0.0
      %4829 = vmatpush1.msra.mxu0 0.0
      %4830 = vmatprep.subr.mxu0 0.0
      %4831 = vmatpush1.msra.mxu0 0.0
      %4832 = vmatprep.subr.mxu0 0.0
      %4833 = vmatpush1.msra.mxu0 0.0
      %4834 = vmatprep.subr.mxu0 0.0
      %4835 = vmatpush1.msra.mxu0 0.0
      %4836 = vmatprep.subr.mxu0 0.0
      %4837 = vmatpush1.msra.mxu0 0.0
      %4838 = vmatprep.subr.mxu0 0.0
      %4839 = vmatpush1.msra.mxu0 0.0
      %4840 = vmatprep.subr.mxu0 0.0
      %4841 = vmatpush1.msra.mxu0 0.0
      %4842 = vmatprep.subr.mxu0 0.0
      %4843 = vmatpush1.msra.mxu0 0.0
      %4844 = vmatprep.subr.mxu0 0.0
      %4845 = vmatpush1.msra.mxu0 0.0
      %4846 = vmatprep.subr.mxu0 0.0
      %4847 = vmatpush1.msra.mxu0 0.0
      %4848 = vmatprep.subr.mxu0 0.0
      %4849 = vmatpush1.msra.mxu0 0.0
      %4850 = vmatprep.subr.mxu0 0.0
      %4851 = vmatpush1.msra.mxu0 0.0
      %4852 = vmatprep.mubr.f32.mxu0 0.0
      %4853 = vmatmul.mubr.f32.gmra.mrb[0].mxu0 %v4765
      %v4854 = vpop.f32.mrb[0].mxu0
      %v4855 = vadd.f32 %v4762, %v4854
      %v4856 = vpop.f32.mrb[0].mxu0
      %4857 = vmatprep.mubr.f32.mxu0 0.0
      %4858 = vmatmul.mubr.f32.gmra.mrb[0].mxu0 %v4768
      %v4859 = vpop.f32.mrb[0].mxu0
      %v4860 = vadd.f32 %v4762, %v4859
      %v4861 = vpop.f32.mrb[0].mxu0
      %4862 = vmatprep.mubr.f32.mxu0 0.0
      %4863 = vmatmul.mubr.f32.gmra.mrb[0].mxu0 %v4771
      %v4864 = vpop.f32.mrb[0].mxu0
      %v4865 = vadd.f32 %v4762, %v4864
      %v4866 = vpop.f32.mrb[0].mxu0
      %4867 = vmatprep.mubr.f32.mxu0 0.0
      %4868 = vmatmul.mubr.f32.gmra.mrb[0].mxu0 %v4774
      %v4869 = vpop.f32.mrb[0].mxu0
      %v4870 = vadd.f32 %v4762, %v4869
      %v4871 = vpop.f32.mrb[0].mxu0
      %4872 = vmatprep.mubr.f32.mxu0 0.0
      %4873 = vmatmul.mubr.f32.gmra.mrb[0].mxu0 %v4777
      %v4874 = vpop.f32.mrb[0].mxu0
      %v4875 = vadd.f32 %v4762, %v4874
      %v4876 = vpop.f32.mrb[0].mxu0
      %4877 = vmatprep.mubr.f32.mxu0 0.0
      %4878 = vmatmul.mubr.f32.gmra.mrb[0].mxu0 %v4780
      %v4879 = vpop.f32.mrb[0].mxu0
      %v4880 = vadd.f32 %v4762, %v4879
      %v4881 = vpop.f32.mrb[0].mxu0
      %4882 = vmatprep.mubr.f32.mxu0 0.0
      %4883 = vmatmul.mubr.f32.gmra.mrb[0].mxu0 %v4783
      %v4884 = vpop.f32.mrb[0].mxu0
      %v4885 = vadd.f32 %v4762, %v4884
      %v4886 = vpop.f32.mrb[0].mxu0
      %4887 = vmatprep.mubr.f32.mxu0 0.0
      %4888 = vmatmul.mubr.f32.gmra.mrb[0].mxu0 %v4786
      %v4889 = vpop.f32.mrb[0].mxu0
      %v4890 = vadd.f32 %v4762, %v4889
      %v4891 = vpop.f32.mrb[0].mxu0
      %4892 = vdwg.mxu0
      %v4893 = vadd.f32 %v3799, %v4855
      %v4894 = vadd.f32 %v3800, %v4860
      %v4895 = vadd.f32 %v3801, %v4865
      %v4896 = vadd.f32 %v3802, %v4870
      %v4897 = vadd.f32 %v3803, %v4875
      %v4898 = vadd.f32 %v3804, %v4880
      %v4899 = vadd.f32 %v3805, %v4885
      %v4900 = vadd.f32 %v3806, %v4890
      %4901 = vst.msk [vmem:[%s386] sm:$0xff] %vm2232, %v4893
      %4902 = vst.msk [vmem:[%s386 + $0x8] sm:$0xff] %vm2232, %v4894
      %4903 = vst.msk [vmem:[%s386 + $0x10] sm:$0xff] %vm2232, %v4895
      %4904 = vst.msk [vmem:[%s386 + $0x18] sm:$0xff] %vm2232, %v4896
      %4905 = vst.msk [vmem:[%s386 + $0x20] sm:$0xff] %vm2232, %v4897
      %4906 = vst.msk [vmem:[%s386 + $0x28] sm:$0xff] %vm2232, %v4898
      %4907 = vst.msk [vmem:[%s386 + $0x30] sm:$0xff] %vm2232, %v4899
      %4908 = vst.msk [vmem:[%s386 + $0x38] sm:$0xff] %vm2232, %v4900
      %p4909 = scmp.lt.s32.totalorder %s22, 1
      %s4910 = scalar_select %p4909, %s22, 1
      %s4911 = smul.addr %s4910, 8
      %s4912 = smul.addr %s4911, 8
      %s4913 = scalar_lea.vmem %s11, %s4912
      // Predicated region
      $region65: #{impala_block_pallas.1} parent=63 // pred_check
        %p4914 = pneg %p276
      $region66: #{impala_block_pallas.1} parent=63 // pred_check_branch
        %4916 = sbr.rel (%p4914) target = $region68
      $region67: #{impala_block_pallas.1} parent=63 // pred_region
        _
      $region68: #{impala_block_pallas.1} parent=63 // pred_fallthru
        _
    $region64: #{impala_block_pallas.1} parent=5 // pred_fallthru
      _
    %p4917 = scmp.le.s32.totalorder 2, %s17
    // Predicated region
    $region69: #{impala_block_pallas.1} parent=5 // pred_check
      %p4918 = pneg %p4917
    $region70: #{impala_block_pallas.1} parent=5 // pred_check_branch
      %4920 = sbr.rel (%p4918) target = $region72
    $region71: #{impala_block_pallas.1} parent=5 // pred_region
      %s4921 = ssub.s32 %s17, 2
      // Predicated region
      $region73: #{impala_block_pallas.1} parent=71 // pred_check
        %p4922 = pneg %p282
      $region74: #{impala_block_pallas.1} parent=71 // pred_check_branch
        %4924 = sbr.rel (%p4922) target = $region76
      $region75: #{impala_block_pallas.1} parent=71 // pred_region
        %p4925 = scmp.lt.s32.totalorder %s23, 1
        %s4926 = scalar_select %p4925, %s23, 1
        %s4927 = smul.addr %s4926, 8
        %s4928 = smul.addr %s4927, 8
        %s4929 = scalar_lea.vmem %s11, %s4928
      $region76: #{impala_block_pallas.1} parent=71 // pred_fallthru
        _
    $region72: #{impala_block_pallas.1} parent=5 // pred_fallthru
      _
  $region6: #{impala_block_pallas.1} parent=0 // loop_footer
    %s21 = sadd.s32 1, %s17
  $region7: #{impala_block_pallas.1} parent=0 // loop_footer_branch
    %16 = sbr.rel target = $region3
  $region8: #{impala_block_pallas.1} parent=0 // loop_exit
    _

</llo_original>
